<compile_context>
chip_gen: v6e
topology: v6e:2x2x1
jax: 0.10.0
libtpu: 0.0.40
codegen_flags: <defaults>
</compile_context>

<pallas_src>
import functools
import math

import jax
import jax.numpy as jnp
from jax.experimental import pallas as pl
from jax.experimental.pallas import tpu as pltpu


def _round_up(x, m):
    return (x + m - 1) // m * m


def _pick_tn(cout_p):
    # 256-wide tiles on big channel counts (v6e/v7x MXU width), else 128.
    return 256 if cout_p % 256 == 0 else 128


# Shared compiler params: both paths use a 2-D ("parallel","parallel") grid.
# 48 MiB scoped VMEM: well above the default scoped limit, safely under the
# 64 MiB/TC physical VMEM on v7x (v5e/v6e have 128 MiB).
_COMPILER_PARAMS = pltpu.CompilerParams(
    dimension_semantics=("parallel", "parallel"),
    vmem_limit_bytes=48 * 1024 * 1024,
)


# ---------------------------------------------------------------------------
# Kernels
# ---------------------------------------------------------------------------
def convbn_s1_kernel(x_ref, w_ref, b_ref, o_ref, *, k, wp):
    """stride-1 path: build conv patches in-kernel (no im2col in HBM).

    x_ref: (Lflat, Cin)   bf16 flattened zero-padded image (one batch element)
    w_ref: (K*K, Cin, tn) bf16 conv weight with BN scale folded in
    b_ref: (1, tn)        f32 folded BN bias
    o_ref: (M, tn)        M = Ho*Wp flattened outputs (junk columns ow>=Wo are
                          sliced away in the wrapper)
    """
    m = o_ref.shape[0]
    acc = jnp.zeros(o_ref.shape, jnp.float32)
    for ki in range(k):            # K*K static taps, unrolled at trace time
        for kj in range(k):
            off = ki * wp + kj     # shifted window over the flattened image
            patch = x_ref[pl.ds(off, m), :]                  # (M, Cin) bf16
            acc += jnp.dot(patch, w_ref[ki * k + kj],
                           preferred_element_type=jnp.float32)
    y = acc + b_ref[...]           # f32 epilogue (v5e has no bf16 VPU)
    o_ref[...] = jnp.maximum(y, 0.0).astype(o_ref.dtype)


def convbn_im2col_kernel(p_ref, w_ref, b_ref, o_ref):
    """generic-stride fallback: patches @ weight, +bias, ReLU."""
    acc = jnp.dot(p_ref[...], w_ref[...], preferred_element_type=jnp.float32)
    o_ref[...] = jnp.maximum(acc + b_ref[...], 0.0).astype(o_ref.dtype)


# ---------------------------------------------------------------------------
# Wrappers
# ---------------------------------------------------------------------------
def _conv_bn_relu_s1(x_nhwc, w_t, bias_p, k, out_dtype):
    """stride == 1: in-kernel patch construction over the flattened image."""
    n, h, w, cin = x_nhwc.shape
    pad = (k - 1) // 2
    ho, wo = h + 2 * pad - k + 1, w + 2 * pad - k + 1
    hp, wp = h + 2 * pad, w + 2 * pad
    cout_p = w_t.shape[-1]
    tn = _pick_tn(cout_p)

    xp = jnp.pad(x_nhwc, ((0, 0), (pad, pad), (pad, pad), (0, 0)))
    x_flat = xp.astype(jnp.bfloat16).reshape(n, hp * wp, cin)
    # K-1 extra zero rows keep the shifted reads of the junk columns in-bounds.
    x_flat = jnp.pad(x_flat, ((0, 0), (0, k - 1), (0, 0)))
    lflat = hp * wp + k - 1
    m = ho * wp                     # whole plane per step => big M tile

    w3 = w_t.reshape(k * k, cin, cout_p)

    # Weight / bias index maps are constant across the grid so they stay
    # resident (default buffering kept: they are small; Buffered(1) left out
    # for lowering safety).
    # TODO(synk): add an H-tile grid axis with a K-1 halo for very large
    # spatial planes (e.g. 224x224 stem) to bound the f32 accumulator on v7x.
    out = pl.pallas_call(
        functools.partial(convbn_s1_kernel, k=k, wp=wp),
        out_shape=jax.ShapeDtypeStruct((n, m, cout_p), out_dtype),
        grid_spec=pltpu.PrefetchScalarGridSpec(
            num_scalar_prefetch=0,
            grid=(n, cout_p // tn),
            in_specs=[
                pl.BlockSpec((None, lflat, cin), lambda b, j: (b, 0, 0)),
                pl.BlockSpec((k * k, cin, tn), lambda b, j: (0, 0, j)),
                pl.BlockSpec((1, tn), lambda b, j: (0, j)),
            ],
            out_specs=pl.BlockSpec((None, m, tn), lambda b, j: (b, 0, j)),
        ),
        compiler_params=_COMPILER_PARAMS,
    )(x_flat, w3, bias_p)

    out = out.reshape(n, ho, wp, cout_p)[:, :, :wo, :]   # drop junk columns
    return out


def _im2col_nhwc(x_nhwc, k, stride, pad):
    n, h, w, c = x_nhwc.shape
    xp = jnp.pad(x_nhwc, ((0, 0), (pad, pad), (pad, pad), (0, 0)))
    ho = (h + 2 * pad - k) // stride + 1
    wo = (w + 2 * pad - k) // stride + 1
    cols = []
    for ki in range(k):
        for kj in range(k):
            cols.append(xp[:, ki:ki + (ho - 1) * stride + 1:stride,
                              kj:kj + (wo - 1) * stride + 1:stride, :])
    return jnp.concatenate(cols, axis=-1), ho, wo


def _conv_bn_relu_im2col(x_nhwc, w_t, bias_p, k, stride, out_dtype):
    """stride > 1 fallback: bf16 im2col matmul with big M and lane-dense Cout."""
    n, h, w, cin = x_nhwc.shape
    pad = (k - 1) // 2
    cout_p = w_t.shape[-1]
    tn = _pick_tn(cout_p)

    patches, ho, wo = _im2col_nhwc(x_nhwc.astype(jnp.bfloat16), k, stride, pad)
    m = n * ho * wo
    kd = k * k * cin
    patches = patches.reshape(m, kd)
    w2d = w_t.reshape(kd, cout_p)

    tm = 512 if m >= 512 else _round_up(m, 8)
    m_pad = _round_up(m, tm)
    if m_pad != m:
        patches = jnp.pad(patches, ((0, m_pad - m), (0, 0)))

    out = pl.pallas_call(
        convbn_im2col_kernel,
        out_shape=jax.ShapeDtypeStruct((m_pad, cout_p), out_dtype),
        grid_spec=pltpu.PrefetchScalarGridSpec(
            num_scalar_prefetch=0,
            grid=(m_pad // tm, cout_p // tn),
            in_specs=[
                pl.BlockSpec((tm, kd), lambda i, j: (i, 0)),
                pl.BlockSpec((kd, tn), lambda i, j: (0, j)),
                pl.BlockSpec((1, tn), lambda i, j: (0, j)),
            ],
            out_specs=pl.BlockSpec((tm, tn), lambda i, j: (i, j)),
        ),
        compiler_params=_COMPILER_PARAMS,
    )(patches, w2d, bias_p)

    return out[:m].reshape(n, ho, wo, cout_p)


@functools.partial(jax.jit, static_argnames=("kernel_size", "stride"))
def conv_bn_relu(x_nchw, weight, bn_scale, bn_bias, *, kernel_size, stride=1):
    """x_nchw: (N, Cin, H, W); weight: (Cout, Cin, K, K) [PyTorch layout].

    Matches nn.Conv2d(bias=False, padding=(K-1)//2) + BatchNorm2d(eval) + ReLU,
    returning (N, Cout, Ho, Wo).
    """
    n, cin, h, w = x_nchw.shape
    cout = weight.shape[0]
    k = kernel_size
    cout_p = _round_up(cout, 128)          # lane-dense output channels

    # Fold eval-mode BN scale into the conv weight (bf16 for the MXU); keep the
    # bias in f32 for the epilogue.  Weight laid out (K, K, Cin, Cout_pad).
    w_t = jnp.transpose(weight, (2, 3, 1, 0)) * bn_scale.reshape(1, 1, 1, cout)
    w_t = jnp.pad(w_t, ((0, 0), (0, 0), (0, 0), (0, cout_p - cout)))
    w_t = w_t.astype(jnp.bfloat16)
    bias_p = jnp.pad(bn_bias.astype(jnp.float32),
                     (0, cout_p - cout)).reshape(1, cout_p)

    x_nhwc = jnp.transpose(x_nchw, (0, 2, 3, 1))
    if stride == 1:
        out = _conv_bn_relu_s1(x_nhwc, w_t, bias_p, k, x_nchw.dtype)
    else:
        out = _conv_bn_relu_im2col(x_nhwc, w_t, bias_p, k, stride, x_nchw.dtype)

    out = out[..., :cout]
    return jnp.transpose(out, (0, 3, 1, 2))       # back to NCHW


if __name__ == "__main__":
    # Module hyperparameters: ConvBN(in=4, out=8, kernel_size=3).
    N, C_IN, H, W = 2, 4, 16, 16
    C_OUT, K = 8, 3
    EPS = 1e-5

    key = jax.random.PRNGKey(0)
    kx, kw, kg, kb = jax.random.split(key, 4)

    x = jax.random.normal(kx, (N, C_IN, H, W), dtype=jnp.float32)

    # Deterministic synthetic parameters (no checkpoint).
    fan_in = C_IN * K * K
    bound = 1.0 / math.sqrt(fan_in)
    weight = jax.random.uniform(kw, (C_OUT, C_IN, K, K), jnp.float32,
                                minval=-bound, maxval=bound)
    gamma = 1.0 + 0.1 * jax.random.normal(kg, (C_OUT,), dtype=jnp.float32)
    beta = 0.1 * jax.random.normal(kb, (C_OUT,), dtype=jnp.float32)
    running_mean = jnp.zeros((C_OUT,), jnp.float32)    # BatchNorm2d defaults
    running_var = jnp.ones((C_OUT,), jnp.float32)

    # Fold eval-mode BatchNorm into per-channel scale / bias.
    bn_scale = gamma / jnp.sqrt(running_var + EPS)
    bn_bias = beta - running_mean * bn_scale

    def reference(xv, wv, stride):
        y = jax.lax.conv_general_dilated(
            xv, wv, window_strides=(stride, stride),
            padding=[((K - 1) // 2, (K - 1) // 2)] * 2,
            dimension_numbers=("NCHW", "OIHW", "NCHW"))
        y = y * bn_scale[None, :, None, None] + bn_bias[None, :, None, None]
        return jnp.maximum(y, 0.0)

    ok = True
    for stride in (1, 2):     # stride=1: in-kernel patches; stride=2: fallback
        y = conv_bn_relu(x, weight, bn_scale, bn_bias,
                         kernel_size=K, stride=stride)
        jax.block_until_ready(y)
        y_ref = reference(x, weight, stride)
        ho = (H + 2 * ((K - 1) // 2) - K) // stride + 1
        assert y.shape == (N, C_OUT, ho, ho), (y.shape, stride)
        # bf16 matmul operands vs. an f32 reference -> loosened tolerance.
        ok = ok and bool(jnp.allclose(y, y_ref, atol=5e-2, rtol=5e-2))

    assert ok
    print("KERNEL_OK")
</pallas_src>

<mosaic_0001>
module attributes {stable_mosaic.version = 11 : i64} {
  func.func @convbn_s1_kernel(%arg0: i32, %arg1: i32, %arg2: memref<1x326x4xbf16, #tpu.memory_space<vmem>>, %arg3: memref<9x4x128xbf16, #tpu.memory_space<vmem>>, %arg4: memref<1x128xf32, #tpu.memory_space<vmem>>, %arg5: memref<1x288x128xf32, #tpu.memory_space<vmem>>) attributes {dimension_semantics = [#tpu.dimension_semantics<parallel>, #tpu.dimension_semantics<parallel>], iteration_bounds = array<i64: 2, 1>, scalar_prefetch = 0 : i64, scratch_operands = 0 : i64, tpu.core_type = #tpu.core_type<tc>, window_params = [{transform_indices = @transform_0, window_bounds = array<i64: 1, 326, 4>}, {transform_indices = @transform_1, window_bounds = array<i64: 9, 4, 128>}, {transform_indices = @transform_2, window_bounds = array<i64: 1, 128>}, {transform_indices = @transform_3, window_bounds = array<i64: 1, 288, 128>}]} {
    %cst = arith.constant 0.000000e+00 : f32
    %0 = vector.broadcast %cst : f32 to vector<288x128xf32>
    %c0 = arith.constant 0 : index
    %c0_0 = arith.constant 0 : index
    %c0_1 = arith.constant 0 : index
    %1 = vector.load %arg2[%c0, %c0_0, %c0_1] : memref<1x326x4xbf16, #tpu.memory_space<vmem>>, vector<1x288x4xbf16>
    %2 = vector.shape_cast %1 : vector<1x288x4xbf16> to vector<288x4xbf16>
    %c0_2 = arith.constant 0 : index
    %c0_3 = arith.constant 0 : index
    %c0_4 = arith.constant 0 : index
    %3 = vector.load %arg3[%c0_2, %c0_3, %c0_4] : memref<9x4x128xbf16, #tpu.memory_space<vmem>>, vector<1x4x128xbf16>
    %4 = vector.shape_cast %3 : vector<1x4x128xbf16> to vector<4x128xbf16>
    %cst_5 = arith.constant dense<0.000000e+00> : vector<288x128xf32>
    %5 = tpu.matmul %2, %4, %cst_5 {dimension_numbers = #tpu.dot_dimension_numbers<[1], [0], [0], [1], [0, 0, 1, 1], [], []>} : vector<288x4xbf16>, vector<4x128xbf16>, vector<288x128xf32> -> vector<288x128xf32>
    %6 = arith.addf %0, %5 : vector<288x128xf32>
    %c0_6 = arith.constant 0 : index
    %c1 = arith.constant 1 : index
    %c0_7 = arith.constant 0 : index
    %7 = vector.load %arg2[%c0_6, %c1, %c0_7] : memref<1x326x4xbf16, #tpu.memory_space<vmem>>, vector<1x288x4xbf16>
    %8 = vector.shape_cast %7 : vector<1x288x4xbf16> to vector<288x4xbf16>
    %c1_8 = arith.constant 1 : index
    %c0_9 = arith.constant 0 : index
    %c0_10 = arith.constant 0 : index
    %9 = vector.load %arg3[%c1_8, %c0_9, %c0_10] : memref<9x4x128xbf16, #tpu.memory_space<vmem>>, vector<1x4x128xbf16>
    %10 = vector.shape_cast %9 : vector<1x4x128xbf16> to vector<4x128xbf16>
    %cst_11 = arith.constant dense<0.000000e+00> : vector<288x128xf32>
    %11 = tpu.matmul %8, %10, %cst_11 {dimension_numbers = #tpu.dot_dimension_numbers<[1], [0], [0], [1], [0, 0, 1, 1], [], []>} : vector<288x4xbf16>, vector<4x128xbf16>, vector<288x128xf32> -> vector<288x128xf32>
    %12 = arith.addf %6, %11 : vector<288x128xf32>
    %c0_12 = arith.constant 0 : index
    %c2 = arith.constant 2 : index
    %c0_13 = arith.constant 0 : index
    %13 = vector.load %arg2[%c0_12, %c2, %c0_13] : memref<1x326x4xbf16, #tpu.memory_space<vmem>>, vector<1x288x4xbf16>
    %14 = vector.shape_cast %13 : vector<1x288x4xbf16> to vector<288x4xbf16>
    %c2_14 = arith.constant 2 : index
    %c0_15 = arith.constant 0 : index
    %c0_16 = arith.constant 0 : index
    %15 = vector.load %arg3[%c2_14, %c0_15, %c0_16] : memref<9x4x128xbf16, #tpu.memory_space<vmem>>, vector<1x4x128xbf16>
    %16 = vector.shape_cast %15 : vector<1x4x128xbf16> to vector<4x128xbf16>
    %cst_17 = arith.constant dense<0.000000e+00> : vector<288x128xf32>
    %17 = tpu.matmul %14, %16, %cst_17 {dimension_numbers = #tpu.dot_dimension_numbers<[1], [0], [0], [1], [0, 0, 1, 1], [], []>} : vector<288x4xbf16>, vector<4x128xbf16>, vector<288x128xf32> -> vector<288x128xf32>
    %18 = arith.addf %12, %17 : vector<288x128xf32>
    %c0_18 = arith.constant 0 : index
    %c18 = arith.constant 18 : index
    %c0_19 = arith.constant 0 : index
    %19 = vector.load %arg2[%c0_18, %c18, %c0_19] : memref<1x326x4xbf16, #tpu.memory_space<vmem>>, vector<1x288x4xbf16>
    %20 = vector.shape_cast %19 : vector<1x288x4xbf16> to vector<288x4xbf16>
    %c3 = arith.constant 3 : index
    %c0_20 = arith.constant 0 : index
    %c0_21 = arith.constant 0 : index
    %21 = vector.load %arg3[%c3, %c0_20, %c0_21] : memref<9x4x128xbf16, #tpu.memory_space<vmem>>, vector<1x4x128xbf16>
    %22 = vector.shape_cast %21 : vector<1x4x128xbf16> to vector<4x128xbf16>
    %cst_22 = arith.constant dense<0.000000e+00> : vector<288x128xf32>
    %23 = tpu.matmul %20, %22, %cst_22 {dimension_numbers = #tpu.dot_dimension_numbers<[1], [0], [0], [1], [0, 0, 1, 1], [], []>} : vector<288x4xbf16>, vector<4x128xbf16>, vector<288x128xf32> -> vector<288x128xf32>
    %24 = arith.addf %18, %23 : vector<288x128xf32>
    %c0_23 = arith.constant 0 : index
    %c19 = arith.constant 19 : index
    %c0_24 = arith.constant 0 : index
    %25 = vector.load %arg2[%c0_23, %c19, %c0_24] : memref<1x326x4xbf16, #tpu.memory_space<vmem>>, vector<1x288x4xbf16>
    %26 = vector.shape_cast %25 : vector<1x288x4xbf16> to vector<288x4xbf16>
    %c4 = arith.constant 4 : index
    %c0_25 = arith.constant 0 : index
    %c0_26 = arith.constant 0 : index
    %27 = vector.load %arg3[%c4, %c0_25, %c0_26] : memref<9x4x128xbf16, #tpu.memory_space<vmem>>, vector<1x4x128xbf16>
    %28 = vector.shape_cast %27 : vector<1x4x128xbf16> to vector<4x128xbf16>
    %cst_27 = arith.constant dense<0.000000e+00> : vector<288x128xf32>
    %29 = tpu.matmul %26, %28, %cst_27 {dimension_numbers = #tpu.dot_dimension_numbers<[1], [0], [0], [1], [0, 0, 1, 1], [], []>} : vector<288x4xbf16>, vector<4x128xbf16>, vector<288x128xf32> -> vector<288x128xf32>
    %30 = arith.addf %24, %29 : vector<288x128xf32>
    %c0_28 = arith.constant 0 : index
    %c20 = arith.constant 20 : index
    %c0_29 = arith.constant 0 : index
    %31 = vector.load %arg2[%c0_28, %c20, %c0_29] : memref<1x326x4xbf16, #tpu.memory_space<vmem>>, vector<1x288x4xbf16>
    %32 = vector.shape_cast %31 : vector<1x288x4xbf16> to vector<288x4xbf16>
    %c5 = arith.constant 5 : index
    %c0_30 = arith.constant 0 : index
    %c0_31 = arith.constant 0 : index
    %33 = vector.load %arg3[%c5, %c0_30, %c0_31] : memref<9x4x128xbf16, #tpu.memory_space<vmem>>, vector<1x4x128xbf16>
    %34 = vector.shape_cast %33 : vector<1x4x128xbf16> to vector<4x128xbf16>
    %cst_32 = arith.constant dense<0.000000e+00> : vector<288x128xf32>
    %35 = tpu.matmul %32, %34, %cst_32 {dimension_numbers = #tpu.dot_dimension_numbers<[1], [0], [0], [1], [0, 0, 1, 1], [], []>} : vector<288x4xbf16>, vector<4x128xbf16>, vector<288x128xf32> -> vector<288x128xf32>
    %36 = arith.addf %30, %35 : vector<288x128xf32>
    %c0_33 = arith.constant 0 : index
    %c36 = arith.constant 36 : index
    %c0_34 = arith.constant 0 : index
    %37 = vector.load %arg2[%c0_33, %c36, %c0_34] : memref<1x326x4xbf16, #tpu.memory_space<vmem>>, vector<1x288x4xbf16>
    %38 = vector.shape_cast %37 : vector<1x288x4xbf16> to vector<288x4xbf16>
    %c6 = arith.constant 6 : index
    %c0_35 = arith.constant 0 : index
    %c0_36 = arith.constant 0 : index
    %39 = vector.load %arg3[%c6, %c0_35, %c0_36] : memref<9x4x128xbf16, #tpu.memory_space<vmem>>, vector<1x4x128xbf16>
    %40 = vector.shape_cast %39 : vector<1x4x128xbf16> to vector<4x128xbf16>
    %cst_37 = arith.constant dense<0.000000e+00> : vector<288x128xf32>
    %41 = tpu.matmul %38, %40, %cst_37 {dimension_numbers = #tpu.dot_dimension_numbers<[1], [0], [0], [1], [0, 0, 1, 1], [], []>} : vector<288x4xbf16>, vector<4x128xbf16>, vector<288x128xf32> -> vector<288x128xf32>
    %42 = arith.addf %36, %41 : vector<288x128xf32>
    %c0_38 = arith.constant 0 : index
    %c37 = arith.constant 37 : index
    %c0_39 = arith.constant 0 : index
    %43 = vector.load %arg2[%c0_38, %c37, %c0_39] : memref<1x326x4xbf16, #tpu.memory_space<vmem>>, vector<1x288x4xbf16>
    %44 = vector.shape_cast %43 : vector<1x288x4xbf16> to vector<288x4xbf16>
    %c7 = arith.constant 7 : index
    %c0_40 = arith.constant 0 : index
    %c0_41 = arith.constant 0 : index
    %45 = vector.load %arg3[%c7, %c0_40, %c0_41] : memref<9x4x128xbf16, #tpu.memory_space<vmem>>, vector<1x4x128xbf16>
    %46 = vector.shape_cast %45 : vector<1x4x128xbf16> to vector<4x128xbf16>
    %cst_42 = arith.constant dense<0.000000e+00> : vector<288x128xf32>
    %47 = tpu.matmul %44, %46, %cst_42 {dimension_numbers = #tpu.dot_dimension_numbers<[1], [0], [0], [1], [0, 0, 1, 1], [], []>} : vector<288x4xbf16>, vector<4x128xbf16>, vector<288x128xf32> -> vector<288x128xf32>
    %48 = arith.addf %42, %47 : vector<288x128xf32>
    %c0_43 = arith.constant 0 : index
    %c38 = arith.constant 38 : index
    %c0_44 = arith.constant 0 : index
    %49 = vector.load %arg2[%c0_43, %c38, %c0_44] : memref<1x326x4xbf16, #tpu.memory_space<vmem>>, vector<1x288x4xbf16>
    %50 = vector.shape_cast %49 : vector<1x288x4xbf16> to vector<288x4xbf16>
    %c8 = arith.constant 8 : index
    %c0_45 = arith.constant 0 : index
    %c0_46 = arith.constant 0 : index
    %51 = vector.load %arg3[%c8, %c0_45, %c0_46] : memref<9x4x128xbf16, #tpu.memory_space<vmem>>, vector<1x4x128xbf16>
    %52 = vector.shape_cast %51 : vector<1x4x128xbf16> to vector<4x128xbf16>
    %cst_47 = arith.constant dense<0.000000e+00> : vector<288x128xf32>
    %53 = tpu.matmul %50, %52, %cst_47 {dimension_numbers = #tpu.dot_dimension_numbers<[1], [0], [0], [1], [0, 0, 1, 1], [], []>} : vector<288x4xbf16>, vector<4x128xbf16>, vector<288x128xf32> -> vector<288x128xf32>
    %54 = arith.addf %48, %53 : vector<288x128xf32>
    %c0_48 = arith.constant 0 : index
    %c0_49 = arith.constant 0 : index
    %55 = vector.load %arg4[%c0_48, %c0_49] : memref<1x128xf32, #tpu.memory_space<vmem>>, vector<1x128xf32>
    %56 = vector.broadcast %55 : vector<1x128xf32> to vector<288x128xf32>
    %57 = arith.addf %54, %56 : vector<288x128xf32>
    %cst_50 = arith.constant 0.000000e+00 : f32
    %58 = vector.broadcast %cst_50 : f32 to vector<288x128xf32>
    %59 = arith.maximumf %57, %58 : vector<288x128xf32>
    %c0_51 = arith.constant 0 : index
    %c0_52 = arith.constant 0 : index
    %c0_53 = arith.constant 0 : index
    %60 = vector.load %arg5[%c0_51, %c0_52, %c0_53] : memref<1x288x128xf32, #tpu.memory_space<vmem>>, vector<1x288x128xf32>
    %61 = vector.shape_cast %60 : vector<1x288x128xf32> to vector<288x128xf32>
    %62 = vector.shape_cast %59 : vector<288x128xf32> to vector<1x288x128xf32>
    tpu.vector_store %arg5[%c0_51, %c0_52, %c0_53], %62 {strides = array<i32>} : memref<1x288x128xf32, #tpu.memory_space<vmem>>, vector<1x288x128xf32>,
    return
  }
  func.func @transform_0(%arg0: i32, %arg1: i32) -> (i32, i32, i32) {
    %c0_i32 = arith.constant 0 : i32
    %c0_i32_0 = arith.constant 0 : i32
    %c0_i32_1 = arith.constant 0 : i32
    return %arg0, %c0_i32, %c0_i32_0 : i32, i32, i32
  }
  func.func @transform_1(%arg0: i32, %arg1: i32) -> (i32, i32, i32) {
    %c0_i32 = arith.constant 0 : i32
    %c0_i32_0 = arith.constant 0 : i32
    %c0_i32_1 = arith.constant 0 : i32
    return %c0_i32, %c0_i32_0, %arg1 : i32, i32, i32
  }
  func.func @transform_2(%arg0: i32, %arg1: i32) -> (i32, i32) {
    %c0_i32 = arith.constant 0 : i32
    %c0_i32_0 = arith.constant 0 : i32
    return %c0_i32, %arg1 : i32, i32
  }
  func.func @transform_3(%arg0: i32, %arg1: i32) -> (i32, i32, i32) {
    %c0_i32 = arith.constant 0 : i32
    %c0_i32_0 = arith.constant 0 : i32
    return %arg0, %c0_i32, %arg1 : i32, i32, i32
  }
}

</mosaic_0001>

<llo_original>
// kernel: conv_bn_relu.1
$region0: #{conv_bn_relu.1}
  #allocation0 [shape = 'u32[]', space=smem, size = 0x4, offset = 0x4, fixed_abs, tag = 'smem constant byte address 0x4 - core index']
  #allocation1 [shape = 'u32[144,128]{1,0:T(1,128)}', space=vmem, size = 0x12000, scoped, tag = 'internal scratch']
  %s0 = inlined_call_operand.vmem [shape: bf16[2,326,4], index: 0, kind: input, shape index: {}]
  %s1 = inlined_call_operand.vmem [shape: bf16[9,4,128], index: 1, kind: input, shape index: {}]
  %s2 = inlined_call_operand.vmem [shape: f32[1,128], index: 2, kind: input, shape index: {}]
  %s3 = inlined_call_operand.vmem [shape: f32[2,288,128], index: 3, kind: output, shape index: {}]
  %s4 = sld [smem:[#allocation0]]
  $region45: #{conv_bn_relu.1} parent=0
    _
  %s6 = ssub.s32 1, %s4
  %s7 = scalar_select 0, %s6, %s4
  loop: start=0, step=1, limit=4
  $region2: #{conv_bn_relu.1} parent=0 // loop_pre_header
    _
  $region3: #{conv_bn_relu.1} parent=0 // loop_header
    %s9 = sphi 0, %s13
    %p10 = scmp.ge.s32.totalorder %s9, 4
    %s16 = sphi 0, %s28
    %s17 = sphi 0, %s24
    %s18 = sphi 0, %s16
    %s19 = sphi 0, %s17
    %s20 = sphi 0, %s18
    %s21 = sphi 0, %s19
    %s31 = sphi 0, %s33
    %s34 = sphi 0, %s31
    %s35 = sphi 0, %s34
    %s51 = sphi 0, %s35
    %s57 = sphi 0, %s59
    %s60 = sphi 0, %s57
    %s61 = sphi 0, %s60
    %s77 = sphi 0, %s61
    %s83 = sphi 0, %s85
    %s86 = sphi 0, %s83
    %s87 = sphi 0, %s86
    %s103 = sphi 0, %s87
    %s111 = sphi 0, %s113
    %s114 = sphi 0, %s111
    %s115 = sphi 0, %s114
    %s131 = sphi 0, %s115
  $region4: #{conv_bn_relu.1} parent=0 // loop_header_branch
    %12 = sbr.rel (%p10) target = $region8
  $region5: #{conv_bn_relu.1} parent=0 // loop_body
    %s14 = ssub.s32 %s9, 1
    %s15 = ssub.s32 %s9, 2
    %s22 = sadd.s32 1, %s17
    %p23 = scmp.ge.s32.totalorder %s22, 1
    %s24 = scalar_select %p23, 0, %s22
    %s25 = sadd.s32 1, %s16
    %s26 = scalar_select %p23, %s25, %s16
    %p27 = scmp.ge.s32.totalorder %s26, 2
    %s28 = scalar_select %p27, 0, %s26
    %s29 = ssub.s32 %s16, %s28
    %p30 = scmp.eq.s32.totalorder %s29, 0
    %s32 = sadd.s32 %s31, 1
    %s33 = scalar_select %p30, %s31, %s32
    %p36 = pneg %p30
    %p37 = scmp.eq.s32.totalorder %s9, 1
    %p38 = por %p36, %p37
    %p39 = scmp.ne.s32.totalorder %s31, %s34
    %p40 = scmp.eq.s32.totalorder %s9, 0
    %p41 = por %p39, %p40
    %p42 = scmp.ne.s32.totalorder %s31, %s34
    %p43 = scmp.eq.s32.totalorder %s14, 1
    %p44 = por %p42, %p43
    %p45 = scmp.ne.s32.totalorder %s34, %s35
    %p46 = scmp.eq.s32.totalorder %s14, 0
    %p47 = por %p45, %p46
    %p48 = scmp.ne.s32.totalorder %s34, %s35
    %p49 = scmp.eq.s32.totalorder %s15, 1
    %p50 = por %p48, %p49
    %p52 = scmp.ne.s32.totalorder %s35, %s51
    %p53 = scmp.eq.s32.totalorder %s15, 0
    %p54 = por %p52, %p53
    %s55 = ssub.s32 %s17, %s24
    %p56 = scmp.eq.s32.totalorder %s55, 0
    %s58 = sadd.s32 %s57, 1
    %s59 = scalar_select %p56, %s57, %s58
    %p62 = pneg %p56
    %p63 = scmp.eq.s32.totalorder %s9, 1
    %p64 = por %p62, %p63
    %p65 = scmp.ne.s32.totalorder %s57, %s60
    %p66 = scmp.eq.s32.totalorder %s9, 0
    %p67 = por %p65, %p66
    %p68 = scmp.ne.s32.totalorder %s57, %s60
    %p69 = scmp.eq.s32.totalorder %s14, 1
    %p70 = por %p68, %p69
    %p71 = scmp.ne.s32.totalorder %s60, %s61
    %p72 = scmp.eq.s32.totalorder %s14, 0
    %p73 = por %p71, %p72
    %p74 = scmp.ne.s32.totalorder %s60, %s61
    %p75 = scmp.eq.s32.totalorder %s15, 1
    %p76 = por %p74, %p75
    %p78 = scmp.ne.s32.totalorder %s61, %s77
    %p79 = scmp.eq.s32.totalorder %s15, 0
    %p80 = por %p78, %p79
    %s81 = ssub.s32 %s17, %s24
    %p82 = scmp.eq.s32.totalorder %s81, 0
    %s84 = sadd.s32 %s83, 1
    %s85 = scalar_select %p82, %s83, %s84
    %p88 = pneg %p82
    %p89 = scmp.eq.s32.totalorder %s9, 1
    %p90 = por %p88, %p89
    %p91 = scmp.ne.s32.totalorder %s83, %s86
    %p92 = scmp.eq.s32.totalorder %s9, 0
    %p93 = por %p91, %p92
    %p94 = scmp.ne.s32.totalorder %s83, %s86
    %p95 = scmp.eq.s32.totalorder %s14, 1
    %p96 = por %p94, %p95
    %p97 = scmp.ne.s32.totalorder %s86, %s87
    %p98 = scmp.eq.s32.totalorder %s14, 0
    %p99 = por %p97, %p98
    %p100 = scmp.ne.s32.totalorder %s86, %s87
    %p101 = scmp.eq.s32.totalorder %s15, 1
    %p102 = por %p100, %p101
    %p104 = scmp.ne.s32.totalorder %s87, %s103
    %p105 = scmp.eq.s32.totalorder %s15, 0
    %p106 = por %p104, %p105
    %s107 = ssub.s32 %s16, %s28
    %s108 = ssub.s32 %s17, %s24
    %s109 = sor.u32 %s107, %s108
    %p110 = scmp.eq.s32.totalorder %s109, 0
    %s112 = sadd.s32 %s111, 1
    %s113 = scalar_select %p110, %s111, %s112
    %p116 = pneg %p110
    %p117 = scmp.eq.s32.totalorder %s9, 1
    %p118 = por %p116, %p117
    %p119 = scmp.ne.s32.totalorder %s111, %s114
    %p120 = scmp.eq.s32.totalorder %s9, 0
    %p121 = por %p119, %p120
    %p122 = scmp.ne.s32.totalorder %s111, %s114
    %p123 = scmp.eq.s32.totalorder %s14, 1
    %p124 = por %p122, %p123
    %p125 = scmp.ne.s32.totalorder %s114, %s115
    %p126 = scmp.eq.s32.totalorder %s14, 0
    %p127 = por %p125, %p126
    %p128 = scmp.ne.s32.totalorder %s114, %s115
    %p129 = scmp.eq.s32.totalorder %s15, 1
    %p130 = por %p128, %p129
    %p132 = scmp.ne.s32.totalorder %s115, %s131
    %p133 = scmp.eq.s32.totalorder %s15, 0
    %p134 = por %p132, %p133
    %p135 = scmp.le.s32.totalorder 1, %s9
    %p136 = scmp.lt.s32.totalorder %s9, 3
    %p137 = pnand %p135, %p136
    %p138 = pneg %p137
    // Predicated region
    $region9: #{conv_bn_relu.1} parent=5 // pred_check
      _
    $region10: #{conv_bn_relu.1} parent=5 // pred_check_branch
      %140 = sbr.rel (%p137) target = $region12
    $region11: #{conv_bn_relu.1} parent=5 // pred_region
      %s141 = ssub.s32 %s9, 1
      // Predicated region
      $region13: #{conv_bn_relu.1} parent=11 // pred_check
        %p142 = pneg %p73
      $region14: #{conv_bn_relu.1} parent=11 // pred_check_branch
        %144 = sbr.rel (%p142) target = $region16
      $region15: #{conv_bn_relu.1} parent=11 // pred_region
        %p145 = scmp.lt.s32.totalorder %s19, 0
        %s146 = scalar_select %p145, %s19, 0
        %s147 = smul.addr %s146, 2
        %s148 = scalar_lea.vmem %s1, %s147
      $region16: #{conv_bn_relu.1} parent=11 // pred_fallthru
        _
      // Predicated region
      $region17: #{conv_bn_relu.1} parent=11 // pred_check
        %p149 = pneg %p99
      $region18: #{conv_bn_relu.1} parent=11 // pred_check_branch
        %151 = sbr.rel (%p149) target = $region20
      $region19: #{conv_bn_relu.1} parent=11 // pred_region
        %p152 = scmp.lt.s32.totalorder %s19, 0
        %s153 = scalar_select %p152, %s19, 0
        %s154 = scalar_lea.vmem %s2, %s153
      $region20: #{conv_bn_relu.1} parent=11 // pred_fallthru
        _
    $region12: #{conv_bn_relu.1} parent=5 // pred_fallthru
      _
    %p155 = scmp.lt.s32.totalorder %s9, 2
    // Predicated region
    $region21: #{conv_bn_relu.1} parent=5 // pred_check
      %p156 = pneg %p155
    $region22: #{conv_bn_relu.1} parent=5 // pred_check_branch
      %158 = sbr.rel (%p156) target = $region24
    $region23: #{conv_bn_relu.1} parent=5 // pred_region
      // Predicated region
      $region25: #{conv_bn_relu.1} parent=23 // pred_check
        %p159 = pneg %p41
      $region26: #{conv_bn_relu.1} parent=23 // pred_check_branch
        %161 = sbr.rel (%p159) target = $region28
      $region27: #{conv_bn_relu.1} parent=23 // pred_region
        %p162 = scmp.lt.s32.totalorder %s16, 1
        %s163 = scalar_select %p162, %s16, 1
        %s164 = smul.addr %s163, 41
        %s165 = smul.addr %s164, 4
        %s166 = scalar_lea.vmem %s0, %s165
      $region28: #{conv_bn_relu.1} parent=23 // pred_fallthru
        _
    $region24: #{conv_bn_relu.1} parent=5 // pred_fallthru
      _
    %p167 = scmp.le.s32.totalorder 1, %s9
    %p168 = scmp.lt.s32.totalorder %s9, 3
    %p169 = pnand %p167, %p168
    %p170 = pneg %p169
    // Predicated region
    $region29: #{conv_bn_relu.1} parent=5 // pred_check
      _
    $region30: #{conv_bn_relu.1} parent=5 // pred_check_branch
      %172 = sbr.rel (%p169) target = $region32
    $region31: #{conv_bn_relu.1} parent=5 // pred_region
      %s173 = ssub.s32 %s9, 1
      %p174 = scmp.lt.s32.totalorder %s18, 1
      %s175 = scalar_select %p174, %s18, 1
      %s176 = smul.addr %s175, 41
      %s177 = smul.addr %s176, 4
      %s178 = scalar_lea.vmem %s0, %s177
      %p179 = pneg %p47
      %p180 = pneg %p44
      %p181 = scmp.lt.s32.totalorder %s19, 0
      %s182 = scalar_select %p181, %s19, 0
      %s183 = smul.addr %s182, 2
      %s184 = scalar_lea.vmem %s1, %s183
      %p185 = pneg %p73
      %p186 = pneg %p70
      %p187 = scmp.lt.s32.totalorder %s19, 0
      %s188 = scalar_select %p187, %s19, 0
      %s189 = scalar_lea.vmem %s2, %s188
      %p190 = pneg %p99
      %p191 = pneg %p96
      %p192 = pneg %p127
      %p193 = pneg %p124
      %p194 = scmp.lt.s32.totalorder %s18, 1
      %s195 = scalar_select %p194, %s18, 1
      %p196 = scmp.lt.s32.totalorder %s19, 0
      %s197 = scalar_select %p196, %s19, 0
      %s198 = smul.addr %s195, 36
      %s199 = sadd.s32 %s197, %s198
      %s200 = smul.addr %s199, 8
      %s201 = scalar_lea.vmem %s3, %s200
      %p202 = scmp.lt.s32.totalorder %s18, 1
      %s203 = scalar_select %p202, %s18, 1
      %s204 = smul.addr %s203, 41
      %s205 = smul.addr %s204, 4
      %s206 = scalar_lea.vmem %s0, %s205
      %p207 = scmp.lt.s32.totalorder %s19, 0
      %s208 = scalar_select %p207, %s19, 0
      %s209 = smul.addr %s208, 2
      %s210 = scalar_lea.vmem %s1, %s209
      %p211 = scmp.lt.s32.totalorder %s19, 0
      %s212 = scalar_select %p211, %s19, 0
      %s213 = scalar_lea.vmem %s2, %s212
      %p214 = scmp.lt.s32.totalorder %s18, 1
      %s215 = scalar_select %p214, %s18, 1
      %p216 = scmp.lt.s32.totalorder %s19, 0
      %s217 = scalar_select %p216, %s19, 0
      %s218 = smul.addr %s215, 36
      %s219 = sadd.s32 %s217, %s218
      %s220 = smul.addr %s219, 8
      %s221 = scalar_lea.vmem %s3, %s220
      %v223 = vld [vmem:[%s206] sm:$0xf]
      %v224 = vld [vmem:[%s206 + $0x4] sm:$0xf]
      %v225 = vld [vmem:[%s206 + $0x8] sm:$0xf]
      %v226 = vld [vmem:[%s206 + $0xc] sm:$0xf]
      %v227 = vld [vmem:[%s206 + $0x10] sm:$0xf]
      %v228 = vld [vmem:[%s206 + $0x14] sm:$0xf]
      %v229 = vld [vmem:[%s206 + $0x18] sm:$0xf]
      %v230 = vld [vmem:[%s206 + $0x1c] sm:$0xf]
      %v231 = vld [vmem:[%s206 + $0x20] sm:$0xf]
      %v232 = vld [vmem:[%s206 + $0x24] sm:$0xf]
      %v233 = vld [vmem:[%s206 + $0x28] sm:$0xf]
      %v234 = vld [vmem:[%s206 + $0x2c] sm:$0xf]
      %v235 = vld [vmem:[%s206 + $0x30] sm:$0xf]
      %v236 = vld [vmem:[%s206 + $0x34] sm:$0xf]
      %v237 = vld [vmem:[%s206 + $0x38] sm:$0xf]
      %v238 = vld [vmem:[%s206 + $0x3c] sm:$0xf]
      %v239 = vld [vmem:[%s206 + $0x40] sm:$0xf]
      %v240 = vld [vmem:[%s206 + $0x44] sm:$0xf]
      %v241 = vld [vmem:[%s206 + $0x48] sm:$0xf]
      %v242 = vld [vmem:[%s206 + $0x4c] sm:$0xf]
      %v243 = vld [vmem:[%s206 + $0x50] sm:$0xf]
      %v244 = vld [vmem:[%s206 + $0x54] sm:$0xf]
      %v245 = vld [vmem:[%s206 + $0x58] sm:$0xf]
      %v246 = vld [vmem:[%s206 + $0x5c] sm:$0xf]
      %v247 = vld [vmem:[%s206 + $0x60] sm:$0xf]
      %v248 = vld [vmem:[%s206 + $0x64] sm:$0xf]
      %v249 = vld [vmem:[%s206 + $0x68] sm:$0xf]
      %v250 = vld [vmem:[%s206 + $0x6c] sm:$0xf]
      %v251 = vld [vmem:[%s206 + $0x70] sm:$0xf]
      %v252 = vld [vmem:[%s206 + $0x74] sm:$0xf]
      %v253 = vld [vmem:[%s206 + $0x78] sm:$0xf]
      %v254 = vld [vmem:[%s206 + $0x7c] sm:$0xf]
      %v255 = vld [vmem:[%s206 + $0x80] sm:$0xf]
      %v256 = vld [vmem:[%s206 + $0x84] sm:$0xf]
      %v257 = vld [vmem:[%s206 + $0x88] sm:$0xf]
      %v258 = vld [vmem:[%s206 + $0x8c] sm:$0xf]
      %v259 = vld [vmem:[%s210] sm:$0x3]
      %v260 = vld [vmem:[%s206 + $0x90] sm:$0x1]
      %s261 = scalar_lea.vmem %s210, 2
      %v262 = vld [vmem:[%s261] sm:$0x3]
      %v300 = vunpack.c.l.b16 %v223
      %v301 = vunpack.c.l.b16 %v224
      %v302 = vunpack.c.l.b16 %v225
      %v303 = vunpack.c.l.b16 %v226
      %v304 = vunpack.c.l.b16 %v227
      %v305 = vunpack.c.l.b16 %v228
      %v306 = vunpack.c.l.b16 %v229
      %v307 = vunpack.c.l.b16 %v230
      %v308 = vunpack.c.l.b16 %v231
      %v309 = vunpack.c.l.b16 %v232
      %v310 = vunpack.c.l.b16 %v233
      %v311 = vunpack.c.l.b16 %v234
      %v312 = vunpack.c.l.b16 %v235
      %v313 = vunpack.c.l.b16 %v236
      %v314 = vunpack.c.l.b16 %v237
      %v315 = vunpack.c.l.b16 %v238
      %v316 = vunpack.c.l.b16 %v239
      %v317 = vunpack.c.l.b16 %v240
      %v318 = vunpack.c.l.b16 %v241
      %v319 = vunpack.c.l.b16 %v242
      %v320 = vunpack.c.l.b16 %v243
      %v321 = vunpack.c.l.b16 %v244
      %v322 = vunpack.c.l.b16 %v245
      %v323 = vunpack.c.l.b16 %v246
      %v324 = vunpack.c.l.b16 %v247
      %v325 = vunpack.c.l.b16 %v248
      %v326 = vunpack.c.l.b16 %v249
      %v327 = vunpack.c.l.b16 %v250
      %v328 = vunpack.c.l.b16 %v251
      %v329 = vunpack.c.l.b16 %v252
      %v330 = vunpack.c.l.b16 %v253
      %v331 = vunpack.c.l.b16 %v254
      %v332 = vunpack.c.l.b16 %v255
      %v333 = vunpack.c.l.b16 %v256
      %v334 = vunpack.c.l.b16 %v257
      %v335 = vunpack.c.l.b16 %v258
      %v336 = vunpack.c.l.b16 %v260
      %v337 = vpack.c.b16 %v301, %v300
      %v338 = vpack.c.b16 %v303, %v302
      %v339 = vpack.c.b16 %v305, %v304
      %v340 = vpack.c.b16 %v307, %v306
      %v341 = vpack.c.b16 %v309, %v308
      %v342 = vpack.c.b16 %v311, %v310
      %v343 = vpack.c.b16 %v313, %v312
      %v344 = vpack.c.b16 %v315, %v314
      %v345 = vpack.c.b16 %v317, %v316
      %v346 = vpack.c.b16 %v319, %v318
      %v347 = vpack.c.b16 %v321, %v320
      %v348 = vpack.c.b16 %v323, %v322
      %v349 = vpack.c.b16 %v325, %v324
      %v350 = vpack.c.b16 %v327, %v326
      %v351 = vpack.c.b16 %v329, %v328
      %v352 = vpack.c.b16 %v331, %v330
      %v353 = vpack.c.b16 %v333, %v332
      %v354 = vpack.c.b16 %v335, %v334
      %v355 = vpack.c.b16 %v336, %v336
      %vm356 = vsmask.f32 7424
      %v358 = vshrl.u32 %v337, 16
      %v360 = vshll.u32 %v337, 16
      %v362 = vrot.slane %v360, 1
      %v363 = vor.u32 %v358, %v362
      %v365 = vshll.u32 %v338, 16
      %v367 = vrot.slane %v365, 1
      %v368 = vsel %vm356, %v363, %v367
      %v369 = vshrl.u32 %v338, 16
      %v371 = vor.u32 %v369, %v367
      %v373 = vshll.u32 %v339, 16
      %v375 = vrot.slane %v373, 1
      %v376 = vsel %vm356, %v371, %v375
      %v377 = vshrl.u32 %v339, 16
      %v379 = vor.u32 %v377, %v375
      %v381 = vshll.u32 %v340, 16
      %v383 = vrot.slane %v381, 1
      %v384 = vsel %vm356, %v379, %v383
      %v385 = vshrl.u32 %v340, 16
      %v387 = vor.u32 %v385, %v383
      %v389 = vshll.u32 %v341, 16
      %v391 = vrot.slane %v389, 1
      %v392 = vsel %vm356, %v387, %v391
      %v393 = vshrl.u32 %v341, 16
      %v395 = vor.u32 %v393, %v391
      %v397 = vshll.u32 %v342, 16
      %v399 = vrot.slane %v397, 1
      %v400 = vsel %vm356, %v395, %v399
      %v401 = vshrl.u32 %v342, 16
      %v403 = vor.u32 %v401, %v399
      %v405 = vshll.u32 %v343, 16
      %v407 = vrot.slane %v405, 1
      %v408 = vsel %vm356, %v403, %v407
      %v409 = vshrl.u32 %v343, 16
      %v411 = vor.u32 %v409, %v407
      %v413 = vshll.u32 %v344, 16
      %v415 = vrot.slane %v413, 1
      %v416 = vsel %vm356, %v411, %v415
      %v417 = vshrl.u32 %v344, 16
      %v419 = vor.u32 %v417, %v415
      %v421 = vshll.u32 %v345, 16
      %v423 = vrot.slane %v421, 1
      %v424 = vsel %vm356, %v419, %v423
      %v425 = vshrl.u32 %v345, 16
      %v427 = vor.u32 %v425, %v423
      %v429 = vshll.u32 %v346, 16
      %v431 = vrot.slane %v429, 1
      %v432 = vsel %vm356, %v427, %v431
      %v433 = vshrl.u32 %v346, 16
      %v435 = vor.u32 %v433, %v431
      %v437 = vshll.u32 %v347, 16
      %v439 = vrot.slane %v437, 1
      %v440 = vsel %vm356, %v435, %v439
      %v441 = vshrl.u32 %v347, 16
      %v443 = vor.u32 %v441, %v439
      %v445 = vshll.u32 %v348, 16
      %v447 = vrot.slane %v445, 1
      %v448 = vsel %vm356, %v443, %v447
      %v449 = vshrl.u32 %v348, 16
      %v451 = vor.u32 %v449, %v447
      %v453 = vshll.u32 %v349, 16
      %v455 = vrot.slane %v453, 1
      %v456 = vsel %vm356, %v451, %v455
      %v457 = vshrl.u32 %v349, 16
      %v459 = vor.u32 %v457, %v455
      %v461 = vshll.u32 %v350, 16
      %v463 = vrot.slane %v461, 1
      %v464 = vsel %vm356, %v459, %v463
      %v465 = vshrl.u32 %v350, 16
      %v467 = vor.u32 %v465, %v463
      %v469 = vshll.u32 %v351, 16
      %v471 = vrot.slane %v469, 1
      %v472 = vsel %vm356, %v467, %v471
      %v473 = vshrl.u32 %v351, 16
      %v475 = vor.u32 %v473, %v471
      %v477 = vshll.u32 %v352, 16
      %v479 = vrot.slane %v477, 1
      %v480 = vsel %vm356, %v475, %v479
      %v481 = vshrl.u32 %v352, 16
      %v483 = vor.u32 %v481, %v479
      %v485 = vshll.u32 %v353, 16
      %v487 = vrot.slane %v485, 1
      %v488 = vsel %vm356, %v483, %v487
      %v489 = vshrl.u32 %v353, 16
      %v491 = vor.u32 %v489, %v487
      %v493 = vshll.u32 %v354, 16
      %v495 = vrot.slane %v493, 1
      %v496 = vsel %vm356, %v491, %v495
      %v497 = vshrl.u32 %v354, 16
      %v499 = vor.u32 %v497, %v495
      %v501 = vshll.u32 %v355, 16
      %v503 = vrot.slane %v501, 1
      %v504 = vsel %vm356, %v499, %v503
      %vm505 = vcmask 31744
      %v507 = vsel %vm505, %v368, 0
      %v510 = vsel %vm505, %v376, 0
      %v513 = vsel %vm505, %v384, 0
      %v516 = vsel %vm505, %v392, 0
      %v519 = vsel %vm505, %v400, 0
      %v522 = vsel %vm505, %v408, 0
      %v525 = vsel %vm505, %v416, 0
      %v528 = vsel %vm505, %v424, 0
      %v531 = vsel %vm505, %v432, 0
      %v534 = vsel %vm505, %v440, 0
      %v537 = vsel %vm505, %v448, 0
      %v540 = vsel %vm505, %v456, 0
      %v543 = vsel %vm505, %v464, 0
      %v546 = vsel %vm505, %v472, 0
      %v549 = vsel %vm505, %v480, 0
      %v552 = vsel %vm505, %v488, 0
      %v555 = vsel %vm505, %v496, 0
      %v558 = vsel %vm505, %v504, 0
      %vm560 = vcmask 1041408
      %v562 = vsel %vm560, %v262, 0
      %564 = vmatprep.subr.bf16.mxu0 0
      %565 = vmatpush1.bf16.msra.mxu0 0
      %566 = vmatprep.subr.bf16.mxu0 0
      %567 = vmatpush1.bf16.msra.mxu0 0
      %568 = vmatprep.subr.bf16.mxu0 0
      %569 = vmatpush1.bf16.msra.mxu0 0
      %570 = vmatprep.subr.bf16.mxu0 0
      %571 = vmatpush1.bf16.msra.mxu0 0
      %572 = vmatprep.subr.bf16.mxu0 0
      %573 = vmatpush1.bf16.msra.mxu0 0
      %574 = vmatprep.subr.bf16.mxu0 0
      %575 = vmatpush1.bf16.msra.mxu0 0
      %576 = vmatprep.subr.bf16.mxu0 0
      %577 = vmatpush1.bf16.msra.mxu0 0
      %578 = vmatprep.subr.bf16.mxu0 0
      %579 = vmatpush1.bf16.msra.mxu0 %v562
      %580 = vmatprep.subr.bf16.mxu0 0
      %581 = vmatpush2.bf16.msra.mxu0 0
      %582 = vmatprep.subr.bf16.mxu0 0
      %583 = vmatpush2.bf16.msra.mxu0 0
      %584 = vmatprep.subr.bf16.mxu0 0
      %585 = vmatpush2.bf16.msra.mxu0 0
      %586 = vmatprep.subr.bf16.mxu0 0
      %587 = vmatpush2.bf16.msra.mxu0 0
      %588 = vmatprep.subr.bf16.mxu0 0
      %589 = vmatpush2.bf16.msra.mxu0 0
      %590 = vmatprep.subr.bf16.mxu0 0
      %591 = vmatpush2.bf16.msra.mxu0 0
      %592 = vmatprep.subr.bf16.mxu0 0
      %593 = vmatpush2.bf16.msra.mxu0 0
      %594 = vmatprep.subr.bf16.mxu0 0
      %595 = vmatpush2.bf16.msra.mxu0 0
      %596 = vmatprep.mubr.bf16.mxu0 0
      %597 = vmatmul.mubr.bf16.gmra.mxu0 %v507
      %v598 = vpop.f32.mrf.mxu0
      %v599 = vadd.f32 0.0, %v598
      %v600 = vpop.f32.mrf.mxu0
      %v601 = vpop.f32.mrf.mxu0
      %v602 = vadd.f32 0.0, %v601
      %v603 = vpop.f32.mrf.mxu0
      %604 = vmatprep.mubr.bf16.mxu0 0
      %605 = vmatmul.mubr.bf16.gmra.mxu0 %v510
      %v606 = vpop.f32.mrf.mxu0
      %v607 = vadd.f32 0.0, %v606
      %v608 = vpop.f32.mrf.mxu0
      %v609 = vpop.f32.mrf.mxu0
      %v610 = vadd.f32 0.0, %v609
      %v611 = vpop.f32.mrf.mxu0
      %612 = vmatprep.mubr.bf16.mxu0 0
      %613 = vmatmul.mubr.bf16.gmra.mxu0 %v513
      %v614 = vpop.f32.mrf.mxu0
      %v615 = vadd.f32 0.0, %v614
      %v616 = vpop.f32.mrf.mxu0
      %v617 = vpop.f32.mrf.mxu0
      %v618 = vadd.f32 0.0, %v617
      %v619 = vpop.f32.mrf.mxu0
      %620 = vmatprep.mubr.bf16.mxu0 0
      %621 = vmatmul.mubr.bf16.gmra.mxu0 %v516
      %v622 = vpop.f32.mrf.mxu0
      %v623 = vadd.f32 0.0, %v622
      %v624 = vpop.f32.mrf.mxu0
      %v625 = vpop.f32.mrf.mxu0
      %v626 = vadd.f32 0.0, %v625
      %v627 = vpop.f32.mrf.mxu0
      %628 = vmatprep.mubr.bf16.mxu0 0
      %629 = vmatmul.mubr.bf16.gmra.mxu0 %v519
      %v630 = vpop.f32.mrf.mxu0
      %v631 = vadd.f32 0.0, %v630
      %v632 = vpop.f32.mrf.mxu0
      %v633 = vpop.f32.mrf.mxu0
      %v634 = vadd.f32 0.0, %v633
      %v635 = vpop.f32.mrf.mxu0
      %636 = vmatprep.mubr.bf16.mxu0 0
      %637 = vmatmul.mubr.bf16.gmra.mxu0 %v522
      %v638 = vpop.f32.mrf.mxu0
      %v639 = vadd.f32 0.0, %v638
      %v640 = vpop.f32.mrf.mxu0
      %v641 = vpop.f32.mrf.mxu0
      %v642 = vadd.f32 0.0, %v641
      %v643 = vpop.f32.mrf.mxu0
      %644 = vmatprep.mubr.bf16.mxu0 0
      %645 = vmatmul.mubr.bf16.gmra.mxu0 %v525
      %v646 = vpop.f32.mrf.mxu0
      %v647 = vadd.f32 0.0, %v646
      %v648 = vpop.f32.mrf.mxu0
      %v649 = vpop.f32.mrf.mxu0
      %v650 = vadd.f32 0.0, %v649
      %v651 = vpop.f32.mrf.mxu0
      %652 = vmatprep.mubr.bf16.mxu0 0
      %653 = vmatmul.mubr.bf16.gmra.mxu0 %v528
      %v654 = vpop.f32.mrf.mxu0
      %v655 = vadd.f32 0.0, %v654
      %v656 = vpop.f32.mrf.mxu0
      %v657 = vpop.f32.mrf.mxu0
      %v658 = vadd.f32 0.0, %v657
      %v659 = vpop.f32.mrf.mxu0
      %660 = vmatprep.mubr.bf16.mxu0 0
      %661 = vmatmul.mubr.bf16.gmra.mxu0 %v531
      %v662 = vpop.f32.mrf.mxu0
      %v663 = vadd.f32 0.0, %v662
      %v664 = vpop.f32.mrf.mxu0
      %v665 = vpop.f32.mrf.mxu0
      %v666 = vadd.f32 0.0, %v665
      %v667 = vpop.f32.mrf.mxu0
      %668 = vmatprep.mubr.bf16.mxu0 0
      %669 = vmatmul.mubr.bf16.gmra.mxu0 %v534
      %v670 = vpop.f32.mrf.mxu0
      %v671 = vadd.f32 0.0, %v670
      %v672 = vpop.f32.mrf.mxu0
      %v673 = vpop.f32.mrf.mxu0
      %v674 = vadd.f32 0.0, %v673
      %v675 = vpop.f32.mrf.mxu0
      %676 = vmatprep.mubr.bf16.mxu0 0
      %677 = vmatmul.mubr.bf16.gmra.mxu0 %v537
      %v678 = vpop.f32.mrf.mxu0
      %v679 = vadd.f32 0.0, %v678
      %v680 = vpop.f32.mrf.mxu0
      %v681 = vpop.f32.mrf.mxu0
      %v682 = vadd.f32 0.0, %v681
      %v683 = vpop.f32.mrf.mxu0
      %684 = vmatprep.mubr.bf16.mxu0 0
      %685 = vmatmul.mubr.bf16.gmra.mxu0 %v540
      %v686 = vpop.f32.mrf.mxu0
      %v687 = vadd.f32 0.0, %v686
      %v688 = vpop.f32.mrf.mxu0
      %v689 = vpop.f32.mrf.mxu0
      %v690 = vadd.f32 0.0, %v689
      %v691 = vpop.f32.mrf.mxu0
      %692 = vmatprep.mubr.bf16.mxu0 0
      %693 = vmatmul.mubr.bf16.gmra.mxu0 %v543
      %v694 = vpop.f32.mrf.mxu0
      %v695 = vadd.f32 0.0, %v694
      %v696 = vpop.f32.mrf.mxu0
      %v697 = vpop.f32.mrf.mxu0
      %v698 = vadd.f32 0.0, %v697
      %v699 = vpop.f32.mrf.mxu0
      %700 = vmatprep.mubr.bf16.mxu0 0
      %701 = vmatmul.mubr.bf16.gmra.mxu0 %v546
      %v702 = vpop.f32.mrf.mxu0
      %v703 = vadd.f32 0.0, %v702
      %v704 = vpop.f32.mrf.mxu0
      %v705 = vpop.f32.mrf.mxu0
      %v706 = vadd.f32 0.0, %v705
      %v707 = vpop.f32.mrf.mxu0
      %708 = vmatprep.mubr.bf16.mxu0 0
      %709 = vmatmul.mubr.bf16.gmra.mxu0 %v549
      %v710 = vpop.f32.mrf.mxu0
      %v711 = vadd.f32 0.0, %v710
      %v712 = vpop.f32.mrf.mxu0
      %v713 = vpop.f32.mrf.mxu0
      %v714 = vadd.f32 0.0, %v713
      %v715 = vpop.f32.mrf.mxu0
      %716 = vmatprep.mubr.bf16.mxu0 0
      %717 = vmatmul.mubr.bf16.gmra.mxu0 %v552
      %v718 = vpop.f32.mrf.mxu0
      %v719 = vadd.f32 0.0, %v718
      %v720 = vpop.f32.mrf.mxu0
      %v721 = vpop.f32.mrf.mxu0
      %v722 = vadd.f32 0.0, %v721
      %v723 = vpop.f32.mrf.mxu0
      %724 = vmatprep.mubr.bf16.mxu0 0
      %725 = vmatmul.mubr.bf16.gmra.mxu0 %v555
      %v726 = vpop.f32.mrf.mxu0
      %v727 = vadd.f32 0.0, %v726
      %v728 = vpop.f32.mrf.mxu0
      %v729 = vpop.f32.mrf.mxu0
      %v730 = vadd.f32 0.0, %v729
      %v731 = vpop.f32.mrf.mxu0
      %732 = vmatprep.mubr.bf16.mxu0 0
      %733 = vmatmul.mubr.bf16.gmra.mxu0 %v558
      %v734 = vpop.f32.mrf.mxu0
      %v735 = vadd.f32 0.0, %v734
      %v736 = vpop.f32.mrf.mxu0
      %v737 = vpop.f32.mrf.mxu0
      %v738 = vadd.f32 0.0, %v737
      %v739 = vpop.f32.mrf.mxu0
      %740 = vdwg.mxu0
      %v741 = vsel %vm505, %v337, 0
      %v743 = vsel %vm505, %v338, 0
      %v745 = vsel %vm505, %v339, 0
      %v747 = vsel %vm505, %v340, 0
      %v749 = vsel %vm505, %v341, 0
      %v751 = vsel %vm505, %v342, 0
      %v753 = vsel %vm505, %v343, 0
      %v755 = vsel %vm505, %v344, 0
      %v757 = vsel %vm505, %v345, 0
      %v759 = vsel %vm505, %v346, 0
      %v761 = vsel %vm505, %v347, 0
      %v763 = vsel %vm505, %v348, 0
      %v765 = vsel %vm505, %v349, 0
      %v767 = vsel %vm505, %v350, 0
      %v769 = vsel %vm505, %v351, 0
      %v771 = vsel %vm505, %v352, 0
      %v773 = vsel %vm505, %v353, 0
      %v775 = vsel %vm505, %v354, 0
      %v778 = vsel %vm560, %v259, 0
      %780 = vmatprep.subr.bf16.mxu0 0
      %781 = vmatpush1.bf16.msra.mxu0 0
      %782 = vmatprep.subr.bf16.mxu0 0
      %783 = vmatpush1.bf16.msra.mxu0 0
      %784 = vmatprep.subr.bf16.mxu0 0
      %785 = vmatpush1.bf16.msra.mxu0 0
      %786 = vmatprep.subr.bf16.mxu0 0
      %787 = vmatpush1.bf16.msra.mxu0 0
      %788 = vmatprep.subr.bf16.mxu0 0
      %789 = vmatpush1.bf16.msra.mxu0 0
      %790 = vmatprep.subr.bf16.mxu0 0
      %791 = vmatpush1.bf16.msra.mxu0 0
      %792 = vmatprep.subr.bf16.mxu0 0
      %793 = vmatpush1.bf16.msra.mxu0 0
      %794 = vmatprep.subr.bf16.mxu0 0
      %795 = vmatpush1.bf16.msra.mxu0 %v778
      %796 = vmatprep.subr.bf16.mxu0 0
      %797 = vmatpush2.bf16.msra.mxu0 0
      %798 = vmatprep.subr.bf16.mxu0 0
      %799 = vmatpush2.bf16.msra.mxu0 0
      %800 = vmatprep.subr.bf16.mxu0 0
      %801 = vmatpush2.bf16.msra.mxu0 0
      %802 = vmatprep.subr.bf16.mxu0 0
      %803 = vmatpush2.bf16.msra.mxu0 0
      %804 = vmatprep.subr.bf16.mxu0 0
      %805 = vmatpush2.bf16.msra.mxu0 0
      %806 = vmatprep.subr.bf16.mxu0 0
      %807 = vmatpush2.bf16.msra.mxu0 0
      %808 = vmatprep.subr.bf16.mxu0 0
      %809 = vmatpush2.bf16.msra.mxu0 0
      %810 = vmatprep.subr.bf16.mxu0 0
      %811 = vmatpush2.bf16.msra.mxu0 0
      %812 = vmatprep.mubr.bf16.mxu0 0
      %813 = vmatmul.mubr.bf16.gmra.mxu0 %v741
      %v814 = vpop.f32.mrf.mxu0
      %v815 = vadd.f32 %v599, %v814
      %v816 = vpop.f32.mrf.mxu0
      %v817 = vpop.f32.mrf.mxu0
      %v818 = vadd.f32 %v602, %v817
      %v819 = vpop.f32.mrf.mxu0
      %820 = vmatprep.mubr.bf16.mxu0 0
      %821 = vmatmul.mubr.bf16.gmra.mxu0 %v743
      %v822 = vpop.f32.mrf.mxu0
      %v823 = vadd.f32 %v607, %v822
      %v824 = vpop.f32.mrf.mxu0
      %v825 = vpop.f32.mrf.mxu0
      %v826 = vadd.f32 %v610, %v825
      %v827 = vpop.f32.mrf.mxu0
      %828 = vmatprep.mubr.bf16.mxu0 0
      %829 = vmatmul.mubr.bf16.gmra.mxu0 %v745
      %v830 = vpop.f32.mrf.mxu0
      %v831 = vadd.f32 %v615, %v830
      %v832 = vpop.f32.mrf.mxu0
      %v833 = vpop.f32.mrf.mxu0
      %v834 = vadd.f32 %v618, %v833
      %v835 = vpop.f32.mrf.mxu0
      %836 = vmatprep.mubr.bf16.mxu0 0
      %837 = vmatmul.mubr.bf16.gmra.mxu0 %v747
      %v838 = vpop.f32.mrf.mxu0
      %v839 = vadd.f32 %v623, %v838
      %v840 = vpop.f32.mrf.mxu0
      %v841 = vpop.f32.mrf.mxu0
      %v842 = vadd.f32 %v626, %v841
      %v843 = vpop.f32.mrf.mxu0
      %844 = vmatprep.mubr.bf16.mxu0 0
      %845 = vmatmul.mubr.bf16.gmra.mxu0 %v749
      %v846 = vpop.f32.mrf.mxu0
      %v847 = vadd.f32 %v631, %v846
      %v848 = vpop.f32.mrf.mxu0
      %v849 = vpop.f32.mrf.mxu0
      %v850 = vadd.f32 %v634, %v849
      %v851 = vpop.f32.mrf.mxu0
      %852 = vmatprep.mubr.bf16.mxu0 0
      %853 = vmatmul.mubr.bf16.gmra.mxu0 %v751
      %v854 = vpop.f32.mrf.mxu0
      %v855 = vadd.f32 %v639, %v854
      %v856 = vpop.f32.mrf.mxu0
      %v857 = vpop.f32.mrf.mxu0
      %v858 = vadd.f32 %v642, %v857
      %v859 = vpop.f32.mrf.mxu0
      %860 = vmatprep.mubr.bf16.mxu0 0
      %861 = vmatmul.mubr.bf16.gmra.mxu0 %v753
      %v862 = vpop.f32.mrf.mxu0
      %v863 = vadd.f32 %v647, %v862
      %v864 = vpop.f32.mrf.mxu0
      %v865 = vpop.f32.mrf.mxu0
      %v866 = vadd.f32 %v650, %v865
      %v867 = vpop.f32.mrf.mxu0
      %868 = vmatprep.mubr.bf16.mxu0 0
      %869 = vmatmul.mubr.bf16.gmra.mxu0 %v755
      %v870 = vpop.f32.mrf.mxu0
      %v871 = vadd.f32 %v655, %v870
      %v872 = vpop.f32.mrf.mxu0
      %v873 = vpop.f32.mrf.mxu0
      %v874 = vadd.f32 %v658, %v873
      %v875 = vpop.f32.mrf.mxu0
      %876 = vmatprep.mubr.bf16.mxu0 0
      %877 = vmatmul.mubr.bf16.gmra.mxu0 %v757
      %v878 = vpop.f32.mrf.mxu0
      %v879 = vadd.f32 %v663, %v878
      %v880 = vpop.f32.mrf.mxu0
      %v881 = vpop.f32.mrf.mxu0
      %v882 = vadd.f32 %v666, %v881
      %v883 = vpop.f32.mrf.mxu0
      %884 = vmatprep.mubr.bf16.mxu0 0
      %885 = vmatmul.mubr.bf16.gmra.mxu0 %v759
      %v886 = vpop.f32.mrf.mxu0
      %v887 = vadd.f32 %v671, %v886
      %v888 = vpop.f32.mrf.mxu0
      %v889 = vpop.f32.mrf.mxu0
      %v890 = vadd.f32 %v674, %v889
      %v891 = vpop.f32.mrf.mxu0
      %892 = vmatprep.mubr.bf16.mxu0 0
      %893 = vmatmul.mubr.bf16.gmra.mxu0 %v761
      %v894 = vpop.f32.mrf.mxu0
      %v895 = vadd.f32 %v679, %v894
      %v896 = vpop.f32.mrf.mxu0
      %v897 = vpop.f32.mrf.mxu0
      %v898 = vadd.f32 %v682, %v897
      %v899 = vpop.f32.mrf.mxu0
      %900 = vmatprep.mubr.bf16.mxu0 0
      %901 = vmatmul.mubr.bf16.gmra.mxu0 %v763
      %v902 = vpop.f32.mrf.mxu0
      %v903 = vadd.f32 %v687, %v902
      %v904 = vpop.f32.mrf.mxu0
      %v905 = vpop.f32.mrf.mxu0
      %v906 = vadd.f32 %v690, %v905
      %v907 = vpop.f32.mrf.mxu0
      %908 = vmatprep.mubr.bf16.mxu0 0
      %909 = vmatmul.mubr.bf16.gmra.mxu0 %v765
      %v910 = vpop.f32.mrf.mxu0
      %v911 = vadd.f32 %v695, %v910
      %v912 = vpop.f32.mrf.mxu0
      %v913 = vpop.f32.mrf.mxu0
      %v914 = vadd.f32 %v698, %v913
      %v915 = vpop.f32.mrf.mxu0
      %916 = vmatprep.mubr.bf16.mxu0 0
      %917 = vmatmul.mubr.bf16.gmra.mxu0 %v767
      %v918 = vpop.f32.mrf.mxu0
      %v919 = vadd.f32 %v703, %v918
      %v920 = vpop.f32.mrf.mxu0
      %v921 = vpop.f32.mrf.mxu0
      %v922 = vadd.f32 %v706, %v921
      %v923 = vpop.f32.mrf.mxu0
      %924 = vmatprep.mubr.bf16.mxu0 0
      %925 = vmatmul.mubr.bf16.gmra.mxu0 %v769
      %v926 = vpop.f32.mrf.mxu0
      %v927 = vadd.f32 %v711, %v926
      %v928 = vpop.f32.mrf.mxu0
      %v929 = vpop.f32.mrf.mxu0
      %v930 = vadd.f32 %v714, %v929
      %v931 = vpop.f32.mrf.mxu0
      %932 = vmatprep.mubr.bf16.mxu0 0
      %933 = vmatmul.mubr.bf16.gmra.mxu0 %v771
      %v934 = vpop.f32.mrf.mxu0
      %v935 = vadd.f32 %v719, %v934
      %v936 = vpop.f32.mrf.mxu0
      %v937 = vpop.f32.mrf.mxu0
      %v938 = vadd.f32 %v722, %v937
      %v939 = vpop.f32.mrf.mxu0
      %940 = vmatprep.mubr.bf16.mxu0 0
      %941 = vmatmul.mubr.bf16.gmra.mxu0 %v773
      %v942 = vpop.f32.mrf.mxu0
      %v943 = vadd.f32 %v727, %v942
      %v944 = vpop.f32.mrf.mxu0
      %v945 = vpop.f32.mrf.mxu0
      %v946 = vadd.f32 %v730, %v945
      %v947 = vpop.f32.mrf.mxu0
      %948 = vmatprep.mubr.bf16.mxu0 0
      %949 = vmatmul.mubr.bf16.gmra.mxu0 %v775
      %v950 = vpop.f32.mrf.mxu0
      %v951 = vadd.f32 %v735, %v950
      %v952 = vpop.f32.mrf.mxu0
      %v953 = vpop.f32.mrf.mxu0
      %v954 = vadd.f32 %v738, %v953
      %v955 = vpop.f32.mrf.mxu0
      %956 = vdwg.mxu0
      %v957 = vld [vmem:[%s206] sm:$0xe]
      %s958 = scalar_lea.vmem %s210, 4
      %v959 = vld [vmem:[%s958] sm:$0x3]
      %v961 = vunpack.c.l.b16 %v957
      %v962 = vpack.c.b16 %v301, %v961
      %vm963 = vcmask 1046528
      %v964 = vrot.slane %v962, 1
      %v965 = vrot.slane %v338, 1
      %v966 = vsel %vm963, %v964, %v965
      %v967 = vrot.slane %v339, 1
      %v968 = vsel %vm963, %v965, %v967
      %v969 = vrot.slane %v340, 1
      %v970 = vsel %vm963, %v967, %v969
      %v971 = vrot.slane %v341, 1
      %v972 = vsel %vm963, %v969, %v971
      %v973 = vrot.slane %v342, 1
      %v974 = vsel %vm963, %v971, %v973
      %v975 = vrot.slane %v343, 1
      %v976 = vsel %vm963, %v973, %v975
      %v977 = vrot.slane %v344, 1
      %v978 = vsel %vm963, %v975, %v977
      %v979 = vrot.slane %v345, 1
      %v980 = vsel %vm963, %v977, %v979
      %v981 = vrot.slane %v346, 1
      %v982 = vsel %vm963, %v979, %v981
      %v983 = vrot.slane %v347, 1
      %v984 = vsel %vm963, %v981, %v983
      %v985 = vrot.slane %v348, 1
      %v986 = vsel %vm963, %v983, %v985
      %v987 = vrot.slane %v349, 1
      %v988 = vsel %vm963, %v985, %v987
      %v989 = vrot.slane %v350, 1
      %v990 = vsel %vm963, %v987, %v989
      %v991 = vrot.slane %v351, 1
      %v992 = vsel %vm963, %v989, %v991
      %v993 = vrot.slane %v352, 1
      %v994 = vsel %vm963, %v991, %v993
      %v995 = vrot.slane %v353, 1
      %v996 = vsel %vm963, %v993, %v995
      %v997 = vrot.slane %v354, 1
      %v998 = vsel %vm963, %v995, %v997
      %v999 = vrot.slane %v355, 1
      %v1000 = vsel %vm963, %v997, %v999
      %v1002 = vsel %vm505, %v966, 0
      %v1005 = vsel %vm505, %v968, 0
      %v1008 = vsel %vm505, %v970, 0
      %v1011 = vsel %vm505, %v972, 0
      %v1014 = vsel %vm505, %v974, 0
      %v1017 = vsel %vm505, %v976, 0
      %v1020 = vsel %vm505, %v978, 0
      %v1023 = vsel %vm505, %v980, 0
      %v1026 = vsel %vm505, %v982, 0
      %v1029 = vsel %vm505, %v984, 0
      %v1032 = vsel %vm505, %v986, 0
      %v1035 = vsel %vm505, %v988, 0
      %v1038 = vsel %vm505, %v990, 0
      %v1041 = vsel %vm505, %v992, 0
      %v1044 = vsel %vm505, %v994, 0
      %v1047 = vsel %vm505, %v996, 0
      %v1050 = vsel %vm505, %v998, 0
      %v1053 = vsel %vm505, %v1000, 0
      %v1056 = vsel %vm560, %v959, 0
      %1058 = vmatprep.subr.bf16.mxu0 0
      %1059 = vmatpush1.bf16.msra.mxu0 0
      %1060 = vmatprep.subr.bf16.mxu0 0
      %1061 = vmatpush1.bf16.msra.mxu0 0
      %1062 = vmatprep.subr.bf16.mxu0 0
      %1063 = vmatpush1.bf16.msra.mxu0 0
      %1064 = vmatprep.subr.bf16.mxu0 0
      %1065 = vmatpush1.bf16.msra.mxu0 0
      %1066 = vmatprep.subr.bf16.mxu0 0
      %1067 = vmatpush1.bf16.msra.mxu0 0
      %1068 = vmatprep.subr.bf16.mxu0 0
      %1069 = vmatpush1.bf16.msra.mxu0 0
      %1070 = vmatprep.subr.bf16.mxu0 0
      %1071 = vmatpush1.bf16.msra.mxu0 0
      %1072 = vmatprep.subr.bf16.mxu0 0
      %1073 = vmatpush1.bf16.msra.mxu0 %v1056
      %1074 = vmatprep.subr.bf16.mxu0 0
      %1075 = vmatpush2.bf16.msra.mxu0 0
      %1076 = vmatprep.subr.bf16.mxu0 0
      %1077 = vmatpush2.bf16.msra.mxu0 0
      %1078 = vmatprep.subr.bf16.mxu0 0
      %1079 = vmatpush2.bf16.msra.mxu0 0
      %1080 = vmatprep.subr.bf16.mxu0 0
      %1081 = vmatpush2.bf16.msra.mxu0 0
      %1082 = vmatprep.subr.bf16.mxu0 0
      %1083 = vmatpush2.bf16.msra.mxu0 0
      %1084 = vmatprep.subr.bf16.mxu0 0
      %1085 = vmatpush2.bf16.msra.mxu0 0
      %1086 = vmatprep.subr.bf16.mxu0 0
      %1087 = vmatpush2.bf16.msra.mxu0 0
      %1088 = vmatprep.subr.bf16.mxu0 0
      %1089 = vmatpush2.bf16.msra.mxu0 0
      %1090 = vmatprep.mubr.bf16.mxu0 0
      %1091 = vmatmul.mubr.bf16.gmra.mxu0 %v1002
      %v1092 = vpop.f32.mrf.mxu0
      %v1093 = vadd.f32 0.0, %v1092
      %v1094 = vpop.f32.mrf.mxu0
      %v1095 = vpop.f32.mrf.mxu0
      %v1096 = vadd.f32 0.0, %v1095
      %v1097 = vpop.f32.mrf.mxu0
      %1098 = vmatprep.mubr.bf16.mxu0 0
      %1099 = vmatmul.mubr.bf16.gmra.mxu0 %v1005
      %v1100 = vpop.f32.mrf.mxu0
      %v1101 = vadd.f32 0.0, %v1100
      %v1102 = vpop.f32.mrf.mxu0
      %v1103 = vpop.f32.mrf.mxu0
      %v1104 = vadd.f32 0.0, %v1103
      %v1105 = vpop.f32.mrf.mxu0
      %1106 = vmatprep.mubr.bf16.mxu0 0
      %1107 = vmatmul.mubr.bf16.gmra.mxu0 %v1008
      %v1108 = vpop.f32.mrf.mxu0
      %v1109 = vadd.f32 0.0, %v1108
      %v1110 = vpop.f32.mrf.mxu0
      %v1111 = vpop.f32.mrf.mxu0
      %v1112 = vadd.f32 0.0, %v1111
      %v1113 = vpop.f32.mrf.mxu0
      %1114 = vmatprep.mubr.bf16.mxu0 0
      %1115 = vmatmul.mubr.bf16.gmra.mxu0 %v1011
      %v1116 = vpop.f32.mrf.mxu0
      %v1117 = vadd.f32 0.0, %v1116
      %v1118 = vpop.f32.mrf.mxu0
      %v1119 = vpop.f32.mrf.mxu0
      %v1120 = vadd.f32 0.0, %v1119
      %v1121 = vpop.f32.mrf.mxu0
      %1122 = vmatprep.mubr.bf16.mxu0 0
      %1123 = vmatmul.mubr.bf16.gmra.mxu0 %v1014
      %v1124 = vpop.f32.mrf.mxu0
      %v1125 = vadd.f32 0.0, %v1124
      %v1126 = vpop.f32.mrf.mxu0
      %v1127 = vpop.f32.mrf.mxu0
      %v1128 = vadd.f32 0.0, %v1127
      %v1129 = vpop.f32.mrf.mxu0
      %1130 = vmatprep.mubr.bf16.mxu0 0
      %1131 = vmatmul.mubr.bf16.gmra.mxu0 %v1017
      %v1132 = vpop.f32.mrf.mxu0
      %v1133 = vadd.f32 0.0, %v1132
      %v1134 = vpop.f32.mrf.mxu0
      %v1135 = vpop.f32.mrf.mxu0
      %v1136 = vadd.f32 0.0, %v1135
      %v1137 = vpop.f32.mrf.mxu0
      %1138 = vmatprep.mubr.bf16.mxu0 0
      %1139 = vmatmul.mubr.bf16.gmra.mxu0 %v1020
      %v1140 = vpop.f32.mrf.mxu0
      %v1141 = vadd.f32 0.0, %v1140
      %v1142 = vpop.f32.mrf.mxu0
      %v1143 = vpop.f32.mrf.mxu0
      %v1144 = vadd.f32 0.0, %v1143
      %v1145 = vpop.f32.mrf.mxu0
      %1146 = vmatprep.mubr.bf16.mxu0 0
      %1147 = vmatmul.mubr.bf16.gmra.mxu0 %v1023
      %v1148 = vpop.f32.mrf.mxu0
      %v1149 = vadd.f32 0.0, %v1148
      %v1150 = vpop.f32.mrf.mxu0
      %v1151 = vpop.f32.mrf.mxu0
      %v1152 = vadd.f32 0.0, %v1151
      %v1153 = vpop.f32.mrf.mxu0
      %1154 = vmatprep.mubr.bf16.mxu0 0
      %1155 = vmatmul.mubr.bf16.gmra.mxu0 %v1026
      %v1156 = vpop.f32.mrf.mxu0
      %v1157 = vadd.f32 0.0, %v1156
      %v1158 = vpop.f32.mrf.mxu0
      %v1159 = vpop.f32.mrf.mxu0
      %v1160 = vadd.f32 0.0, %v1159
      %v1161 = vpop.f32.mrf.mxu0
      %1162 = vmatprep.mubr.bf16.mxu0 0
      %1163 = vmatmul.mubr.bf16.gmra.mxu0 %v1029
      %v1164 = vpop.f32.mrf.mxu0
      %v1165 = vadd.f32 0.0, %v1164
      %v1166 = vpop.f32.mrf.mxu0
      %v1167 = vpop.f32.mrf.mxu0
      %v1168 = vadd.f32 0.0, %v1167
      %v1169 = vpop.f32.mrf.mxu0
      %1170 = vmatprep.mubr.bf16.mxu0 0
      %1171 = vmatmul.mubr.bf16.gmra.mxu0 %v1032
      %v1172 = vpop.f32.mrf.mxu0
      %v1173 = vadd.f32 0.0, %v1172
      %v1174 = vpop.f32.mrf.mxu0
      %v1175 = vpop.f32.mrf.mxu0
      %v1176 = vadd.f32 0.0, %v1175
      %v1177 = vpop.f32.mrf.mxu0
      %1178 = vmatprep.mubr.bf16.mxu0 0
      %1179 = vmatmul.mubr.bf16.gmra.mxu0 %v1035
      %v1180 = vpop.f32.mrf.mxu0
      %v1181 = vadd.f32 0.0, %v1180
      %v1182 = vpop.f32.mrf.mxu0
      %v1183 = vpop.f32.mrf.mxu0
      %v1184 = vadd.f32 0.0, %v1183
      %v1185 = vpop.f32.mrf.mxu0
      %1186 = vmatprep.mubr.bf16.mxu0 0
      %1187 = vmatmul.mubr.bf16.gmra.mxu0 %v1038
      %v1188 = vpop.f32.mrf.mxu0
      %v1189 = vadd.f32 0.0, %v1188
      %v1190 = vpop.f32.mrf.mxu0
      %v1191 = vpop.f32.mrf.mxu0
      %v1192 = vadd.f32 0.0, %v1191
      %v1193 = vpop.f32.mrf.mxu0
      %1194 = vmatprep.mubr.bf16.mxu0 0
      %1195 = vmatmul.mubr.bf16.gmra.mxu0 %v1041
      %v1196 = vpop.f32.mrf.mxu0
      %v1197 = vadd.f32 0.0, %v1196
      %v1198 = vpop.f32.mrf.mxu0
      %v1199 = vpop.f32.mrf.mxu0
      %v1200 = vadd.f32 0.0, %v1199
      %v1201 = vpop.f32.mrf.mxu0
      %1202 = vmatprep.mubr.bf16.mxu0 0
      %1203 = vmatmul.mubr.bf16.gmra.mxu0 %v1044
      %v1204 = vpop.f32.mrf.mxu0
      %v1205 = vadd.f32 0.0, %v1204
      %v1206 = vpop.f32.mrf.mxu0
      %v1207 = vpop.f32.mrf.mxu0
      %v1208 = vadd.f32 0.0, %v1207
      %v1209 = vpop.f32.mrf.mxu0
      %1210 = vmatprep.mubr.bf16.mxu0 0
      %1211 = vmatmul.mubr.bf16.gmra.mxu0 %v1047
      %v1212 = vpop.f32.mrf.mxu0
      %v1213 = vadd.f32 0.0, %v1212
      %v1214 = vpop.f32.mrf.mxu0
      %v1215 = vpop.f32.mrf.mxu0
      %v1216 = vadd.f32 0.0, %v1215
      %v1217 = vpop.f32.mrf.mxu0
      %1218 = vmatprep.mubr.bf16.mxu0 0
      %1219 = vmatmul.mubr.bf16.gmra.mxu0 %v1050
      %v1220 = vpop.f32.mrf.mxu0
      %v1221 = vadd.f32 0.0, %v1220
      %v1222 = vpop.f32.mrf.mxu0
      %v1223 = vpop.f32.mrf.mxu0
      %v1224 = vadd.f32 0.0, %v1223
      %v1225 = vpop.f32.mrf.mxu0
      %1226 = vmatprep.mubr.bf16.mxu0 0
      %1227 = vmatmul.mubr.bf16.gmra.mxu0 %v1053
      %v1228 = vpop.f32.mrf.mxu0
      %v1229 = vadd.f32 0.0, %v1228
      %v1230 = vpop.f32.mrf.mxu0
      %v1231 = vpop.f32.mrf.mxu0
      %v1232 = vadd.f32 0.0, %v1231
      %v1233 = vpop.f32.mrf.mxu0
      %1234 = vdwg.mxu0
      %v1235 = vadd.f32 %v815, %v1093
      %v1236 = vadd.f32 %v818, %v1096
      %v1237 = vadd.f32 %v823, %v1101
      %v1238 = vadd.f32 %v826, %v1104
      %v1239 = vadd.f32 %v831, %v1109
      %v1240 = vadd.f32 %v834, %v1112
      %v1241 = vadd.f32 %v839, %v1117
      %v1242 = vadd.f32 %v842, %v1120
      %v1243 = vadd.f32 %v847, %v1125
      %v1244 = vadd.f32 %v850, %v1128
      %v1245 = vadd.f32 %v855, %v1133
      %v1246 = vadd.f32 %v858, %v1136
      %v1247 = vadd.f32 %v863, %v1141
      %v1248 = vadd.f32 %v866, %v1144
      %v1249 = vadd.f32 %v871, %v1149
      %v1250 = vadd.f32 %v874, %v1152
      %v1251 = vadd.f32 %v879, %v1157
      %v1252 = vadd.f32 %v882, %v1160
      %v1253 = vadd.f32 %v887, %v1165
      %v1254 = vadd.f32 %v890, %v1168
      %v1255 = vadd.f32 %v895, %v1173
      %v1256 = vadd.f32 %v898, %v1176
      %v1257 = vadd.f32 %v903, %v1181
      %v1258 = vadd.f32 %v906, %v1184
      %v1259 = vadd.f32 %v911, %v1189
      %v1260 = vadd.f32 %v914, %v1192
      %v1261 = vadd.f32 %v919, %v1197
      %v1262 = vadd.f32 %v922, %v1200
      %v1263 = vadd.f32 %v927, %v1205
      %v1264 = vadd.f32 %v930, %v1208
      %v1265 = vadd.f32 %v935, %v1213
      %v1266 = vadd.f32 %v938, %v1216
      %v1267 = vadd.f32 %v943, %v1221
      %v1268 = vadd.f32 %v946, %v1224
      %v1269 = vadd.f32 %v951, %v1229
      %v1270 = vadd.f32 %v954, %v1232
      %v1271 = vld [vmem:[%s206 + $0x8] sm:$0xe]
      %v1272 = vld [vmem:[%s206 + $0xc] sm:$0xf]
      %v1273 = vld [vmem:[%s206 + $0x10] sm:$0xf]
      %v1274 = vld [vmem:[%s206 + $0x14] sm:$0xf]
      %v1275 = vld [vmem:[%s206 + $0x18] sm:$0xf]
      %v1276 = vld [vmem:[%s206 + $0x1c] sm:$0xf]
      %v1277 = vld [vmem:[%s206 + $0x20] sm:$0xf]
      %v1278 = vld [vmem:[%s206 + $0x24] sm:$0xf]
      %v1279 = vld [vmem:[%s206 + $0x28] sm:$0xf]
      %v1280 = vld [vmem:[%s206 + $0x2c] sm:$0xf]
      %v1281 = vld [vmem:[%s206 + $0x30] sm:$0xf]
      %v1282 = vld [vmem:[%s206 + $0x34] sm:$0xf]
      %v1283 = vld [vmem:[%s206 + $0x38] sm:$0xf]
      %v1284 = vld [vmem:[%s206 + $0x3c] sm:$0xf]
      %v1285 = vld [vmem:[%s206 + $0x40] sm:$0xf]
      %v1286 = vld [vmem:[%s206 + $0x44] sm:$0xf]
      %v1287 = vld [vmem:[%s206 + $0x48] sm:$0xf]
      %v1288 = vld [vmem:[%s206 + $0x4c] sm:$0xf]
      %v1289 = vld [vmem:[%s206 + $0x50] sm:$0xf]
      %v1290 = vld [vmem:[%s206 + $0x54] sm:$0xf]
      %v1291 = vld [vmem:[%s206 + $0x58] sm:$0xf]
      %v1292 = vld [vmem:[%s206 + $0x5c] sm:$0xf]
      %v1293 = vld [vmem:[%s206 + $0x60] sm:$0xf]
      %v1294 = vld [vmem:[%s206 + $0x64] sm:$0xf]
      %v1295 = vld [vmem:[%s206 + $0x68] sm:$0xf]
      %v1296 = vld [vmem:[%s206 + $0x6c] sm:$0xf]
      %v1297 = vld [vmem:[%s206 + $0x70] sm:$0xf]
      %v1298 = vld [vmem:[%s206 + $0x74] sm:$0xf]
      %v1299 = vld [vmem:[%s206 + $0x78] sm:$0xf]
      %v1300 = vld [vmem:[%s206 + $0x7c] sm:$0xf]
      %v1301 = vld [vmem:[%s206 + $0x80] sm:$0xf]
      %v1302 = vld [vmem:[%s206 + $0x84] sm:$0xf]
      %v1303 = vld [vmem:[%s206 + $0x88] sm:$0xf]
      %v1304 = vld [vmem:[%s206 + $0x8c] sm:$0xf]
      %v1305 = vld [vmem:[%s206 + $0x90] sm:$0xf]
      %v1306 = vld [vmem:[%s206 + $0x94] sm:$0xf]
      %v1307 = vld [vmem:[%s206 + $0x98] sm:$0x1]
      %s1308 = scalar_lea.vmem %s210, 6
      %v1309 = vld [vmem:[%s1308] sm:$0x3]
      %v1347 = vunpack.c.l.b16 %v1271
      %v1348 = vunpack.c.l.b16 %v1272
      %v1349 = vunpack.c.l.b16 %v1273
      %v1350 = vunpack.c.l.b16 %v1274
      %v1351 = vunpack.c.l.b16 %v1275
      %v1352 = vunpack.c.l.b16 %v1276
      %v1353 = vunpack.c.l.b16 %v1277
      %v1354 = vunpack.c.l.b16 %v1278
      %v1355 = vunpack.c.l.b16 %v1279
      %v1356 = vunpack.c.l.b16 %v1280
      %v1357 = vunpack.c.l.b16 %v1281
      %v1358 = vunpack.c.l.b16 %v1282
      %v1359 = vunpack.c.l.b16 %v1283
      %v1360 = vunpack.c.l.b16 %v1284
      %v1361 = vunpack.c.l.b16 %v1285
      %v1362 = vunpack.c.l.b16 %v1286
      %v1363 = vunpack.c.l.b16 %v1287
      %v1364 = vunpack.c.l.b16 %v1288
      %v1365 = vunpack.c.l.b16 %v1289
      %v1366 = vunpack.c.l.b16 %v1290
      %v1367 = vunpack.c.l.b16 %v1291
      %v1368 = vunpack.c.l.b16 %v1292
      %v1369 = vunpack.c.l.b16 %v1293
      %v1370 = vunpack.c.l.b16 %v1294
      %v1371 = vunpack.c.l.b16 %v1295
      %v1372 = vunpack.c.l.b16 %v1296
      %v1373 = vunpack.c.l.b16 %v1297
      %v1374 = vunpack.c.l.b16 %v1298
      %v1375 = vunpack.c.l.b16 %v1299
      %v1376 = vunpack.c.l.b16 %v1300
      %v1377 = vunpack.c.l.b16 %v1301
      %v1378 = vunpack.c.l.b16 %v1302
      %v1379 = vunpack.c.l.b16 %v1303
      %v1380 = vunpack.c.l.b16 %v1304
      %v1381 = vunpack.c.l.b16 %v1305
      %v1382 = vunpack.c.l.b16 %v1306
      %v1383 = vunpack.c.l.b16 %v1307
      %v1384 = vpack.c.b16 %v1348, %v1347
      %v1385 = vpack.c.b16 %v1350, %v1349
      %v1386 = vpack.c.b16 %v1352, %v1351
      %v1387 = vpack.c.b16 %v1354, %v1353
      %v1388 = vpack.c.b16 %v1356, %v1355
      %v1389 = vpack.c.b16 %v1358, %v1357
      %v1390 = vpack.c.b16 %v1360, %v1359
      %v1391 = vpack.c.b16 %v1362, %v1361
      %v1392 = vpack.c.b16 %v1364, %v1363
      %v1393 = vpack.c.b16 %v1366, %v1365
      %v1394 = vpack.c.b16 %v1368, %v1367
      %v1395 = vpack.c.b16 %v1370, %v1369
      %v1396 = vpack.c.b16 %v1372, %v1371
      %v1397 = vpack.c.b16 %v1374, %v1373
      %v1398 = vpack.c.b16 %v1376, %v1375
      %v1399 = vpack.c.b16 %v1378, %v1377
      %v1400 = vpack.c.b16 %v1380, %v1379
      %v1401 = vpack.c.b16 %v1382, %v1381
      %v1402 = vpack.c.b16 %v1383, %v1383
      %v1403 = vrot.slane %v1384, 1
      %v1404 = vrot.slane %v1385, 1
      %v1405 = vsel %vm963, %v1403, %v1404
      %v1406 = vrot.slane %v1386, 1
      %v1407 = vsel %vm963, %v1404, %v1406
      %v1408 = vrot.slane %v1387, 1
      %v1409 = vsel %vm963, %v1406, %v1408
      %v1410 = vrot.slane %v1388, 1
      %v1411 = vsel %vm963, %v1408, %v1410
      %v1412 = vrot.slane %v1389, 1
      %v1413 = vsel %vm963, %v1410, %v1412
      %v1414 = vrot.slane %v1390, 1
      %v1415 = vsel %vm963, %v1412, %v1414
      %v1416 = vrot.slane %v1391, 1
      %v1417 = vsel %vm963, %v1414, %v1416
      %v1418 = vrot.slane %v1392, 1
      %v1419 = vsel %vm963, %v1416, %v1418
      %v1420 = vrot.slane %v1393, 1
      %v1421 = vsel %vm963, %v1418, %v1420
      %v1422 = vrot.slane %v1394, 1
      %v1423 = vsel %vm963, %v1420, %v1422
      %v1424 = vrot.slane %v1395, 1
      %v1425 = vsel %vm963, %v1422, %v1424
      %v1426 = vrot.slane %v1396, 1
      %v1427 = vsel %vm963, %v1424, %v1426
      %v1428 = vrot.slane %v1397, 1
      %v1429 = vsel %vm963, %v1426, %v1428
      %v1430 = vrot.slane %v1398, 1
      %v1431 = vsel %vm963, %v1428, %v1430
      %v1432 = vrot.slane %v1399, 1
      %v1433 = vsel %vm963, %v1430, %v1432
      %v1434 = vrot.slane %v1400, 1
      %v1435 = vsel %vm963, %v1432, %v1434
      %v1436 = vrot.slane %v1401, 1
      %v1437 = vsel %vm963, %v1434, %v1436
      %v1438 = vrot.slane %v1402, 1
      %v1439 = vsel %vm963, %v1436, %v1438
      %v1441 = vsel %vm505, %v1405, 0
      %v1444 = vsel %vm505, %v1407, 0
      %v1447 = vsel %vm505, %v1409, 0
      %v1450 = vsel %vm505, %v1411, 0
      %v1453 = vsel %vm505, %v1413, 0
      %v1456 = vsel %vm505, %v1415, 0
      %v1459 = vsel %vm505, %v1417, 0
      %v1462 = vsel %vm505, %v1419, 0
      %v1465 = vsel %vm505, %v1421, 0
      %v1468 = vsel %vm505, %v1423, 0
      %v1471 = vsel %vm505, %v1425, 0
      %v1474 = vsel %vm505, %v1427, 0
      %v1477 = vsel %vm505, %v1429, 0
      %v1480 = vsel %vm505, %v1431, 0
      %v1483 = vsel %vm505, %v1433, 0
      %v1486 = vsel %vm505, %v1435, 0
      %v1489 = vsel %vm505, %v1437, 0
      %v1492 = vsel %vm505, %v1439, 0
      %v1495 = vsel %vm560, %v1309, 0
      %1497 = vmatprep.subr.bf16.mxu0 0
      %1498 = vmatpush1.bf16.msra.mxu0 0
      %1499 = vmatprep.subr.bf16.mxu0 0
      %1500 = vmatpush1.bf16.msra.mxu0 0
      %1501 = vmatprep.subr.bf16.mxu0 0
      %1502 = vmatpush1.bf16.msra.mxu0 0
      %1503 = vmatprep.subr.bf16.mxu0 0
      %1504 = vmatpush1.bf16.msra.mxu0 0
      %1505 = vmatprep.subr.bf16.mxu0 0
      %1506 = vmatpush1.bf16.msra.mxu0 0
      %1507 = vmatprep.subr.bf16.mxu0 0
      %1508 = vmatpush1.bf16.msra.mxu0 0
      %1509 = vmatprep.subr.bf16.mxu0 0
      %1510 = vmatpush1.bf16.msra.mxu0 0
      %1511 = vmatprep.subr.bf16.mxu0 0
      %1512 = vmatpush1.bf16.msra.mxu0 %v1495
      %1513 = vmatprep.subr.bf16.mxu0 0
      %1514 = vmatpush2.bf16.msra.mxu0 0
      %1515 = vmatprep.subr.bf16.mxu0 0
      %1516 = vmatpush2.bf16.msra.mxu0 0
      %1517 = vmatprep.subr.bf16.mxu0 0
      %1518 = vmatpush2.bf16.msra.mxu0 0
      %1519 = vmatprep.subr.bf16.mxu0 0
      %1520 = vmatpush2.bf16.msra.mxu0 0
      %1521 = vmatprep.subr.bf16.mxu0 0
      %1522 = vmatpush2.bf16.msra.mxu0 0
      %1523 = vmatprep.subr.bf16.mxu0 0
      %1524 = vmatpush2.bf16.msra.mxu0 0
      %1525 = vmatprep.subr.bf16.mxu0 0
      %1526 = vmatpush2.bf16.msra.mxu0 0
      %1527 = vmatprep.subr.bf16.mxu0 0
      %1528 = vmatpush2.bf16.msra.mxu0 0
      %1529 = vmatprep.mubr.bf16.mxu0 0
      %1530 = vmatmul.mubr.bf16.gmra.mxu0 %v1441
      %v1531 = vpop.f32.mrf.mxu0
      %v1532 = vadd.f32 0.0, %v1531
      %v1533 = vpop.f32.mrf.mxu0
      %v1534 = vpop.f32.mrf.mxu0
      %v1535 = vadd.f32 0.0, %v1534
      %v1536 = vpop.f32.mrf.mxu0
      %1537 = vmatprep.mubr.bf16.mxu0 0
      %1538 = vmatmul.mubr.bf16.gmra.mxu0 %v1444
      %v1539 = vpop.f32.mrf.mxu0
      %v1540 = vadd.f32 0.0, %v1539
      %v1541 = vpop.f32.mrf.mxu0
      %v1542 = vpop.f32.mrf.mxu0
      %v1543 = vadd.f32 0.0, %v1542
      %v1544 = vpop.f32.mrf.mxu0
      %1545 = vmatprep.mubr.bf16.mxu0 0
      %1546 = vmatmul.mubr.bf16.gmra.mxu0 %v1447
      %v1547 = vpop.f32.mrf.mxu0
      %v1548 = vadd.f32 0.0, %v1547
      %v1549 = vpop.f32.mrf.mxu0
      %v1550 = vpop.f32.mrf.mxu0
      %v1551 = vadd.f32 0.0, %v1550
      %v1552 = vpop.f32.mrf.mxu0
      %1553 = vmatprep.mubr.bf16.mxu0 0
      %1554 = vmatmul.mubr.bf16.gmra.mxu0 %v1450
      %v1555 = vpop.f32.mrf.mxu0
      %v1556 = vadd.f32 0.0, %v1555
      %v1557 = vpop.f32.mrf.mxu0
      %v1558 = vpop.f32.mrf.mxu0
      %v1559 = vadd.f32 0.0, %v1558
      %v1560 = vpop.f32.mrf.mxu0
      %1561 = vmatprep.mubr.bf16.mxu0 0
      %1562 = vmatmul.mubr.bf16.gmra.mxu0 %v1453
      %v1563 = vpop.f32.mrf.mxu0
      %v1564 = vadd.f32 0.0, %v1563
      %v1565 = vpop.f32.mrf.mxu0
      %v1566 = vpop.f32.mrf.mxu0
      %v1567 = vadd.f32 0.0, %v1566
      %v1568 = vpop.f32.mrf.mxu0
      %1569 = vmatprep.mubr.bf16.mxu0 0
      %1570 = vmatmul.mubr.bf16.gmra.mxu0 %v1456
      %v1571 = vpop.f32.mrf.mxu0
      %v1572 = vadd.f32 0.0, %v1571
      %v1573 = vpop.f32.mrf.mxu0
      %v1574 = vpop.f32.mrf.mxu0
      %v1575 = vadd.f32 0.0, %v1574
      %v1576 = vpop.f32.mrf.mxu0
      %1577 = vmatprep.mubr.bf16.mxu0 0
      %1578 = vmatmul.mubr.bf16.gmra.mxu0 %v1459
      %v1579 = vpop.f32.mrf.mxu0
      %v1580 = vadd.f32 0.0, %v1579
      %v1581 = vpop.f32.mrf.mxu0
      %v1582 = vpop.f32.mrf.mxu0
      %v1583 = vadd.f32 0.0, %v1582
      %v1584 = vpop.f32.mrf.mxu0
      %1585 = vmatprep.mubr.bf16.mxu0 0
      %1586 = vmatmul.mubr.bf16.gmra.mxu0 %v1462
      %v1587 = vpop.f32.mrf.mxu0
      %v1588 = vadd.f32 0.0, %v1587
      %v1589 = vpop.f32.mrf.mxu0
      %v1590 = vpop.f32.mrf.mxu0
      %v1591 = vadd.f32 0.0, %v1590
      %v1592 = vpop.f32.mrf.mxu0
      %1593 = vmatprep.mubr.bf16.mxu0 0
      %1594 = vmatmul.mubr.bf16.gmra.mxu0 %v1465
      %v1595 = vpop.f32.mrf.mxu0
      %v1596 = vadd.f32 0.0, %v1595
      %v1597 = vpop.f32.mrf.mxu0
      %v1598 = vpop.f32.mrf.mxu0
      %v1599 = vadd.f32 0.0, %v1598
      %v1600 = vpop.f32.mrf.mxu0
      %1601 = vmatprep.mubr.bf16.mxu0 0
      %1602 = vmatmul.mubr.bf16.gmra.mxu0 %v1468
      %v1603 = vpop.f32.mrf.mxu0
      %v1604 = vadd.f32 0.0, %v1603
      %v1605 = vpop.f32.mrf.mxu0
      %v1606 = vpop.f32.mrf.mxu0
      %v1607 = vadd.f32 0.0, %v1606
      %v1608 = vpop.f32.mrf.mxu0
      %1609 = vmatprep.mubr.bf16.mxu0 0
      %1610 = vmatmul.mubr.bf16.gmra.mxu0 %v1471
      %v1611 = vpop.f32.mrf.mxu0
      %v1612 = vadd.f32 0.0, %v1611
      %v1613 = vpop.f32.mrf.mxu0
      %v1614 = vpop.f32.mrf.mxu0
      %v1615 = vadd.f32 0.0, %v1614
      %v1616 = vpop.f32.mrf.mxu0
      %1617 = vmatprep.mubr.bf16.mxu0 0
      %1618 = vmatmul.mubr.bf16.gmra.mxu0 %v1474
      %v1619 = vpop.f32.mrf.mxu0
      %v1620 = vadd.f32 0.0, %v1619
      %v1621 = vpop.f32.mrf.mxu0
      %v1622 = vpop.f32.mrf.mxu0
      %v1623 = vadd.f32 0.0, %v1622
      %v1624 = vpop.f32.mrf.mxu0
      %1625 = vmatprep.mubr.bf16.mxu0 0
      %1626 = vmatmul.mubr.bf16.gmra.mxu0 %v1477
      %v1627 = vpop.f32.mrf.mxu0
      %v1628 = vadd.f32 0.0, %v1627
      %v1629 = vpop.f32.mrf.mxu0
      %v1630 = vpop.f32.mrf.mxu0
      %v1631 = vadd.f32 0.0, %v1630
      %v1632 = vpop.f32.mrf.mxu0
      %1633 = vmatprep.mubr.bf16.mxu0 0
      %1634 = vmatmul.mubr.bf16.gmra.mxu0 %v1480
      %v1635 = vpop.f32.mrf.mxu0
      %v1636 = vadd.f32 0.0, %v1635
      %v1637 = vpop.f32.mrf.mxu0
      %v1638 = vpop.f32.mrf.mxu0
      %v1639 = vadd.f32 0.0, %v1638
      %v1640 = vpop.f32.mrf.mxu0
      %1641 = vmatprep.mubr.bf16.mxu0 0
      %1642 = vmatmul.mubr.bf16.gmra.mxu0 %v1483
      %v1643 = vpop.f32.mrf.mxu0
      %v1644 = vadd.f32 0.0, %v1643
      %v1645 = vpop.f32.mrf.mxu0
      %v1646 = vpop.f32.mrf.mxu0
      %v1647 = vadd.f32 0.0, %v1646
      %v1648 = vpop.f32.mrf.mxu0
      %1649 = vmatprep.mubr.bf16.mxu0 0
      %1650 = vmatmul.mubr.bf16.gmra.mxu0 %v1486
      %v1651 = vpop.f32.mrf.mxu0
      %v1652 = vadd.f32 0.0, %v1651
      %v1653 = vpop.f32.mrf.mxu0
      %v1654 = vpop.f32.mrf.mxu0
      %v1655 = vadd.f32 0.0, %v1654
      %v1656 = vpop.f32.mrf.mxu0
      %1657 = vmatprep.mubr.bf16.mxu0 0
      %1658 = vmatmul.mubr.bf16.gmra.mxu0 %v1489
      %v1659 = vpop.f32.mrf.mxu0
      %v1660 = vadd.f32 0.0, %v1659
      %v1661 = vpop.f32.mrf.mxu0
      %v1662 = vpop.f32.mrf.mxu0
      %v1663 = vadd.f32 0.0, %v1662
      %v1664 = vpop.f32.mrf.mxu0
      %1665 = vmatprep.mubr.bf16.mxu0 0
      %1666 = vmatmul.mubr.bf16.gmra.mxu0 %v1492
      %v1667 = vpop.f32.mrf.mxu0
      %v1668 = vadd.f32 0.0, %v1667
      %v1669 = vpop.f32.mrf.mxu0
      %v1670 = vpop.f32.mrf.mxu0
      %v1671 = vadd.f32 0.0, %v1670
      %v1672 = vpop.f32.mrf.mxu0
      %1673 = vdwg.mxu0
      %v1674 = vadd.f32 %v1235, %v1532
      %v1675 = vadd.f32 %v1236, %v1535
      %v1676 = vadd.f32 %v1237, %v1540
      %v1677 = vadd.f32 %v1238, %v1543
      %v1678 = vadd.f32 %v1239, %v1548
      %v1679 = vadd.f32 %v1240, %v1551
      %v1680 = vadd.f32 %v1241, %v1556
      %v1681 = vadd.f32 %v1242, %v1559
      %v1682 = vadd.f32 %v1243, %v1564
      %v1683 = vadd.f32 %v1244, %v1567
      %v1684 = vadd.f32 %v1245, %v1572
      %v1685 = vadd.f32 %v1246, %v1575
      %v1686 = vadd.f32 %v1247, %v1580
      %v1687 = vadd.f32 %v1248, %v1583
      %v1688 = vadd.f32 %v1249, %v1588
      %v1689 = vadd.f32 %v1250, %v1591
      %v1690 = vadd.f32 %v1251, %v1596
      %v1691 = vadd.f32 %v1252, %v1599
      %v1692 = vadd.f32 %v1253, %v1604
      %v1693 = vadd.f32 %v1254, %v1607
      %v1694 = vadd.f32 %v1255, %v1612
      %v1695 = vadd.f32 %v1256, %v1615
      %v1696 = vadd.f32 %v1257, %v1620
      %v1697 = vadd.f32 %v1258, %v1623
      %v1698 = vadd.f32 %v1259, %v1628
      %v1699 = vadd.f32 %v1260, %v1631
      %v1700 = vadd.f32 %v1261, %v1636
      %v1701 = vadd.f32 %v1262, %v1639
      %v1702 = vadd.f32 %v1263, %v1644
      %v1703 = vadd.f32 %v1264, %v1647
      %v1704 = vadd.f32 %v1265, %v1652
      %v1705 = vadd.f32 %v1266, %v1655
      %v1706 = vadd.f32 %v1267, %v1660
      %v1707 = vadd.f32 %v1268, %v1663
      %v1708 = vadd.f32 %v1269, %v1668
      %v1709 = vadd.f32 %v1270, %v1671
      %v1710 = vld [vmem:[%s206 + $0x98] sm:$0x3]
      %s1711 = scalar_lea.vmem %s210, 8
      %v1712 = vld [vmem:[%s1711] sm:$0x3]
      %v1714 = vunpack.c.l.b16 %v1710
      %v1715 = vpack.c.b16 %v1714, %v1714
      %vm1716 = vsmask.f32 6400
      %v1718 = vshrl.u32 %v1384, 16
      %v1720 = vrot.slane %v1718, 1
      %v1721 = vshll.u32 %v1384, 16
      %v1723 = vrot.slane %v1721, 2
      %v1724 = vor.u32 %v1720, %v1723
      %v1726 = vshrl.u32 %v1385, 16
      %v1728 = vrot.slane %v1726, 1
      %v1729 = vshll.u32 %v1385, 16
      %v1731 = vrot.slane %v1729, 2
      %v1732 = vor.u32 %v1728, %v1731
      %v1733 = vsel %vm1716, %v1724, %v1732
      %v1735 = vshrl.u32 %v1386, 16
      %v1737 = vrot.slane %v1735, 1
      %v1738 = vshll.u32 %v1386, 16
      %v1740 = vrot.slane %v1738, 2
      %v1741 = vor.u32 %v1737, %v1740
      %v1742 = vsel %vm1716, %v1732, %v1741
      %v1744 = vshrl.u32 %v1387, 16
      %v1746 = vrot.slane %v1744, 1
      %v1747 = vshll.u32 %v1387, 16
      %v1749 = vrot.slane %v1747, 2
      %v1750 = vor.u32 %v1746, %v1749
      %v1751 = vsel %vm1716, %v1741, %v1750
      %v1753 = vshrl.u32 %v1388, 16
      %v1755 = vrot.slane %v1753, 1
      %v1756 = vshll.u32 %v1388, 16
      %v1758 = vrot.slane %v1756, 2
      %v1759 = vor.u32 %v1755, %v1758
      %v1760 = vsel %vm1716, %v1750, %v1759
      %v1762 = vshrl.u32 %v1389, 16
      %v1764 = vrot.slane %v1762, 1
      %v1765 = vshll.u32 %v1389, 16
      %v1767 = vrot.slane %v1765, 2
      %v1768 = vor.u32 %v1764, %v1767
      %v1769 = vsel %vm1716, %v1759, %v1768
      %v1771 = vshrl.u32 %v1390, 16
      %v1773 = vrot.slane %v1771, 1
      %v1774 = vshll.u32 %v1390, 16
      %v1776 = vrot.slane %v1774, 2
      %v1777 = vor.u32 %v1773, %v1776
      %v1778 = vsel %vm1716, %v1768, %v1777
      %v1780 = vshrl.u32 %v1391, 16
      %v1782 = vrot.slane %v1780, 1
      %v1783 = vshll.u32 %v1391, 16
      %v1785 = vrot.slane %v1783, 2
      %v1786 = vor.u32 %v1782, %v1785
      %v1787 = vsel %vm1716, %v1777, %v1786
      %v1789 = vshrl.u32 %v1392, 16
      %v1791 = vrot.slane %v1789, 1
      %v1792 = vshll.u32 %v1392, 16
      %v1794 = vrot.slane %v1792, 2
      %v1795 = vor.u32 %v1791, %v1794
      %v1796 = vsel %vm1716, %v1786, %v1795
      %v1798 = vshrl.u32 %v1393, 16
      %v1800 = vrot.slane %v1798, 1
      %v1801 = vshll.u32 %v1393, 16
      %v1803 = vrot.slane %v1801, 2
      %v1804 = vor.u32 %v1800, %v1803
      %v1805 = vsel %vm1716, %v1795, %v1804
      %v1807 = vshrl.u32 %v1394, 16
      %v1809 = vrot.slane %v1807, 1
      %v1810 = vshll.u32 %v1394, 16
      %v1812 = vrot.slane %v1810, 2
      %v1813 = vor.u32 %v1809, %v1812
      %v1814 = vsel %vm1716, %v1804, %v1813
      %v1816 = vshrl.u32 %v1395, 16
      %v1818 = vrot.slane %v1816, 1
      %v1819 = vshll.u32 %v1395, 16
      %v1821 = vrot.slane %v1819, 2
      %v1822 = vor.u32 %v1818, %v1821
      %v1823 = vsel %vm1716, %v1813, %v1822
      %v1825 = vshrl.u32 %v1396, 16
      %v1827 = vrot.slane %v1825, 1
      %v1828 = vshll.u32 %v1396, 16
      %v1830 = vrot.slane %v1828, 2
      %v1831 = vor.u32 %v1827, %v1830
      %v1832 = vsel %vm1716, %v1822, %v1831
      %v1834 = vshrl.u32 %v1397, 16
      %v1836 = vrot.slane %v1834, 1
      %v1837 = vshll.u32 %v1397, 16
      %v1839 = vrot.slane %v1837, 2
      %v1840 = vor.u32 %v1836, %v1839
      %v1841 = vsel %vm1716, %v1831, %v1840
      %v1843 = vshrl.u32 %v1398, 16
      %v1845 = vrot.slane %v1843, 1
      %v1846 = vshll.u32 %v1398, 16
      %v1848 = vrot.slane %v1846, 2
      %v1849 = vor.u32 %v1845, %v1848
      %v1850 = vsel %vm1716, %v1840, %v1849
      %v1852 = vshrl.u32 %v1399, 16
      %v1854 = vrot.slane %v1852, 1
      %v1855 = vshll.u32 %v1399, 16
      %v1857 = vrot.slane %v1855, 2
      %v1858 = vor.u32 %v1854, %v1857
      %v1859 = vsel %vm1716, %v1849, %v1858
      %v1861 = vshrl.u32 %v1400, 16
      %v1863 = vrot.slane %v1861, 1
      %v1864 = vshll.u32 %v1400, 16
      %v1866 = vrot.slane %v1864, 2
      %v1867 = vor.u32 %v1863, %v1866
      %v1868 = vsel %vm1716, %v1858, %v1867
      %v1870 = vshrl.u32 %v1401, 16
      %v1872 = vrot.slane %v1870, 1
      %v1873 = vshll.u32 %v1401, 16
      %v1875 = vrot.slane %v1873, 2
      %v1876 = vor.u32 %v1872, %v1875
      %v1877 = vsel %vm1716, %v1867, %v1876
      %v1879 = vshrl.u32 %v1715, 16
      %v1881 = vrot.slane %v1879, 1
      %v1882 = vshll.u32 %v1715, 16
      %v1884 = vrot.slane %v1882, 2
      %v1885 = vor.u32 %v1881, %v1884
      %v1886 = vsel %vm1716, %v1876, %v1885
      %v1888 = vsel %vm505, %v1733, 0
      %v1891 = vsel %vm505, %v1742, 0
      %v1894 = vsel %vm505, %v1751, 0
      %v1897 = vsel %vm505, %v1760, 0
      %v1900 = vsel %vm505, %v1769, 0
      %v1903 = vsel %vm505, %v1778, 0
      %v1906 = vsel %vm505, %v1787, 0
      %v1909 = vsel %vm505, %v1796, 0
      %v1912 = vsel %vm505, %v1805, 0
      %v1915 = vsel %vm505, %v1814, 0
      %v1918 = vsel %vm505, %v1823, 0
      %v1921 = vsel %vm505, %v1832, 0
      %v1924 = vsel %vm505, %v1841, 0
      %v1927 = vsel %vm505, %v1850, 0
      %v1930 = vsel %vm505, %v1859, 0
      %v1933 = vsel %vm505, %v1868, 0
      %v1936 = vsel %vm505, %v1877, 0
      %v1939 = vsel %vm505, %v1886, 0
      %v1942 = vsel %vm560, %v1712, 0
      %1944 = vmatprep.subr.bf16.mxu0 0
      %1945 = vmatpush1.bf16.msra.mxu0 0
      %1946 = vmatprep.subr.bf16.mxu0 0
      %1947 = vmatpush1.bf16.msra.mxu0 0
      %1948 = vmatprep.subr.bf16.mxu0 0
      %1949 = vmatpush1.bf16.msra.mxu0 0
      %1950 = vmatprep.subr.bf16.mxu0 0
      %1951 = vmatpush1.bf16.msra.mxu0 0
      %1952 = vmatprep.subr.bf16.mxu0 0
      %1953 = vmatpush1.bf16.msra.mxu0 0
      %1954 = vmatprep.subr.bf16.mxu0 0
      %1955 = vmatpush1.bf16.msra.mxu0 0
      %1956 = vmatprep.subr.bf16.mxu0 0
      %1957 = vmatpush1.bf16.msra.mxu0 0
      %1958 = vmatprep.subr.bf16.mxu0 0
      %1959 = vmatpush1.bf16.msra.mxu0 %v1942
      %1960 = vmatprep.subr.bf16.mxu0 0
      %1961 = vmatpush2.bf16.msra.mxu0 0
      %1962 = vmatprep.subr.bf16.mxu0 0
      %1963 = vmatpush2.bf16.msra.mxu0 0
      %1964 = vmatprep.subr.bf16.mxu0 0
      %1965 = vmatpush2.bf16.msra.mxu0 0
      %1966 = vmatprep.subr.bf16.mxu0 0
      %1967 = vmatpush2.bf16.msra.mxu0 0
      %1968 = vmatprep.subr.bf16.mxu0 0
      %1969 = vmatpush2.bf16.msra.mxu0 0
      %1970 = vmatprep.subr.bf16.mxu0 0
      %1971 = vmatpush2.bf16.msra.mxu0 0
      %1972 = vmatprep.subr.bf16.mxu0 0
      %1973 = vmatpush2.bf16.msra.mxu0 0
      %1974 = vmatprep.subr.bf16.mxu0 0
      %1975 = vmatpush2.bf16.msra.mxu0 0
      %1976 = vmatprep.mubr.bf16.mxu0 0
      %1977 = vmatmul.mubr.bf16.gmra.mxu0 %v1888
      %v1978 = vpop.f32.mrf.mxu0
      %v1979 = vadd.f32 0.0, %v1978
      %v1980 = vpop.f32.mrf.mxu0
      %v1981 = vpop.f32.mrf.mxu0
      %v1982 = vadd.f32 0.0, %v1981
      %v1983 = vpop.f32.mrf.mxu0
      %1984 = vmatprep.mubr.bf16.mxu0 0
      %1985 = vmatmul.mubr.bf16.gmra.mxu0 %v1891
      %v1986 = vpop.f32.mrf.mxu0
      %v1987 = vadd.f32 0.0, %v1986
      %v1988 = vpop.f32.mrf.mxu0
      %v1989 = vpop.f32.mrf.mxu0
      %v1990 = vadd.f32 0.0, %v1989
      %v1991 = vpop.f32.mrf.mxu0
      %1992 = vmatprep.mubr.bf16.mxu0 0
      %1993 = vmatmul.mubr.bf16.gmra.mxu0 %v1894
      %v1994 = vpop.f32.mrf.mxu0
      %v1995 = vadd.f32 0.0, %v1994
      %v1996 = vpop.f32.mrf.mxu0
      %v1997 = vpop.f32.mrf.mxu0
      %v1998 = vadd.f32 0.0, %v1997
      %v1999 = vpop.f32.mrf.mxu0
      %2000 = vmatprep.mubr.bf16.mxu0 0
      %2001 = vmatmul.mubr.bf16.gmra.mxu0 %v1897
      %v2002 = vpop.f32.mrf.mxu0
      %v2003 = vadd.f32 0.0, %v2002
      %v2004 = vpop.f32.mrf.mxu0
      %v2005 = vpop.f32.mrf.mxu0
      %v2006 = vadd.f32 0.0, %v2005
      %v2007 = vpop.f32.mrf.mxu0
      %2008 = vmatprep.mubr.bf16.mxu0 0
      %2009 = vmatmul.mubr.bf16.gmra.mxu0 %v1900
      %v2010 = vpop.f32.mrf.mxu0
      %v2011 = vadd.f32 0.0, %v2010
      %v2012 = vpop.f32.mrf.mxu0
      %v2013 = vpop.f32.mrf.mxu0
      %v2014 = vadd.f32 0.0, %v2013
      %v2015 = vpop.f32.mrf.mxu0
      %2016 = vmatprep.mubr.bf16.mxu0 0
      %2017 = vmatmul.mubr.bf16.gmra.mxu0 %v1903
      %v2018 = vpop.f32.mrf.mxu0
      %v2019 = vadd.f32 0.0, %v2018
      %v2020 = vpop.f32.mrf.mxu0
      %v2021 = vpop.f32.mrf.mxu0
      %v2022 = vadd.f32 0.0, %v2021
      %v2023 = vpop.f32.mrf.mxu0
      %2024 = vmatprep.mubr.bf16.mxu0 0
      %2025 = vmatmul.mubr.bf16.gmra.mxu0 %v1906
      %v2026 = vpop.f32.mrf.mxu0
      %v2027 = vadd.f32 0.0, %v2026
      %v2028 = vpop.f32.mrf.mxu0
      %v2029 = vpop.f32.mrf.mxu0
      %v2030 = vadd.f32 0.0, %v2029
      %v2031 = vpop.f32.mrf.mxu0
      %2032 = vmatprep.mubr.bf16.mxu0 0
      %2033 = vmatmul.mubr.bf16.gmra.mxu0 %v1909
      %v2034 = vpop.f32.mrf.mxu0
      %v2035 = vadd.f32 0.0, %v2034
      %v2036 = vpop.f32.mrf.mxu0
      %v2037 = vpop.f32.mrf.mxu0
      %v2038 = vadd.f32 0.0, %v2037
      %v2039 = vpop.f32.mrf.mxu0
      %2040 = vmatprep.mubr.bf16.mxu0 0
      %2041 = vmatmul.mubr.bf16.gmra.mxu0 %v1912
      %v2042 = vpop.f32.mrf.mxu0
      %v2043 = vadd.f32 0.0, %v2042
      %v2044 = vpop.f32.mrf.mxu0
      %v2045 = vpop.f32.mrf.mxu0
      %v2046 = vadd.f32 0.0, %v2045
      %v2047 = vpop.f32.mrf.mxu0
      %2048 = vmatprep.mubr.bf16.mxu0 0
      %2049 = vmatmul.mubr.bf16.gmra.mxu0 %v1915
      %v2050 = vpop.f32.mrf.mxu0
      %v2051 = vadd.f32 0.0, %v2050
      %v2052 = vpop.f32.mrf.mxu0
      %v2053 = vpop.f32.mrf.mxu0
      %v2054 = vadd.f32 0.0, %v2053
      %v2055 = vpop.f32.mrf.mxu0
      %2056 = vmatprep.mubr.bf16.mxu0 0
      %2057 = vmatmul.mubr.bf16.gmra.mxu0 %v1918
      %v2058 = vpop.f32.mrf.mxu0
      %v2059 = vadd.f32 0.0, %v2058
      %v2060 = vpop.f32.mrf.mxu0
      %v2061 = vpop.f32.mrf.mxu0
      %v2062 = vadd.f32 0.0, %v2061
      %v2063 = vpop.f32.mrf.mxu0
      %2064 = vmatprep.mubr.bf16.mxu0 0
      %2065 = vmatmul.mubr.bf16.gmra.mxu0 %v1921
      %v2066 = vpop.f32.mrf.mxu0
      %v2067 = vadd.f32 0.0, %v2066
      %v2068 = vpop.f32.mrf.mxu0
      %v2069 = vpop.f32.mrf.mxu0
      %v2070 = vadd.f32 0.0, %v2069
      %v2071 = vpop.f32.mrf.mxu0
      %2072 = vmatprep.mubr.bf16.mxu0 0
      %2073 = vmatmul.mubr.bf16.gmra.mxu0 %v1924
      %v2074 = vpop.f32.mrf.mxu0
      %v2075 = vadd.f32 0.0, %v2074
      %v2076 = vpop.f32.mrf.mxu0
      %v2077 = vpop.f32.mrf.mxu0
      %v2078 = vadd.f32 0.0, %v2077
      %v2079 = vpop.f32.mrf.mxu0
      %2080 = vmatprep.mubr.bf16.mxu0 0
      %2081 = vmatmul.mubr.bf16.gmra.mxu0 %v1927
      %v2082 = vpop.f32.mrf.mxu0
      %v2083 = vadd.f32 0.0, %v2082
      %v2084 = vpop.f32.mrf.mxu0
      %v2085 = vpop.f32.mrf.mxu0
      %v2086 = vadd.f32 0.0, %v2085
      %v2087 = vpop.f32.mrf.mxu0
      %2088 = vmatprep.mubr.bf16.mxu0 0
      %2089 = vmatmul.mubr.bf16.gmra.mxu0 %v1930
      %v2090 = vpop.f32.mrf.mxu0
      %v2091 = vadd.f32 0.0, %v2090
      %v2092 = vpop.f32.mrf.mxu0
      %v2093 = vpop.f32.mrf.mxu0
      %v2094 = vadd.f32 0.0, %v2093
      %v2095 = vpop.f32.mrf.mxu0
      %2096 = vmatprep.mubr.bf16.mxu0 0
      %2097 = vmatmul.mubr.bf16.gmra.mxu0 %v1933
      %v2098 = vpop.f32.mrf.mxu0
      %v2099 = vadd.f32 0.0, %v2098
      %v2100 = vpop.f32.mrf.mxu0
      %v2101 = vpop.f32.mrf.mxu0
      %v2102 = vadd.f32 0.0, %v2101
      %v2103 = vpop.f32.mrf.mxu0
      %2104 = vmatprep.mubr.bf16.mxu0 0
      %2105 = vmatmul.mubr.bf16.gmra.mxu0 %v1936
      %v2106 = vpop.f32.mrf.mxu0
      %v2107 = vadd.f32 0.0, %v2106
      %v2108 = vpop.f32.mrf.mxu0
      %v2109 = vpop.f32.mrf.mxu0
      %v2110 = vadd.f32 0.0, %v2109
      %v2111 = vpop.f32.mrf.mxu0
      %2112 = vmatprep.mubr.bf16.mxu0 0
      %2113 = vmatmul.mubr.bf16.gmra.mxu0 %v1939
      %v2114 = vpop.f32.mrf.mxu0
      %v2115 = vadd.f32 0.0, %v2114
      %v2116 = vpop.f32.mrf.mxu0
      %v2117 = vpop.f32.mrf.mxu0
      %v2118 = vadd.f32 0.0, %v2117
      %v2119 = vpop.f32.mrf.mxu0
      %2120 = vdwg.mxu0
      %v2121 = vadd.f32 %v1674, %v1979
      %v2122 = vadd.f32 %v1675, %v1982
      %v2123 = vadd.f32 %v1676, %v1987
      %v2124 = vadd.f32 %v1677, %v1990
      %v2125 = vadd.f32 %v1678, %v1995
      %v2126 = vadd.f32 %v1679, %v1998
      %v2127 = vadd.f32 %v1680, %v2003
      %v2128 = vadd.f32 %v1681, %v2006
      %v2129 = vadd.f32 %v1682, %v2011
      %v2130 = vadd.f32 %v1683, %v2014
      %v2131 = vadd.f32 %v1684, %v2019
      %v2132 = vadd.f32 %v1685, %v2022
      %v2133 = vadd.f32 %v1686, %v2027
      %v2134 = vadd.f32 %v1687, %v2030
      %v2135 = vadd.f32 %v1688, %v2035
      %v2136 = vadd.f32 %v1689, %v2038
      %v2137 = vadd.f32 %v1690, %v2043
      %v2138 = vadd.f32 %v1691, %v2046
      %v2139 = vadd.f32 %v1692, %v2051
      %v2140 = vadd.f32 %v1693, %v2054
      %v2141 = vadd.f32 %v1694, %v2059
      %v2142 = vadd.f32 %v1695, %v2062
      %v2143 = vadd.f32 %v1696, %v2067
      %v2144 = vadd.f32 %v1697, %v2070
      %v2145 = vadd.f32 %v1698, %v2075
      %v2146 = vadd.f32 %v1699, %v2078
      %v2147 = vadd.f32 %v1700, %v2083
      %v2148 = vadd.f32 %v1701, %v2086
      %v2149 = vadd.f32 %v1702, %v2091
      %v2150 = vadd.f32 %v1703, %v2094
      %v2151 = vadd.f32 %v1704, %v2099
      %v2152 = vadd.f32 %v1705, %v2102
      %v2153 = vadd.f32 %v1706, %v2107
      %v2154 = vadd.f32 %v1707, %v2110
      %v2155 = vadd.f32 %v1708, %v2115
      %v2156 = vadd.f32 %v1709, %v2118
      %v2157 = vld [vmem:[%s206 + $0x8] sm:$0xc]
      %s2158 = scalar_lea.vmem %s210, 10
      %v2159 = vld [vmem:[%s2158] sm:$0x3]
      %v2161 = vunpack.c.l.b16 %v2157
      %v2162 = vpack.c.b16 %v1348, %v2161
      %vm2163 = vcmask 1045504
      %v2164 = vrot.slane %v2162, 2
      %v2165 = vrot.slane %v1385, 2
      %v2166 = vsel %vm2163, %v2164, %v2165
      %v2167 = vrot.slane %v1386, 2
      %v2168 = vsel %vm2163, %v2165, %v2167
      %v2169 = vrot.slane %v1387, 2
      %v2170 = vsel %vm2163, %v2167, %v2169
      %v2171 = vrot.slane %v1388, 2
      %v2172 = vsel %vm2163, %v2169, %v2171
      %v2173 = vrot.slane %v1389, 2
      %v2174 = vsel %vm2163, %v2171, %v2173
      %v2175 = vrot.slane %v1390, 2
      %v2176 = vsel %vm2163, %v2173, %v2175
      %v2177 = vrot.slane %v1391, 2
      %v2178 = vsel %vm2163, %v2175, %v2177
      %v2179 = vrot.slane %v1392, 2
      %v2180 = vsel %vm2163, %v2177, %v2179
      %v2181 = vrot.slane %v1393, 2
      %v2182 = vsel %vm2163, %v2179, %v2181
      %v2183 = vrot.slane %v1394, 2
      %v2184 = vsel %vm2163, %v2181, %v2183
      %v2185 = vrot.slane %v1395, 2
      %v2186 = vsel %vm2163, %v2183, %v2185
      %v2187 = vrot.slane %v1396, 2
      %v2188 = vsel %vm2163, %v2185, %v2187
      %v2189 = vrot.slane %v1397, 2
      %v2190 = vsel %vm2163, %v2187, %v2189
      %v2191 = vrot.slane %v1398, 2
      %v2192 = vsel %vm2163, %v2189, %v2191
      %v2193 = vrot.slane %v1399, 2
      %v2194 = vsel %vm2163, %v2191, %v2193
      %v2195 = vrot.slane %v1400, 2
      %v2196 = vsel %vm2163, %v2193, %v2195
      %v2197 = vrot.slane %v1401, 2
      %v2198 = vsel %vm2163, %v2195, %v2197
      %v2199 = vrot.slane %v1715, 2
      %v2200 = vsel %vm2163, %v2197, %v2199
      %v2202 = vsel %vm505, %v2166, 0
      %v2205 = vsel %vm505, %v2168, 0
      %v2208 = vsel %vm505, %v2170, 0
      %v2211 = vsel %vm505, %v2172, 0
      %v2214 = vsel %vm505, %v2174, 0
      %v2217 = vsel %vm505, %v2176, 0
      %v2220 = vsel %vm505, %v2178, 0
      %v2223 = vsel %vm505, %v2180, 0
      %v2226 = vsel %vm505, %v2182, 0
      %v2229 = vsel %vm505, %v2184, 0
      %v2232 = vsel %vm505, %v2186, 0
      %v2235 = vsel %vm505, %v2188, 0
      %v2238 = vsel %vm505, %v2190, 0
      %v2241 = vsel %vm505, %v2192, 0
      %v2244 = vsel %vm505, %v2194, 0
      %v2247 = vsel %vm505, %v2196, 0
      %v2250 = vsel %vm505, %v2198, 0
      %v2253 = vsel %vm505, %v2200, 0
      %v2256 = vsel %vm560, %v2159, 0
      %2258 = vmatprep.subr.bf16.mxu0 0
      %2259 = vmatpush1.bf16.msra.mxu0 0
      %2260 = vmatprep.subr.bf16.mxu0 0
      %2261 = vmatpush1.bf16.msra.mxu0 0
      %2262 = vmatprep.subr.bf16.mxu0 0
      %2263 = vmatpush1.bf16.msra.mxu0 0
      %2264 = vmatprep.subr.bf16.mxu0 0
      %2265 = vmatpush1.bf16.msra.mxu0 0
      %2266 = vmatprep.subr.bf16.mxu0 0
      %2267 = vmatpush1.bf16.msra.mxu0 0
      %2268 = vmatprep.subr.bf16.mxu0 0
      %2269 = vmatpush1.bf16.msra.mxu0 0
      %2270 = vmatprep.subr.bf16.mxu0 0
      %2271 = vmatpush1.bf16.msra.mxu0 0
      %2272 = vmatprep.subr.bf16.mxu0 0
      %2273 = vmatpush1.bf16.msra.mxu0 %v2256
      %2274 = vmatprep.subr.bf16.mxu0 0
      %2275 = vmatpush2.bf16.msra.mxu0 0
      %2276 = vmatprep.subr.bf16.mxu0 0
      %2277 = vmatpush2.bf16.msra.mxu0 0
      %2278 = vmatprep.subr.bf16.mxu0 0
      %2279 = vmatpush2.bf16.msra.mxu0 0
      %2280 = vmatprep.subr.bf16.mxu0 0
      %2281 = vmatpush2.bf16.msra.mxu0 0
      %2282 = vmatprep.subr.bf16.mxu0 0
      %2283 = vmatpush2.bf16.msra.mxu0 0
      %2284 = vmatprep.subr.bf16.mxu0 0
      %2285 = vmatpush2.bf16.msra.mxu0 0
      %2286 = vmatprep.subr.bf16.mxu0 0
      %2287 = vmatpush2.bf16.msra.mxu0 0
      %2288 = vmatprep.subr.bf16.mxu0 0
      %2289 = vmatpush2.bf16.msra.mxu0 0
      %2290 = vmatprep.mubr.bf16.mxu0 0
      %2291 = vmatmul.mubr.bf16.gmra.mxu0 %v2202
      %v2292 = vpop.f32.mrf.mxu0
      %v2293 = vadd.f32 0.0, %v2292
      %v2294 = vpop.f32.mrf.mxu0
      %v2295 = vpop.f32.mrf.mxu0
      %v2296 = vadd.f32 0.0, %v2295
      %v2297 = vpop.f32.mrf.mxu0
      %2298 = vmatprep.mubr.bf16.mxu0 0
      %2299 = vmatmul.mubr.bf16.gmra.mxu0 %v2205
      %v2300 = vpop.f32.mrf.mxu0
      %v2301 = vadd.f32 0.0, %v2300
      %v2302 = vpop.f32.mrf.mxu0
      %v2303 = vpop.f32.mrf.mxu0
      %v2304 = vadd.f32 0.0, %v2303
      %v2305 = vpop.f32.mrf.mxu0
      %2306 = vmatprep.mubr.bf16.mxu0 0
      %2307 = vmatmul.mubr.bf16.gmra.mxu0 %v2208
      %v2308 = vpop.f32.mrf.mxu0
      %v2309 = vadd.f32 0.0, %v2308
      %v2310 = vpop.f32.mrf.mxu0
      %v2311 = vpop.f32.mrf.mxu0
      %v2312 = vadd.f32 0.0, %v2311
      %v2313 = vpop.f32.mrf.mxu0
      %2314 = vmatprep.mubr.bf16.mxu0 0
      %2315 = vmatmul.mubr.bf16.gmra.mxu0 %v2211
      %v2316 = vpop.f32.mrf.mxu0
      %v2317 = vadd.f32 0.0, %v2316
      %v2318 = vpop.f32.mrf.mxu0
      %v2319 = vpop.f32.mrf.mxu0
      %v2320 = vadd.f32 0.0, %v2319
      %v2321 = vpop.f32.mrf.mxu0
      %2322 = vmatprep.mubr.bf16.mxu0 0
      %2323 = vmatmul.mubr.bf16.gmra.mxu0 %v2214
      %v2324 = vpop.f32.mrf.mxu0
      %v2325 = vadd.f32 0.0, %v2324
      %v2326 = vpop.f32.mrf.mxu0
      %v2327 = vpop.f32.mrf.mxu0
      %v2328 = vadd.f32 0.0, %v2327
      %v2329 = vpop.f32.mrf.mxu0
      %2330 = vmatprep.mubr.bf16.mxu0 0
      %2331 = vmatmul.mubr.bf16.gmra.mxu0 %v2217
      %v2332 = vpop.f32.mrf.mxu0
      %v2333 = vadd.f32 0.0, %v2332
      %v2334 = vpop.f32.mrf.mxu0
      %v2335 = vpop.f32.mrf.mxu0
      %v2336 = vadd.f32 0.0, %v2335
      %v2337 = vpop.f32.mrf.mxu0
      %2338 = vmatprep.mubr.bf16.mxu0 0
      %2339 = vmatmul.mubr.bf16.gmra.mxu0 %v2220
      %v2340 = vpop.f32.mrf.mxu0
      %v2341 = vadd.f32 0.0, %v2340
      %v2342 = vpop.f32.mrf.mxu0
      %v2343 = vpop.f32.mrf.mxu0
      %v2344 = vadd.f32 0.0, %v2343
      %v2345 = vpop.f32.mrf.mxu0
      %2346 = vmatprep.mubr.bf16.mxu0 0
      %2347 = vmatmul.mubr.bf16.gmra.mxu0 %v2223
      %v2348 = vpop.f32.mrf.mxu0
      %v2349 = vadd.f32 0.0, %v2348
      %v2350 = vpop.f32.mrf.mxu0
      %v2351 = vpop.f32.mrf.mxu0
      %v2352 = vadd.f32 0.0, %v2351
      %v2353 = vpop.f32.mrf.mxu0
      %2354 = vmatprep.mubr.bf16.mxu0 0
      %2355 = vmatmul.mubr.bf16.gmra.mxu0 %v2226
      %v2356 = vpop.f32.mrf.mxu0
      %v2357 = vadd.f32 0.0, %v2356
      %v2358 = vpop.f32.mrf.mxu0
      %v2359 = vpop.f32.mrf.mxu0
      %v2360 = vadd.f32 0.0, %v2359
      %v2361 = vpop.f32.mrf.mxu0
      %2362 = vmatprep.mubr.bf16.mxu0 0
      %2363 = vmatmul.mubr.bf16.gmra.mxu0 %v2229
      %v2364 = vpop.f32.mrf.mxu0
      %v2365 = vadd.f32 0.0, %v2364
      %v2366 = vpop.f32.mrf.mxu0
      %v2367 = vpop.f32.mrf.mxu0
      %v2368 = vadd.f32 0.0, %v2367
      %v2369 = vpop.f32.mrf.mxu0
      %2370 = vmatprep.mubr.bf16.mxu0 0
      %2371 = vmatmul.mubr.bf16.gmra.mxu0 %v2232
      %v2372 = vpop.f32.mrf.mxu0
      %v2373 = vadd.f32 0.0, %v2372
      %v2374 = vpop.f32.mrf.mxu0
      %v2375 = vpop.f32.mrf.mxu0
      %v2376 = vadd.f32 0.0, %v2375
      %v2377 = vpop.f32.mrf.mxu0
      %2378 = vmatprep.mubr.bf16.mxu0 0
      %2379 = vmatmul.mubr.bf16.gmra.mxu0 %v2235
      %v2380 = vpop.f32.mrf.mxu0
      %v2381 = vadd.f32 0.0, %v2380
      %v2382 = vpop.f32.mrf.mxu0
      %v2383 = vpop.f32.mrf.mxu0
      %v2384 = vadd.f32 0.0, %v2383
      %v2385 = vpop.f32.mrf.mxu0
      %2386 = vmatprep.mubr.bf16.mxu0 0
      %2387 = vmatmul.mubr.bf16.gmra.mxu0 %v2238
      %v2388 = vpop.f32.mrf.mxu0
      %v2389 = vadd.f32 0.0, %v2388
      %v2390 = vpop.f32.mrf.mxu0
      %v2391 = vpop.f32.mrf.mxu0
      %v2392 = vadd.f32 0.0, %v2391
      %v2393 = vpop.f32.mrf.mxu0
      %2394 = vmatprep.mubr.bf16.mxu0 0
      %2395 = vmatmul.mubr.bf16.gmra.mxu0 %v2241
      %v2396 = vpop.f32.mrf.mxu0
      %v2397 = vadd.f32 0.0, %v2396
      %v2398 = vpop.f32.mrf.mxu0
      %v2399 = vpop.f32.mrf.mxu0
      %v2400 = vadd.f32 0.0, %v2399
      %v2401 = vpop.f32.mrf.mxu0
      %2402 = vmatprep.mubr.bf16.mxu0 0
      %2403 = vmatmul.mubr.bf16.gmra.mxu0 %v2244
      %v2404 = vpop.f32.mrf.mxu0
      %v2405 = vadd.f32 0.0, %v2404
      %v2406 = vpop.f32.mrf.mxu0
      %v2407 = vpop.f32.mrf.mxu0
      %v2408 = vadd.f32 0.0, %v2407
      %v2409 = vpop.f32.mrf.mxu0
      %2410 = vmatprep.mubr.bf16.mxu0 0
      %2411 = vmatmul.mubr.bf16.gmra.mxu0 %v2247
      %v2412 = vpop.f32.mrf.mxu0
      %v2413 = vadd.f32 0.0, %v2412
      %v2414 = vpop.f32.mrf.mxu0
      %v2415 = vpop.f32.mrf.mxu0
      %v2416 = vadd.f32 0.0, %v2415
      %v2417 = vpop.f32.mrf.mxu0
      %2418 = vmatprep.mubr.bf16.mxu0 0
      %2419 = vmatmul.mubr.bf16.gmra.mxu0 %v2250
      %v2420 = vpop.f32.mrf.mxu0
      %v2421 = vadd.f32 0.0, %v2420
      %v2422 = vpop.f32.mrf.mxu0
      %v2423 = vpop.f32.mrf.mxu0
      %v2424 = vadd.f32 0.0, %v2423
      %v2425 = vpop.f32.mrf.mxu0
      %2426 = vmatprep.mubr.bf16.mxu0 0
      %2427 = vmatmul.mubr.bf16.gmra.mxu0 %v2253
      %v2428 = vpop.f32.mrf.mxu0
      %v2429 = vadd.f32 0.0, %v2428
      %v2430 = vpop.f32.mrf.mxu0
      %v2431 = vpop.f32.mrf.mxu0
      %v2432 = vadd.f32 0.0, %v2431
      %v2433 = vpop.f32.mrf.mxu0
      %2434 = vdwg.mxu0
      %v2435 = vadd.f32 %v2121, %v2293
      %v2436 = vadd.f32 %v2122, %v2296
      %v2437 = vadd.f32 %v2123, %v2301
      %v2438 = vadd.f32 %v2124, %v2304
      %v2439 = vadd.f32 %v2125, %v2309
      %v2440 = vadd.f32 %v2126, %v2312
      %v2441 = vadd.f32 %v2127, %v2317
      %v2442 = vadd.f32 %v2128, %v2320
      %v2443 = vadd.f32 %v2129, %v2325
      %v2444 = vadd.f32 %v2130, %v2328
      %v2445 = vadd.f32 %v2131, %v2333
      %v2446 = vadd.f32 %v2132, %v2336
      %v2447 = vadd.f32 %v2133, %v2341
      %v2448 = vadd.f32 %v2134, %v2344
      %v2449 = vadd.f32 %v2135, %v2349
      %v2450 = vadd.f32 %v2136, %v2352
      %v2451 = vadd.f32 %v2137, %v2357
      %v2452 = vadd.f32 %v2138, %v2360
      %v2453 = vadd.f32 %v2139, %v2365
      %v2454 = vadd.f32 %v2140, %v2368
      %v2455 = vadd.f32 %v2141, %v2373
      %v2456 = vadd.f32 %v2142, %v2376
      %v2457 = vadd.f32 %v2143, %v2381
      %v2458 = vadd.f32 %v2144, %v2384
      %v2459 = vadd.f32 %v2145, %v2389
      %v2460 = vadd.f32 %v2146, %v2392
      %v2461 = vadd.f32 %v2147, %v2397
      %v2462 = vadd.f32 %v2148, %v2400
      %v2463 = vadd.f32 %v2149, %v2405
      %v2464 = vadd.f32 %v2150, %v2408
      %v2465 = vadd.f32 %v2151, %v2413
      %v2466 = vadd.f32 %v2152, %v2416
      %v2467 = vadd.f32 %v2153, %v2421
      %v2468 = vadd.f32 %v2154, %v2424
      %v2469 = vadd.f32 %v2155, %v2429
      %v2470 = vadd.f32 %v2156, %v2432
      %v2471 = vld [vmem:[%s206 + $0x10] sm:$0xc]
      %v2472 = vld [vmem:[%s206 + $0x14] sm:$0xf]
      %v2473 = vld [vmem:[%s206 + $0x18] sm:$0xf]
      %v2474 = vld [vmem:[%s206 + $0x1c] sm:$0xf]
      %v2475 = vld [vmem:[%s206 + $0x20] sm:$0xf]
      %v2476 = vld [vmem:[%s206 + $0x24] sm:$0xf]
      %v2477 = vld [vmem:[%s206 + $0x28] sm:$0xf]
      %v2478 = vld [vmem:[%s206 + $0x2c] sm:$0xf]
      %v2479 = vld [vmem:[%s206 + $0x30] sm:$0xf]
      %v2480 = vld [vmem:[%s206 + $0x34] sm:$0xf]
      %v2481 = vld [vmem:[%s206 + $0x38] sm:$0xf]
      %v2482 = vld [vmem:[%s206 + $0x3c] sm:$0xf]
      %v2483 = vld [vmem:[%s206 + $0x40] sm:$0xf]
      %v2484 = vld [vmem:[%s206 + $0x44] sm:$0xf]
      %v2485 = vld [vmem:[%s206 + $0x48] sm:$0xf]
      %v2486 = vld [vmem:[%s206 + $0x4c] sm:$0xf]
      %v2487 = vld [vmem:[%s206 + $0x50] sm:$0xf]
      %v2488 = vld [vmem:[%s206 + $0x54] sm:$0xf]
      %v2489 = vld [vmem:[%s206 + $0x58] sm:$0xf]
      %v2490 = vld [vmem:[%s206 + $0x5c] sm:$0xf]
      %v2491 = vld [vmem:[%s206 + $0x60] sm:$0xf]
      %v2492 = vld [vmem:[%s206 + $0x64] sm:$0xf]
      %v2493 = vld [vmem:[%s206 + $0x68] sm:$0xf]
      %v2494 = vld [vmem:[%s206 + $0x6c] sm:$0xf]
      %v2495 = vld [vmem:[%s206 + $0x70] sm:$0xf]
      %v2496 = vld [vmem:[%s206 + $0x74] sm:$0xf]
      %v2497 = vld [vmem:[%s206 + $0x78] sm:$0xf]
      %v2498 = vld [vmem:[%s206 + $0x7c] sm:$0xf]
      %v2499 = vld [vmem:[%s206 + $0x80] sm:$0xf]
      %v2500 = vld [vmem:[%s206 + $0x84] sm:$0xf]
      %v2501 = vld [vmem:[%s206 + $0x88] sm:$0xf]
      %v2502 = vld [vmem:[%s206 + $0x8c] sm:$0xf]
      %v2503 = vld [vmem:[%s206 + $0x90] sm:$0xf]
      %v2504 = vld [vmem:[%s206 + $0x94] sm:$0xf]
      %v2505 = vld [vmem:[%s206 + $0x98] sm:$0xf]
      %v2506 = vld [vmem:[%s206 + $0x9c] sm:$0xf]
      %v2507 = vld [vmem:[%s206 + $0xa0] sm:$0x3]
      %s2508 = scalar_lea.vmem %s210, 12
      %v2509 = vld [vmem:[%s2508] sm:$0x3]
      %v2547 = vunpack.c.l.b16 %v2471
      %v2548 = vunpack.c.l.b16 %v2472
      %v2549 = vunpack.c.l.b16 %v2473
      %v2550 = vunpack.c.l.b16 %v2474
      %v2551 = vunpack.c.l.b16 %v2475
      %v2552 = vunpack.c.l.b16 %v2476
      %v2553 = vunpack.c.l.b16 %v2477
      %v2554 = vunpack.c.l.b16 %v2478
      %v2555 = vunpack.c.l.b16 %v2479
      %v2556 = vunpack.c.l.b16 %v2480
      %v2557 = vunpack.c.l.b16 %v2481
      %v2558 = vunpack.c.l.b16 %v2482
      %v2559 = vunpack.c.l.b16 %v2483
      %v2560 = vunpack.c.l.b16 %v2484
      %v2561 = vunpack.c.l.b16 %v2485
      %v2562 = vunpack.c.l.b16 %v2486
      %v2563 = vunpack.c.l.b16 %v2487
      %v2564 = vunpack.c.l.b16 %v2488
      %v2565 = vunpack.c.l.b16 %v2489
      %v2566 = vunpack.c.l.b16 %v2490
      %v2567 = vunpack.c.l.b16 %v2491
      %v2568 = vunpack.c.l.b16 %v2492
      %v2569 = vunpack.c.l.b16 %v2493
      %v2570 = vunpack.c.l.b16 %v2494
      %v2571 = vunpack.c.l.b16 %v2495
      %v2572 = vunpack.c.l.b16 %v2496
      %v2573 = vunpack.c.l.b16 %v2497
      %v2574 = vunpack.c.l.b16 %v2498
      %v2575 = vunpack.c.l.b16 %v2499
      %v2576 = vunpack.c.l.b16 %v2500
      %v2577 = vunpack.c.l.b16 %v2501
      %v2578 = vunpack.c.l.b16 %v2502
      %v2579 = vunpack.c.l.b16 %v2503
      %v2580 = vunpack.c.l.b16 %v2504
      %v2581 = vunpack.c.l.b16 %v2505
      %v2582 = vunpack.c.l.b16 %v2506
      %v2583 = vunpack.c.l.b16 %v2507
      %v2584 = vpack.c.b16 %v2548, %v2547
      %v2585 = vpack.c.b16 %v2550, %v2549
      %v2586 = vpack.c.b16 %v2552, %v2551
      %v2587 = vpack.c.b16 %v2554, %v2553
      %v2588 = vpack.c.b16 %v2556, %v2555
      %v2589 = vpack.c.b16 %v2558, %v2557
      %v2590 = vpack.c.b16 %v2560, %v2559
      %v2591 = vpack.c.b16 %v2562, %v2561
      %v2592 = vpack.c.b16 %v2564, %v2563
      %v2593 = vpack.c.b16 %v2566, %v2565
      %v2594 = vpack.c.b16 %v2568, %v2567
      %v2595 = vpack.c.b16 %v2570, %v2569
      %v2596 = vpack.c.b16 %v2572, %v2571
      %v2597 = vpack.c.b16 %v2574, %v2573
      %v2598 = vpack.c.b16 %v2576, %v2575
      %v2599 = vpack.c.b16 %v2578, %v2577
      %v2600 = vpack.c.b16 %v2580, %v2579
      %v2601 = vpack.c.b16 %v2582, %v2581
      %v2602 = vpack.c.b16 %v2583, %v2583
      %v2603 = vrot.slane %v2584, 2
      %v2604 = vrot.slane %v2585, 2
      %v2605 = vsel %vm2163, %v2603, %v2604
      %v2606 = vrot.slane %v2586, 2
      %v2607 = vsel %vm2163, %v2604, %v2606
      %v2608 = vrot.slane %v2587, 2
      %v2609 = vsel %vm2163, %v2606, %v2608
      %v2610 = vrot.slane %v2588, 2
      %v2611 = vsel %vm2163, %v2608, %v2610
      %v2612 = vrot.slane %v2589, 2
      %v2613 = vsel %vm2163, %v2610, %v2612
      %v2614 = vrot.slane %v2590, 2
      %v2615 = vsel %vm2163, %v2612, %v2614
      %v2616 = vrot.slane %v2591, 2
      %v2617 = vsel %vm2163, %v2614, %v2616
      %v2618 = vrot.slane %v2592, 2
      %v2619 = vsel %vm2163, %v2616, %v2618
      %v2620 = vrot.slane %v2593, 2
      %v2621 = vsel %vm2163, %v2618, %v2620
      %v2622 = vrot.slane %v2594, 2
      %v2623 = vsel %vm2163, %v2620, %v2622
      %v2624 = vrot.slane %v2595, 2
      %v2625 = vsel %vm2163, %v2622, %v2624
      %v2626 = vrot.slane %v2596, 2
      %v2627 = vsel %vm2163, %v2624, %v2626
      %v2628 = vrot.slane %v2597, 2
      %v2629 = vsel %vm2163, %v2626, %v2628
      %v2630 = vrot.slane %v2598, 2
      %v2631 = vsel %vm2163, %v2628, %v2630
      %v2632 = vrot.slane %v2599, 2
      %v2633 = vsel %vm2163, %v2630, %v2632
      %v2634 = vrot.slane %v2600, 2
      %v2635 = vsel %vm2163, %v2632, %v2634
      %v2636 = vrot.slane %v2601, 2
      %v2637 = vsel %vm2163, %v2634, %v2636
      %v2638 = vrot.slane %v2602, 2
      %v2639 = vsel %vm2163, %v2636, %v2638
      %v2641 = vsel %vm505, %v2605, 0
      %v2644 = vsel %vm505, %v2607, 0
      %v2647 = vsel %vm505, %v2609, 0
      %v2650 = vsel %vm505, %v2611, 0
      %v2653 = vsel %vm505, %v2613, 0
      %v2656 = vsel %vm505, %v2615, 0
      %v2659 = vsel %vm505, %v2617, 0
      %v2662 = vsel %vm505, %v2619, 0
      %v2665 = vsel %vm505, %v2621, 0
      %v2668 = vsel %vm505, %v2623, 0
      %v2671 = vsel %vm505, %v2625, 0
      %v2674 = vsel %vm505, %v2627, 0
      %v2677 = vsel %vm505, %v2629, 0
      %v2680 = vsel %vm505, %v2631, 0
      %v2683 = vsel %vm505, %v2633, 0
      %v2686 = vsel %vm505, %v2635, 0
      %v2689 = vsel %vm505, %v2637, 0
      %v2692 = vsel %vm505, %v2639, 0
      %v2695 = vsel %vm560, %v2509, 0
      %2697 = vmatprep.subr.bf16.mxu0 0
      %2698 = vmatpush1.bf16.msra.mxu0 0
      %2699 = vmatprep.subr.bf16.mxu0 0
      %2700 = vmatpush1.bf16.msra.mxu0 0
      %2701 = vmatprep.subr.bf16.mxu0 0
      %2702 = vmatpush1.bf16.msra.mxu0 0
      %2703 = vmatprep.subr.bf16.mxu0 0
      %2704 = vmatpush1.bf16.msra.mxu0 0
      %2705 = vmatprep.subr.bf16.mxu0 0
      %2706 = vmatpush1.bf16.msra.mxu0 0
      %2707 = vmatprep.subr.bf16.mxu0 0
      %2708 = vmatpush1.bf16.msra.mxu0 0
      %2709 = vmatprep.subr.bf16.mxu0 0
      %2710 = vmatpush1.bf16.msra.mxu0 0
      %2711 = vmatprep.subr.bf16.mxu0 0
      %2712 = vmatpush1.bf16.msra.mxu0 %v2695
      %2713 = vmatprep.subr.bf16.mxu0 0
      %2714 = vmatpush2.bf16.msra.mxu0 0
      %2715 = vmatprep.subr.bf16.mxu0 0
      %2716 = vmatpush2.bf16.msra.mxu0 0
      %2717 = vmatprep.subr.bf16.mxu0 0
      %2718 = vmatpush2.bf16.msra.mxu0 0
      %2719 = vmatprep.subr.bf16.mxu0 0
      %2720 = vmatpush2.bf16.msra.mxu0 0
      %2721 = vmatprep.subr.bf16.mxu0 0
      %2722 = vmatpush2.bf16.msra.mxu0 0
      %2723 = vmatprep.subr.bf16.mxu0 0
      %2724 = vmatpush2.bf16.msra.mxu0 0
      %2725 = vmatprep.subr.bf16.mxu0 0
      %2726 = vmatpush2.bf16.msra.mxu0 0
      %2727 = vmatprep.subr.bf16.mxu0 0
      %2728 = vmatpush2.bf16.msra.mxu0 0
      %2729 = vmatprep.mubr.bf16.mxu0 0
      %2730 = vmatmul.mubr.bf16.gmra.mxu0 %v2641
      %v2731 = vpop.f32.mrf.mxu0
      %v2732 = vadd.f32 0.0, %v2731
      %v2733 = vpop.f32.mrf.mxu0
      %v2734 = vpop.f32.mrf.mxu0
      %v2735 = vadd.f32 0.0, %v2734
      %v2736 = vpop.f32.mrf.mxu0
      %2737 = vmatprep.mubr.bf16.mxu0 0
      %2738 = vmatmul.mubr.bf16.gmra.mxu0 %v2644
      %v2739 = vpop.f32.mrf.mxu0
      %v2740 = vadd.f32 0.0, %v2739
      %v2741 = vpop.f32.mrf.mxu0
      %v2742 = vpop.f32.mrf.mxu0
      %v2743 = vadd.f32 0.0, %v2742
      %v2744 = vpop.f32.mrf.mxu0
      %2745 = vmatprep.mubr.bf16.mxu0 0
      %2746 = vmatmul.mubr.bf16.gmra.mxu0 %v2647
      %v2747 = vpop.f32.mrf.mxu0
      %v2748 = vadd.f32 0.0, %v2747
      %v2749 = vpop.f32.mrf.mxu0
      %v2750 = vpop.f32.mrf.mxu0
      %v2751 = vadd.f32 0.0, %v2750
      %v2752 = vpop.f32.mrf.mxu0
      %2753 = vmatprep.mubr.bf16.mxu0 0
      %2754 = vmatmul.mubr.bf16.gmra.mxu0 %v2650
      %v2755 = vpop.f32.mrf.mxu0
      %v2756 = vadd.f32 0.0, %v2755
      %v2757 = vpop.f32.mrf.mxu0
      %v2758 = vpop.f32.mrf.mxu0
      %v2759 = vadd.f32 0.0, %v2758
      %v2760 = vpop.f32.mrf.mxu0
      %2761 = vmatprep.mubr.bf16.mxu0 0
      %2762 = vmatmul.mubr.bf16.gmra.mxu0 %v2653
      %v2763 = vpop.f32.mrf.mxu0
      %v2764 = vadd.f32 0.0, %v2763
      %v2765 = vpop.f32.mrf.mxu0
      %v2766 = vpop.f32.mrf.mxu0
      %v2767 = vadd.f32 0.0, %v2766
      %v2768 = vpop.f32.mrf.mxu0
      %2769 = vmatprep.mubr.bf16.mxu0 0
      %2770 = vmatmul.mubr.bf16.gmra.mxu0 %v2656
      %v2771 = vpop.f32.mrf.mxu0
      %v2772 = vadd.f32 0.0, %v2771
      %v2773 = vpop.f32.mrf.mxu0
      %v2774 = vpop.f32.mrf.mxu0
      %v2775 = vadd.f32 0.0, %v2774
      %v2776 = vpop.f32.mrf.mxu0
      %2777 = vmatprep.mubr.bf16.mxu0 0
      %2778 = vmatmul.mubr.bf16.gmra.mxu0 %v2659
      %v2779 = vpop.f32.mrf.mxu0
      %v2780 = vadd.f32 0.0, %v2779
      %v2781 = vpop.f32.mrf.mxu0
      %v2782 = vpop.f32.mrf.mxu0
      %v2783 = vadd.f32 0.0, %v2782
      %v2784 = vpop.f32.mrf.mxu0
      %2785 = vmatprep.mubr.bf16.mxu0 0
      %2786 = vmatmul.mubr.bf16.gmra.mxu0 %v2662
      %v2787 = vpop.f32.mrf.mxu0
      %v2788 = vadd.f32 0.0, %v2787
      %v2789 = vpop.f32.mrf.mxu0
      %v2790 = vpop.f32.mrf.mxu0
      %v2791 = vadd.f32 0.0, %v2790
      %v2792 = vpop.f32.mrf.mxu0
      %2793 = vmatprep.mubr.bf16.mxu0 0
      %2794 = vmatmul.mubr.bf16.gmra.mxu0 %v2665
      %v2795 = vpop.f32.mrf.mxu0
      %v2796 = vadd.f32 0.0, %v2795
      %v2797 = vpop.f32.mrf.mxu0
      %v2798 = vpop.f32.mrf.mxu0
      %v2799 = vadd.f32 0.0, %v2798
      %v2800 = vpop.f32.mrf.mxu0
      %2801 = vmatprep.mubr.bf16.mxu0 0
      %2802 = vmatmul.mubr.bf16.gmra.mxu0 %v2668
      %v2803 = vpop.f32.mrf.mxu0
      %v2804 = vadd.f32 0.0, %v2803
      %v2805 = vpop.f32.mrf.mxu0
      %v2806 = vpop.f32.mrf.mxu0
      %v2807 = vadd.f32 0.0, %v2806
      %v2808 = vpop.f32.mrf.mxu0
      %2809 = vmatprep.mubr.bf16.mxu0 0
      %2810 = vmatmul.mubr.bf16.gmra.mxu0 %v2671
      %v2811 = vpop.f32.mrf.mxu0
      %v2812 = vadd.f32 0.0, %v2811
      %v2813 = vpop.f32.mrf.mxu0
      %v2814 = vpop.f32.mrf.mxu0
      %v2815 = vadd.f32 0.0, %v2814
      %v2816 = vpop.f32.mrf.mxu0
      %2817 = vmatprep.mubr.bf16.mxu0 0
      %2818 = vmatmul.mubr.bf16.gmra.mxu0 %v2674
      %v2819 = vpop.f32.mrf.mxu0
      %v2820 = vadd.f32 0.0, %v2819
      %v2821 = vpop.f32.mrf.mxu0
      %v2822 = vpop.f32.mrf.mxu0
      %v2823 = vadd.f32 0.0, %v2822
      %v2824 = vpop.f32.mrf.mxu0
      %2825 = vmatprep.mubr.bf16.mxu0 0
      %2826 = vmatmul.mubr.bf16.gmra.mxu0 %v2677
      %v2827 = vpop.f32.mrf.mxu0
      %v2828 = vadd.f32 0.0, %v2827
      %v2829 = vpop.f32.mrf.mxu0
      %v2830 = vpop.f32.mrf.mxu0
      %v2831 = vadd.f32 0.0, %v2830
      %v2832 = vpop.f32.mrf.mxu0
      %2833 = vmatprep.mubr.bf16.mxu0 0
      %2834 = vmatmul.mubr.bf16.gmra.mxu0 %v2680
      %v2835 = vpop.f32.mrf.mxu0
      %v2836 = vadd.f32 0.0, %v2835
      %v2837 = vpop.f32.mrf.mxu0
      %v2838 = vpop.f32.mrf.mxu0
      %v2839 = vadd.f32 0.0, %v2838
      %v2840 = vpop.f32.mrf.mxu0
      %2841 = vmatprep.mubr.bf16.mxu0 0
      %2842 = vmatmul.mubr.bf16.gmra.mxu0 %v2683
      %v2843 = vpop.f32.mrf.mxu0
      %v2844 = vadd.f32 0.0, %v2843
      %v2845 = vpop.f32.mrf.mxu0
      %v2846 = vpop.f32.mrf.mxu0
      %v2847 = vadd.f32 0.0, %v2846
      %v2848 = vpop.f32.mrf.mxu0
      %2849 = vmatprep.mubr.bf16.mxu0 0
      %2850 = vmatmul.mubr.bf16.gmra.mxu0 %v2686
      %v2851 = vpop.f32.mrf.mxu0
      %v2852 = vadd.f32 0.0, %v2851
      %v2853 = vpop.f32.mrf.mxu0
      %v2854 = vpop.f32.mrf.mxu0
      %v2855 = vadd.f32 0.0, %v2854
      %v2856 = vpop.f32.mrf.mxu0
      %2857 = vmatprep.mubr.bf16.mxu0 0
      %2858 = vmatmul.mubr.bf16.gmra.mxu0 %v2689
      %v2859 = vpop.f32.mrf.mxu0
      %v2860 = vadd.f32 0.0, %v2859
      %v2861 = vpop.f32.mrf.mxu0
      %v2862 = vpop.f32.mrf.mxu0
      %v2863 = vadd.f32 0.0, %v2862
      %v2864 = vpop.f32.mrf.mxu0
      %2865 = vmatprep.mubr.bf16.mxu0 0
      %2866 = vmatmul.mubr.bf16.gmra.mxu0 %v2692
      %v2867 = vpop.f32.mrf.mxu0
      %v2868 = vadd.f32 0.0, %v2867
      %v2869 = vpop.f32.mrf.mxu0
      %v2870 = vpop.f32.mrf.mxu0
      %v2871 = vadd.f32 0.0, %v2870
      %v2872 = vpop.f32.mrf.mxu0
      %2873 = vdwg.mxu0
      %v2874 = vadd.f32 %v2435, %v2732
      %v2875 = vadd.f32 %v2436, %v2735
      %v2876 = vadd.f32 %v2437, %v2740
      %v2877 = vadd.f32 %v2438, %v2743
      %v2878 = vadd.f32 %v2439, %v2748
      %v2879 = vadd.f32 %v2440, %v2751
      %v2880 = vadd.f32 %v2441, %v2756
      %v2881 = vadd.f32 %v2442, %v2759
      %v2882 = vadd.f32 %v2443, %v2764
      %v2883 = vadd.f32 %v2444, %v2767
      %v2884 = vadd.f32 %v2445, %v2772
      %v2885 = vadd.f32 %v2446, %v2775
      %v2886 = vadd.f32 %v2447, %v2780
      %v2887 = vadd.f32 %v2448, %v2783
      %v2888 = vadd.f32 %v2449, %v2788
      %v2889 = vadd.f32 %v2450, %v2791
      %v2890 = vadd.f32 %v2451, %v2796
      %v2891 = vadd.f32 %v2452, %v2799
      %v2892 = vadd.f32 %v2453, %v2804
      %v2893 = vadd.f32 %v2454, %v2807
      %v2894 = vadd.f32 %v2455, %v2812
      %v2895 = vadd.f32 %v2456, %v2815
      %v2896 = vadd.f32 %v2457, %v2820
      %v2897 = vadd.f32 %v2458, %v2823
      %v2898 = vadd.f32 %v2459, %v2828
      %v2899 = vadd.f32 %v2460, %v2831
      %v2900 = vadd.f32 %v2461, %v2836
      %v2901 = vadd.f32 %v2462, %v2839
      %v2902 = vadd.f32 %v2463, %v2844
      %v2903 = vadd.f32 %v2464, %v2847
      %v2904 = vadd.f32 %v2465, %v2852
      %v2905 = vadd.f32 %v2466, %v2855
      %v2906 = vadd.f32 %v2467, %v2860
      %v2907 = vadd.f32 %v2468, %v2863
      %v2908 = vadd.f32 %v2469, %v2868
      %v2909 = vadd.f32 %v2470, %v2871
      %v2910 = vld [vmem:[%s206 + $0xa0] sm:$0x7]
      %s2911 = scalar_lea.vmem %s210, 14
      %v2912 = vld [vmem:[%s2911] sm:$0x3]
      %v2914 = vunpack.c.l.b16 %v2910
      %v2915 = vpack.c.b16 %v2914, %v2914
      %vm2916 = vsmask.f32 5376
      %v2918 = vshrl.u32 %v2584, 16
      %v2920 = vrot.slane %v2918, 2
      %v2921 = vshll.u32 %v2584, 16
      %v2923 = vrot.slane %v2921, 3
      %v2924 = vor.u32 %v2920, %v2923
      %v2926 = vshrl.u32 %v2585, 16
      %v2928 = vrot.slane %v2926, 2
      %v2929 = vshll.u32 %v2585, 16
      %v2931 = vrot.slane %v2929, 3
      %v2932 = vor.u32 %v2928, %v2931
      %v2933 = vsel %vm2916, %v2924, %v2932
      %v2935 = vshrl.u32 %v2586, 16
      %v2937 = vrot.slane %v2935, 2
      %v2938 = vshll.u32 %v2586, 16
      %v2940 = vrot.slane %v2938, 3
      %v2941 = vor.u32 %v2937, %v2940
      %v2942 = vsel %vm2916, %v2932, %v2941
      %v2944 = vshrl.u32 %v2587, 16
      %v2946 = vrot.slane %v2944, 2
      %v2947 = vshll.u32 %v2587, 16
      %v2949 = vrot.slane %v2947, 3
      %v2950 = vor.u32 %v2946, %v2949
      %v2951 = vsel %vm2916, %v2941, %v2950
      %v2953 = vshrl.u32 %v2588, 16
      %v2955 = vrot.slane %v2953, 2
      %v2956 = vshll.u32 %v2588, 16
      %v2958 = vrot.slane %v2956, 3
      %v2959 = vor.u32 %v2955, %v2958
      %v2960 = vsel %vm2916, %v2950, %v2959
      %v2962 = vshrl.u32 %v2589, 16
      %v2964 = vrot.slane %v2962, 2
      %v2965 = vshll.u32 %v2589, 16
      %v2967 = vrot.slane %v2965, 3
      %v2968 = vor.u32 %v2964, %v2967
      %v2969 = vsel %vm2916, %v2959, %v2968
      %v2971 = vshrl.u32 %v2590, 16
      %v2973 = vrot.slane %v2971, 2
      %v2974 = vshll.u32 %v2590, 16
      %v2976 = vrot.slane %v2974, 3
      %v2977 = vor.u32 %v2973, %v2976
      %v2978 = vsel %vm2916, %v2968, %v2977
      %v2980 = vshrl.u32 %v2591, 16
      %v2982 = vrot.slane %v2980, 2
      %v2983 = vshll.u32 %v2591, 16
      %v2985 = vrot.slane %v2983, 3
      %v2986 = vor.u32 %v2982, %v2985
      %v2987 = vsel %vm2916, %v2977, %v2986
      %v2989 = vshrl.u32 %v2592, 16
      %v2991 = vrot.slane %v2989, 2
      %v2992 = vshll.u32 %v2592, 16
      %v2994 = vrot.slane %v2992, 3
      %v2995 = vor.u32 %v2991, %v2994
      %v2996 = vsel %vm2916, %v2986, %v2995
      %v2998 = vshrl.u32 %v2593, 16
      %v3000 = vrot.slane %v2998, 2
      %v3001 = vshll.u32 %v2593, 16
      %v3003 = vrot.slane %v3001, 3
      %v3004 = vor.u32 %v3000, %v3003
      %v3005 = vsel %vm2916, %v2995, %v3004
      %v3007 = vshrl.u32 %v2594, 16
      %v3009 = vrot.slane %v3007, 2
      %v3010 = vshll.u32 %v2594, 16
      %v3012 = vrot.slane %v3010, 3
      %v3013 = vor.u32 %v3009, %v3012
      %v3014 = vsel %vm2916, %v3004, %v3013
      %v3016 = vshrl.u32 %v2595, 16
      %v3018 = vrot.slane %v3016, 2
      %v3019 = vshll.u32 %v2595, 16
      %v3021 = vrot.slane %v3019, 3
      %v3022 = vor.u32 %v3018, %v3021
      %v3023 = vsel %vm2916, %v3013, %v3022
      %v3025 = vshrl.u32 %v2596, 16
      %v3027 = vrot.slane %v3025, 2
      %v3028 = vshll.u32 %v2596, 16
      %v3030 = vrot.slane %v3028, 3
      %v3031 = vor.u32 %v3027, %v3030
      %v3032 = vsel %vm2916, %v3022, %v3031
      %v3034 = vshrl.u32 %v2597, 16
      %v3036 = vrot.slane %v3034, 2
      %v3037 = vshll.u32 %v2597, 16
      %v3039 = vrot.slane %v3037, 3
      %v3040 = vor.u32 %v3036, %v3039
      %v3041 = vsel %vm2916, %v3031, %v3040
      %v3043 = vshrl.u32 %v2598, 16
      %v3045 = vrot.slane %v3043, 2
      %v3046 = vshll.u32 %v2598, 16
      %v3048 = vrot.slane %v3046, 3
      %v3049 = vor.u32 %v3045, %v3048
      %v3050 = vsel %vm2916, %v3040, %v3049
      %v3052 = vshrl.u32 %v2599, 16
      %v3054 = vrot.slane %v3052, 2
      %v3055 = vshll.u32 %v2599, 16
      %v3057 = vrot.slane %v3055, 3
      %v3058 = vor.u32 %v3054, %v3057
      %v3059 = vsel %vm2916, %v3049, %v3058
      %v3061 = vshrl.u32 %v2600, 16
      %v3063 = vrot.slane %v3061, 2
      %v3064 = vshll.u32 %v2600, 16
      %v3066 = vrot.slane %v3064, 3
      %v3067 = vor.u32 %v3063, %v3066
      %v3068 = vsel %vm2916, %v3058, %v3067
      %v3070 = vshrl.u32 %v2601, 16
      %v3072 = vrot.slane %v3070, 2
      %v3073 = vshll.u32 %v2601, 16
      %v3075 = vrot.slane %v3073, 3
      %v3076 = vor.u32 %v3072, %v3075
      %v3077 = vsel %vm2916, %v3067, %v3076
      %v3079 = vshrl.u32 %v2915, 16
      %v3081 = vrot.slane %v3079, 2
      %v3082 = vshll.u32 %v2915, 16
      %v3084 = vrot.slane %v3082, 3
      %v3085 = vor.u32 %v3081, %v3084
      %v3086 = vsel %vm2916, %v3076, %v3085
      %v3088 = vsel %vm505, %v2933, 0
      %v3091 = vsel %vm505, %v2942, 0
      %v3094 = vsel %vm505, %v2951, 0
      %v3097 = vsel %vm505, %v2960, 0
      %v3100 = vsel %vm505, %v2969, 0
      %v3103 = vsel %vm505, %v2978, 0
      %v3106 = vsel %vm505, %v2987, 0
      %v3109 = vsel %vm505, %v2996, 0
      %v3112 = vsel %vm505, %v3005, 0
      %v3115 = vsel %vm505, %v3014, 0
      %v3118 = vsel %vm505, %v3023, 0
      %v3121 = vsel %vm505, %v3032, 0
      %v3124 = vsel %vm505, %v3041, 0
      %v3127 = vsel %vm505, %v3050, 0
      %v3130 = vsel %vm505, %v3059, 0
      %v3133 = vsel %vm505, %v3068, 0
      %v3136 = vsel %vm505, %v3077, 0
      %v3139 = vsel %vm505, %v3086, 0
      %v3142 = vsel %vm560, %v2912, 0
      %3144 = vmatprep.subr.bf16.mxu0 0
      %3145 = vmatpush1.bf16.msra.mxu0 0
      %3146 = vmatprep.subr.bf16.mxu0 0
      %3147 = vmatpush1.bf16.msra.mxu0 0
      %3148 = vmatprep.subr.bf16.mxu0 0
      %3149 = vmatpush1.bf16.msra.mxu0 0
      %3150 = vmatprep.subr.bf16.mxu0 0
      %3151 = vmatpush1.bf16.msra.mxu0 0
      %3152 = vmatprep.subr.bf16.mxu0 0
      %3153 = vmatpush1.bf16.msra.mxu0 0
      %3154 = vmatprep.subr.bf16.mxu0 0
      %3155 = vmatpush1.bf16.msra.mxu0 0
      %3156 = vmatprep.subr.bf16.mxu0 0
      %3157 = vmatpush1.bf16.msra.mxu0 0
      %3158 = vmatprep.subr.bf16.mxu0 0
      %3159 = vmatpush1.bf16.msra.mxu0 %v3142
      %3160 = vmatprep.subr.bf16.mxu0 0
      %3161 = vmatpush2.bf16.msra.mxu0 0
      %3162 = vmatprep.subr.bf16.mxu0 0
      %3163 = vmatpush2.bf16.msra.mxu0 0
      %3164 = vmatprep.subr.bf16.mxu0 0
      %3165 = vmatpush2.bf16.msra.mxu0 0
      %3166 = vmatprep.subr.bf16.mxu0 0
      %3167 = vmatpush2.bf16.msra.mxu0 0
      %3168 = vmatprep.subr.bf16.mxu0 0
      %3169 = vmatpush2.bf16.msra.mxu0 0
      %3170 = vmatprep.subr.bf16.mxu0 0
      %3171 = vmatpush2.bf16.msra.mxu0 0
      %3172 = vmatprep.subr.bf16.mxu0 0
      %3173 = vmatpush2.bf16.msra.mxu0 0
      %3174 = vmatprep.subr.bf16.mxu0 0
      %3175 = vmatpush2.bf16.msra.mxu0 0
      %3176 = vmatprep.mubr.bf16.mxu0 0
      %3177 = vmatmul.mubr.bf16.gmra.mxu0 %v3088
      %v3178 = vpop.f32.mrf.mxu0
      %v3179 = vadd.f32 0.0, %v3178
      %v3180 = vpop.f32.mrf.mxu0
      %v3181 = vpop.f32.mrf.mxu0
      %v3182 = vadd.f32 0.0, %v3181
      %v3183 = vpop.f32.mrf.mxu0
      %3184 = vmatprep.mubr.bf16.mxu0 0
      %3185 = vmatmul.mubr.bf16.gmra.mxu0 %v3091
      %v3186 = vpop.f32.mrf.mxu0
      %v3187 = vadd.f32 0.0, %v3186
      %v3188 = vpop.f32.mrf.mxu0
      %v3189 = vpop.f32.mrf.mxu0
      %v3190 = vadd.f32 0.0, %v3189
      %v3191 = vpop.f32.mrf.mxu0
      %3192 = vmatprep.mubr.bf16.mxu0 0
      %3193 = vmatmul.mubr.bf16.gmra.mxu0 %v3094
      %v3194 = vpop.f32.mrf.mxu0
      %v3195 = vadd.f32 0.0, %v3194
      %v3196 = vpop.f32.mrf.mxu0
      %v3197 = vpop.f32.mrf.mxu0
      %v3198 = vadd.f32 0.0, %v3197
      %v3199 = vpop.f32.mrf.mxu0
      %3200 = vmatprep.mubr.bf16.mxu0 0
      %3201 = vmatmul.mubr.bf16.gmra.mxu0 %v3097
      %v3202 = vpop.f32.mrf.mxu0
      %v3203 = vadd.f32 0.0, %v3202
      %v3204 = vpop.f32.mrf.mxu0
      %v3205 = vpop.f32.mrf.mxu0
      %v3206 = vadd.f32 0.0, %v3205
      %v3207 = vpop.f32.mrf.mxu0
      %3208 = vmatprep.mubr.bf16.mxu0 0
      %3209 = vmatmul.mubr.bf16.gmra.mxu0 %v3100
      %v3210 = vpop.f32.mrf.mxu0
      %v3211 = vadd.f32 0.0, %v3210
      %v3212 = vpop.f32.mrf.mxu0
      %v3213 = vpop.f32.mrf.mxu0
      %v3214 = vadd.f32 0.0, %v3213
      %v3215 = vpop.f32.mrf.mxu0
      %3216 = vmatprep.mubr.bf16.mxu0 0
      %3217 = vmatmul.mubr.bf16.gmra.mxu0 %v3103
      %v3218 = vpop.f32.mrf.mxu0
      %v3219 = vadd.f32 0.0, %v3218
      %v3220 = vpop.f32.mrf.mxu0
      %v3221 = vpop.f32.mrf.mxu0
      %v3222 = vadd.f32 0.0, %v3221
      %v3223 = vpop.f32.mrf.mxu0
      %3224 = vmatprep.mubr.bf16.mxu0 0
      %3225 = vmatmul.mubr.bf16.gmra.mxu0 %v3106
      %v3226 = vpop.f32.mrf.mxu0
      %v3227 = vadd.f32 0.0, %v3226
      %v3228 = vpop.f32.mrf.mxu0
      %v3229 = vpop.f32.mrf.mxu0
      %v3230 = vadd.f32 0.0, %v3229
      %v3231 = vpop.f32.mrf.mxu0
      %3232 = vmatprep.mubr.bf16.mxu0 0
      %3233 = vmatmul.mubr.bf16.gmra.mxu0 %v3109
      %v3234 = vpop.f32.mrf.mxu0
      %v3235 = vadd.f32 0.0, %v3234
      %v3236 = vpop.f32.mrf.mxu0
      %v3237 = vpop.f32.mrf.mxu0
      %v3238 = vadd.f32 0.0, %v3237
      %v3239 = vpop.f32.mrf.mxu0
      %3240 = vmatprep.mubr.bf16.mxu0 0
      %3241 = vmatmul.mubr.bf16.gmra.mxu0 %v3112
      %v3242 = vpop.f32.mrf.mxu0
      %v3243 = vadd.f32 0.0, %v3242
      %v3244 = vpop.f32.mrf.mxu0
      %v3245 = vpop.f32.mrf.mxu0
      %v3246 = vadd.f32 0.0, %v3245
      %v3247 = vpop.f32.mrf.mxu0
      %3248 = vmatprep.mubr.bf16.mxu0 0
      %3249 = vmatmul.mubr.bf16.gmra.mxu0 %v3115
      %v3250 = vpop.f32.mrf.mxu0
      %v3251 = vadd.f32 0.0, %v3250
      %v3252 = vpop.f32.mrf.mxu0
      %v3253 = vpop.f32.mrf.mxu0
      %v3254 = vadd.f32 0.0, %v3253
      %v3255 = vpop.f32.mrf.mxu0
      %3256 = vmatprep.mubr.bf16.mxu0 0
      %3257 = vmatmul.mubr.bf16.gmra.mxu0 %v3118
      %v3258 = vpop.f32.mrf.mxu0
      %v3259 = vadd.f32 0.0, %v3258
      %v3260 = vpop.f32.mrf.mxu0
      %v3261 = vpop.f32.mrf.mxu0
      %v3262 = vadd.f32 0.0, %v3261
      %v3263 = vpop.f32.mrf.mxu0
      %3264 = vmatprep.mubr.bf16.mxu0 0
      %3265 = vmatmul.mubr.bf16.gmra.mxu0 %v3121
      %v3266 = vpop.f32.mrf.mxu0
      %v3267 = vadd.f32 0.0, %v3266
      %v3268 = vpop.f32.mrf.mxu0
      %v3269 = vpop.f32.mrf.mxu0
      %v3270 = vadd.f32 0.0, %v3269
      %v3271 = vpop.f32.mrf.mxu0
      %3272 = vmatprep.mubr.bf16.mxu0 0
      %3273 = vmatmul.mubr.bf16.gmra.mxu0 %v3124
      %v3274 = vpop.f32.mrf.mxu0
      %v3275 = vadd.f32 0.0, %v3274
      %v3276 = vpop.f32.mrf.mxu0
      %v3277 = vpop.f32.mrf.mxu0
      %v3278 = vadd.f32 0.0, %v3277
      %v3279 = vpop.f32.mrf.mxu0
      %3280 = vmatprep.mubr.bf16.mxu0 0
      %3281 = vmatmul.mubr.bf16.gmra.mxu0 %v3127
      %v3282 = vpop.f32.mrf.mxu0
      %v3283 = vadd.f32 0.0, %v3282
      %v3284 = vpop.f32.mrf.mxu0
      %v3285 = vpop.f32.mrf.mxu0
      %v3286 = vadd.f32 0.0, %v3285
      %v3287 = vpop.f32.mrf.mxu0
      %3288 = vmatprep.mubr.bf16.mxu0 0
      %3289 = vmatmul.mubr.bf16.gmra.mxu0 %v3130
      %v3290 = vpop.f32.mrf.mxu0
      %v3291 = vadd.f32 0.0, %v3290
      %v3292 = vpop.f32.mrf.mxu0
      %v3293 = vpop.f32.mrf.mxu0
      %v3294 = vadd.f32 0.0, %v3293
      %v3295 = vpop.f32.mrf.mxu0
      %3296 = vmatprep.mubr.bf16.mxu0 0
      %3297 = vmatmul.mubr.bf16.gmra.mxu0 %v3133
      %v3298 = vpop.f32.mrf.mxu0
      %v3299 = vadd.f32 0.0, %v3298
      %v3300 = vpop.f32.mrf.mxu0
      %v3301 = vpop.f32.mrf.mxu0
      %v3302 = vadd.f32 0.0, %v3301
      %v3303 = vpop.f32.mrf.mxu0
      %3304 = vmatprep.mubr.bf16.mxu0 0
      %3305 = vmatmul.mubr.bf16.gmra.mxu0 %v3136
      %v3306 = vpop.f32.mrf.mxu0
      %v3307 = vadd.f32 0.0, %v3306
      %v3308 = vpop.f32.mrf.mxu0
      %v3309 = vpop.f32.mrf.mxu0
      %v3310 = vadd.f32 0.0, %v3309
      %v3311 = vpop.f32.mrf.mxu0
      %3312 = vmatprep.mubr.bf16.mxu0 0
      %3313 = vmatmul.mubr.bf16.gmra.mxu0 %v3139
      %v3314 = vpop.f32.mrf.mxu0
      %v3315 = vadd.f32 0.0, %v3314
      %v3316 = vpop.f32.mrf.mxu0
      %v3317 = vpop.f32.mrf.mxu0
      %v3318 = vadd.f32 0.0, %v3317
      %v3319 = vpop.f32.mrf.mxu0
      %3320 = vdwg.mxu0
      %v3321 = vadd.f32 %v2874, %v3179
      %v3322 = vadd.f32 %v2875, %v3182
      %v3323 = vadd.f32 %v2876, %v3187
      %v3324 = vadd.f32 %v2877, %v3190
      %v3325 = vadd.f32 %v2878, %v3195
      %v3326 = vadd.f32 %v2879, %v3198
      %v3327 = vadd.f32 %v2880, %v3203
      %v3328 = vadd.f32 %v2881, %v3206
      %v3329 = vadd.f32 %v2882, %v3211
      %v3330 = vadd.f32 %v2883, %v3214
      %v3331 = vadd.f32 %v2884, %v3219
      %v3332 = vadd.f32 %v2885, %v3222
      %v3333 = vadd.f32 %v2886, %v3227
      %v3334 = vadd.f32 %v2887, %v3230
      %v3335 = vadd.f32 %v2888, %v3235
      %v3336 = vadd.f32 %v2889, %v3238
      %v3337 = vadd.f32 %v2890, %v3243
      %v3338 = vadd.f32 %v2891, %v3246
      %v3339 = vadd.f32 %v2892, %v3251
      %v3340 = vadd.f32 %v2893, %v3254
      %v3341 = vadd.f32 %v2894, %v3259
      %v3342 = vadd.f32 %v2895, %v3262
      %v3343 = vadd.f32 %v2896, %v3267
      %v3344 = vadd.f32 %v2897, %v3270
      %v3345 = vadd.f32 %v2898, %v3275
      %v3346 = vadd.f32 %v2899, %v3278
      %v3347 = vadd.f32 %v2900, %v3283
      %v3348 = vadd.f32 %v2901, %v3286
      %v3349 = vadd.f32 %v2902, %v3291
      %v3350 = vadd.f32 %v2903, %v3294
      %v3351 = vadd.f32 %v2904, %v3299
      %v3352 = vadd.f32 %v2905, %v3302
      %v3353 = vadd.f32 %v2906, %v3307
      %v3354 = vadd.f32 %v2907, %v3310
      %v3355 = vadd.f32 %v2908, %v3315
      %v3356 = vadd.f32 %v2909, %v3318
      %v3357 = vld [vmem:[%s206 + $0x10] sm:$0x8]
      %s3358 = scalar_lea.vmem %s210, 16
      %v3359 = vld [vmem:[%s3358] sm:$0x3]
      %v3361 = vunpack.c.l.b16 %v3357
      %v3362 = vpack.c.b16 %v2548, %v3361
      %vm3363 = vcmask 1044480
      %v3364 = vrot.slane %v3362, 3
      %v3365 = vrot.slane %v2585, 3
      %v3366 = vsel %vm3363, %v3364, %v3365
      %v3367 = vrot.slane %v2586, 3
      %v3368 = vsel %vm3363, %v3365, %v3367
      %v3369 = vrot.slane %v2587, 3
      %v3370 = vsel %vm3363, %v3367, %v3369
      %v3371 = vrot.slane %v2588, 3
      %v3372 = vsel %vm3363, %v3369, %v3371
      %v3373 = vrot.slane %v2589, 3
      %v3374 = vsel %vm3363, %v3371, %v3373
      %v3375 = vrot.slane %v2590, 3
      %v3376 = vsel %vm3363, %v3373, %v3375
      %v3377 = vrot.slane %v2591, 3
      %v3378 = vsel %vm3363, %v3375, %v3377
      %v3379 = vrot.slane %v2592, 3
      %v3380 = vsel %vm3363, %v3377, %v3379
      %v3381 = vrot.slane %v2593, 3
      %v3382 = vsel %vm3363, %v3379, %v3381
      %v3383 = vrot.slane %v2594, 3
      %v3384 = vsel %vm3363, %v3381, %v3383
      %v3385 = vrot.slane %v2595, 3
      %v3386 = vsel %vm3363, %v3383, %v3385
      %v3387 = vrot.slane %v2596, 3
      %v3388 = vsel %vm3363, %v3385, %v3387
      %v3389 = vrot.slane %v2597, 3
      %v3390 = vsel %vm3363, %v3387, %v3389
      %v3391 = vrot.slane %v2598, 3
      %v3392 = vsel %vm3363, %v3389, %v3391
      %v3393 = vrot.slane %v2599, 3
      %v3394 = vsel %vm3363, %v3391, %v3393
      %v3395 = vrot.slane %v2600, 3
      %v3396 = vsel %vm3363, %v3393, %v3395
      %v3397 = vrot.slane %v2601, 3
      %v3398 = vsel %vm3363, %v3395, %v3397
      %v3399 = vrot.slane %v2915, 3
      %v3400 = vsel %vm3363, %v3397, %v3399
      %v3402 = vsel %vm505, %v3366, 0
      %v3405 = vsel %vm505, %v3368, 0
      %v3408 = vsel %vm505, %v3370, 0
      %v3411 = vsel %vm505, %v3372, 0
      %v3414 = vsel %vm505, %v3374, 0
      %v3417 = vsel %vm505, %v3376, 0
      %v3420 = vsel %vm505, %v3378, 0
      %v3423 = vsel %vm505, %v3380, 0
      %v3426 = vsel %vm505, %v3382, 0
      %v3429 = vsel %vm505, %v3384, 0
      %v3432 = vsel %vm505, %v3386, 0
      %v3435 = vsel %vm505, %v3388, 0
      %v3438 = vsel %vm505, %v3390, 0
      %v3441 = vsel %vm505, %v3392, 0
      %v3444 = vsel %vm505, %v3394, 0
      %v3447 = vsel %vm505, %v3396, 0
      %v3450 = vsel %vm505, %v3398, 0
      %v3453 = vsel %vm505, %v3400, 0
      %v3456 = vsel %vm560, %v3359, 0
      %3458 = vmatprep.subr.bf16.mxu0 0
      %3459 = vmatpush1.bf16.msra.mxu0 0
      %3460 = vmatprep.subr.bf16.mxu0 0
      %3461 = vmatpush1.bf16.msra.mxu0 0
      %3462 = vmatprep.subr.bf16.mxu0 0
      %3463 = vmatpush1.bf16.msra.mxu0 0
      %3464 = vmatprep.subr.bf16.mxu0 0
      %3465 = vmatpush1.bf16.msra.mxu0 0
      %3466 = vmatprep.subr.bf16.mxu0 0
      %3467 = vmatpush1.bf16.msra.mxu0 0
      %3468 = vmatprep.subr.bf16.mxu0 0
      %3469 = vmatpush1.bf16.msra.mxu0 0
      %3470 = vmatprep.subr.bf16.mxu0 0
      %3471 = vmatpush1.bf16.msra.mxu0 0
      %3472 = vmatprep.subr.bf16.mxu0 0
      %3473 = vmatpush1.bf16.msra.mxu0 %v3456
      %3474 = vmatprep.subr.bf16.mxu0 0
      %3475 = vmatpush2.bf16.msra.mxu0 0
      %3476 = vmatprep.subr.bf16.mxu0 0
      %3477 = vmatpush2.bf16.msra.mxu0 0
      %3478 = vmatprep.subr.bf16.mxu0 0
      %3479 = vmatpush2.bf16.msra.mxu0 0
      %3480 = vmatprep.subr.bf16.mxu0 0
      %3481 = vmatpush2.bf16.msra.mxu0 0
      %3482 = vmatprep.subr.bf16.mxu0 0
      %3483 = vmatpush2.bf16.msra.mxu0 0
      %3484 = vmatprep.subr.bf16.mxu0 0
      %3485 = vmatpush2.bf16.msra.mxu0 0
      %3486 = vmatprep.subr.bf16.mxu0 0
      %3487 = vmatpush2.bf16.msra.mxu0 0
      %3488 = vmatprep.subr.bf16.mxu0 0
      %3489 = vmatpush2.bf16.msra.mxu0 0
      %3490 = vmatprep.mubr.bf16.mxu0 0
      %3491 = vmatmul.mubr.bf16.gmra.mxu0 %v3402
      %v3492 = vpop.f32.mrf.mxu0
      %v3493 = vadd.f32 0.0, %v3492
      %v3494 = vpop.f32.mrf.mxu0
      %v3495 = vpop.f32.mrf.mxu0
      %v3496 = vadd.f32 0.0, %v3495
      %v3497 = vpop.f32.mrf.mxu0
      %3498 = vmatprep.mubr.bf16.mxu0 0
      %3499 = vmatmul.mubr.bf16.gmra.mxu0 %v3405
      %v3500 = vpop.f32.mrf.mxu0
      %v3501 = vadd.f32 0.0, %v3500
      %v3502 = vpop.f32.mrf.mxu0
      %v3503 = vpop.f32.mrf.mxu0
      %v3504 = vadd.f32 0.0, %v3503
      %v3505 = vpop.f32.mrf.mxu0
      %3506 = vmatprep.mubr.bf16.mxu0 0
      %3507 = vmatmul.mubr.bf16.gmra.mxu0 %v3408
      %v3508 = vpop.f32.mrf.mxu0
      %v3509 = vadd.f32 0.0, %v3508
      %v3510 = vpop.f32.mrf.mxu0
      %v3511 = vpop.f32.mrf.mxu0
      %v3512 = vadd.f32 0.0, %v3511
      %v3513 = vpop.f32.mrf.mxu0
      %3514 = vmatprep.mubr.bf16.mxu0 0
      %3515 = vmatmul.mubr.bf16.gmra.mxu0 %v3411
      %v3516 = vpop.f32.mrf.mxu0
      %v3517 = vadd.f32 0.0, %v3516
      %v3518 = vpop.f32.mrf.mxu0
      %v3519 = vpop.f32.mrf.mxu0
      %v3520 = vadd.f32 0.0, %v3519
      %v3521 = vpop.f32.mrf.mxu0
      %3522 = vmatprep.mubr.bf16.mxu0 0
      %3523 = vmatmul.mubr.bf16.gmra.mxu0 %v3414
      %v3524 = vpop.f32.mrf.mxu0
      %v3525 = vadd.f32 0.0, %v3524
      %v3526 = vpop.f32.mrf.mxu0
      %v3527 = vpop.f32.mrf.mxu0
      %v3528 = vadd.f32 0.0, %v3527
      %v3529 = vpop.f32.mrf.mxu0
      %3530 = vmatprep.mubr.bf16.mxu0 0
      %3531 = vmatmul.mubr.bf16.gmra.mxu0 %v3417
      %v3532 = vpop.f32.mrf.mxu0
      %v3533 = vadd.f32 0.0, %v3532
      %v3534 = vpop.f32.mrf.mxu0
      %v3535 = vpop.f32.mrf.mxu0
      %v3536 = vadd.f32 0.0, %v3535
      %v3537 = vpop.f32.mrf.mxu0
      %3538 = vmatprep.mubr.bf16.mxu0 0
      %3539 = vmatmul.mubr.bf16.gmra.mxu0 %v3420
      %v3540 = vpop.f32.mrf.mxu0
      %v3541 = vadd.f32 0.0, %v3540
      %v3542 = vpop.f32.mrf.mxu0
      %v3543 = vpop.f32.mrf.mxu0
      %v3544 = vadd.f32 0.0, %v3543
      %v3545 = vpop.f32.mrf.mxu0
      %3546 = vmatprep.mubr.bf16.mxu0 0
      %3547 = vmatmul.mubr.bf16.gmra.mxu0 %v3423
      %v3548 = vpop.f32.mrf.mxu0
      %v3549 = vadd.f32 0.0, %v3548
      %v3550 = vpop.f32.mrf.mxu0
      %v3551 = vpop.f32.mrf.mxu0
      %v3552 = vadd.f32 0.0, %v3551
      %v3553 = vpop.f32.mrf.mxu0
      %3554 = vmatprep.mubr.bf16.mxu0 0
      %3555 = vmatmul.mubr.bf16.gmra.mxu0 %v3426
      %v3556 = vpop.f32.mrf.mxu0
      %v3557 = vadd.f32 0.0, %v3556
      %v3558 = vpop.f32.mrf.mxu0
      %v3559 = vpop.f32.mrf.mxu0
      %v3560 = vadd.f32 0.0, %v3559
      %v3561 = vpop.f32.mrf.mxu0
      %3562 = vmatprep.mubr.bf16.mxu0 0
      %3563 = vmatmul.mubr.bf16.gmra.mxu0 %v3429
      %v3564 = vpop.f32.mrf.mxu0
      %v3565 = vadd.f32 0.0, %v3564
      %v3566 = vpop.f32.mrf.mxu0
      %v3567 = vpop.f32.mrf.mxu0
      %v3568 = vadd.f32 0.0, %v3567
      %v3569 = vpop.f32.mrf.mxu0
      %3570 = vmatprep.mubr.bf16.mxu0 0
      %3571 = vmatmul.mubr.bf16.gmra.mxu0 %v3432
      %v3572 = vpop.f32.mrf.mxu0
      %v3573 = vadd.f32 0.0, %v3572
      %v3574 = vpop.f32.mrf.mxu0
      %v3575 = vpop.f32.mrf.mxu0
      %v3576 = vadd.f32 0.0, %v3575
      %v3577 = vpop.f32.mrf.mxu0
      %3578 = vmatprep.mubr.bf16.mxu0 0
      %3579 = vmatmul.mubr.bf16.gmra.mxu0 %v3435
      %v3580 = vpop.f32.mrf.mxu0
      %v3581 = vadd.f32 0.0, %v3580
      %v3582 = vpop.f32.mrf.mxu0
      %v3583 = vpop.f32.mrf.mxu0
      %v3584 = vadd.f32 0.0, %v3583
      %v3585 = vpop.f32.mrf.mxu0
      %3586 = vmatprep.mubr.bf16.mxu0 0
      %3587 = vmatmul.mubr.bf16.gmra.mxu0 %v3438
      %v3588 = vpop.f32.mrf.mxu0
      %v3589 = vadd.f32 0.0, %v3588
      %v3590 = vpop.f32.mrf.mxu0
      %v3591 = vpop.f32.mrf.mxu0
      %v3592 = vadd.f32 0.0, %v3591
      %v3593 = vpop.f32.mrf.mxu0
      %3594 = vmatprep.mubr.bf16.mxu0 0
      %3595 = vmatmul.mubr.bf16.gmra.mxu0 %v3441
      %v3596 = vpop.f32.mrf.mxu0
      %v3597 = vadd.f32 0.0, %v3596
      %v3598 = vpop.f32.mrf.mxu0
      %v3599 = vpop.f32.mrf.mxu0
      %v3600 = vadd.f32 0.0, %v3599
      %v3601 = vpop.f32.mrf.mxu0
      %3602 = vmatprep.mubr.bf16.mxu0 0
      %3603 = vmatmul.mubr.bf16.gmra.mxu0 %v3444
      %v3604 = vpop.f32.mrf.mxu0
      %v3605 = vadd.f32 0.0, %v3604
      %v3606 = vpop.f32.mrf.mxu0
      %v3607 = vpop.f32.mrf.mxu0
      %v3608 = vadd.f32 0.0, %v3607
      %v3609 = vpop.f32.mrf.mxu0
      %3610 = vmatprep.mubr.bf16.mxu0 0
      %3611 = vmatmul.mubr.bf16.gmra.mxu0 %v3447
      %v3612 = vpop.f32.mrf.mxu0
      %v3613 = vadd.f32 0.0, %v3612
      %v3614 = vpop.f32.mrf.mxu0
      %v3615 = vpop.f32.mrf.mxu0
      %v3616 = vadd.f32 0.0, %v3615
      %v3617 = vpop.f32.mrf.mxu0
      %3618 = vmatprep.mubr.bf16.mxu0 0
      %3619 = vmatmul.mubr.bf16.gmra.mxu0 %v3450
      %v3620 = vpop.f32.mrf.mxu0
      %v3621 = vadd.f32 0.0, %v3620
      %v3622 = vpop.f32.mrf.mxu0
      %v3623 = vpop.f32.mrf.mxu0
      %v3624 = vadd.f32 0.0, %v3623
      %v3625 = vpop.f32.mrf.mxu0
      %3626 = vmatprep.mubr.bf16.mxu0 0
      %3627 = vmatmul.mubr.bf16.gmra.mxu0 %v3453
      %v3628 = vpop.f32.mrf.mxu0
      %v3629 = vadd.f32 0.0, %v3628
      %v3630 = vpop.f32.mrf.mxu0
      %v3631 = vpop.f32.mrf.mxu0
      %v3632 = vadd.f32 0.0, %v3631
      %v3633 = vpop.f32.mrf.mxu0
      %3634 = vdwg.mxu0
      %v3635 = vadd.f32 %v3321, %v3493
      %v3636 = vadd.f32 %v3322, %v3496
      %v3637 = vadd.f32 %v3323, %v3501
      %v3638 = vadd.f32 %v3324, %v3504
      %v3639 = vadd.f32 %v3325, %v3509
      %v3640 = vadd.f32 %v3326, %v3512
      %v3641 = vadd.f32 %v3327, %v3517
      %v3642 = vadd.f32 %v3328, %v3520
      %v3643 = vadd.f32 %v3329, %v3525
      %v3644 = vadd.f32 %v3330, %v3528
      %v3645 = vadd.f32 %v3331, %v3533
      %v3646 = vadd.f32 %v3332, %v3536
      %v3647 = vadd.f32 %v3333, %v3541
      %v3648 = vadd.f32 %v3334, %v3544
      %v3649 = vadd.f32 %v3335, %v3549
      %v3650 = vadd.f32 %v3336, %v3552
      %v3651 = vadd.f32 %v3337, %v3557
      %v3652 = vadd.f32 %v3338, %v3560
      %v3653 = vadd.f32 %v3339, %v3565
      %v3654 = vadd.f32 %v3340, %v3568
      %v3655 = vadd.f32 %v3341, %v3573
      %v3656 = vadd.f32 %v3342, %v3576
      %v3657 = vadd.f32 %v3343, %v3581
      %v3658 = vadd.f32 %v3344, %v3584
      %v3659 = vadd.f32 %v3345, %v3589
      %v3660 = vadd.f32 %v3346, %v3592
      %v3661 = vadd.f32 %v3347, %v3597
      %v3662 = vadd.f32 %v3348, %v3600
      %v3663 = vadd.f32 %v3349, %v3605
      %v3664 = vadd.f32 %v3350, %v3608
      %v3665 = vadd.f32 %v3351, %v3613
      %v3666 = vadd.f32 %v3352, %v3616
      %v3667 = vadd.f32 %v3353, %v3621
      %v3668 = vadd.f32 %v3354, %v3624
      %v3669 = vadd.f32 %v3355, %v3629
      %v3670 = vadd.f32 %v3356, %v3632
      %v3671 = vld [vmem:[%s213] sm:$0x1]
      %v3673 = vlaneseq
      %v3674 = vshrl.u32 %v3673, 7
      %v3675 = vsub.s32 0, %v3674
      %v3676 = vrot.slane %v3671, %v3675
      %v3678 = vadd.f32 %v3635, %v3676
      %v3679 = vadd.f32 %v3636, %v3676
      %v3680 = vadd.f32 %v3637, %v3676
      %v3681 = vadd.f32 %v3638, %v3676
      %v3682 = vadd.f32 %v3639, %v3676
      %v3683 = vadd.f32 %v3640, %v3676
      %v3684 = vadd.f32 %v3641, %v3676
      %v3685 = vadd.f32 %v3642, %v3676
      %v3686 = vadd.f32 %v3643, %v3676
      %v3687 = vadd.f32 %v3644, %v3676
      %v3688 = vadd.f32 %v3645, %v3676
      %v3689 = vadd.f32 %v3646, %v3676
      %v3690 = vadd.f32 %v3647, %v3676
      %v3691 = vadd.f32 %v3648, %v3676
      %v3692 = vadd.f32 %v3649, %v3676
      %v3693 = vadd.f32 %v3650, %v3676
      %v3694 = vadd.f32 %v3651, %v3676
      %v3695 = vadd.f32 %v3652, %v3676
      %v3696 = vadd.f32 %v3653, %v3676
      %v3697 = vadd.f32 %v3654, %v3676
      %v3698 = vadd.f32 %v3655, %v3676
      %v3699 = vadd.f32 %v3656, %v3676
      %v3700 = vadd.f32 %v3657, %v3676
      %v3701 = vadd.f32 %v3658, %v3676
      %v3702 = vadd.f32 %v3659, %v3676
      %v3703 = vadd.f32 %v3660, %v3676
      %v3704 = vadd.f32 %v3661, %v3676
      %v3705 = vadd.f32 %v3662, %v3676
      %v3706 = vadd.f32 %v3663, %v3676
      %v3707 = vadd.f32 %v3664, %v3676
      %v3708 = vadd.f32 %v3665, %v3676
      %v3709 = vadd.f32 %v3666, %v3676
      %v3710 = vadd.f32 %v3667, %v3676
      %v3711 = vadd.f32 %v3668, %v3676
      %v3712 = vadd.f32 %v3669, %v3676
      %v3713 = vadd.f32 %v3670, %v3676
      %v3714 = vmax.f32 %v3678, 0.0
      %v3715 = vmax.f32 %v3679, 0.0
      %v3716 = vmax.f32 %v3680, 0.0
      %v3717 = vmax.f32 %v3681, 0.0
      %v3718 = vmax.f32 %v3682, 0.0
      %v3719 = vmax.f32 %v3683, 0.0
      %v3720 = vmax.f32 %v3684, 0.0
      %v3721 = vmax.f32 %v3685, 0.0
      %v3722 = vmax.f32 %v3686, 0.0
      %v3723 = vmax.f32 %v3687, 0.0
      %v3724 = vmax.f32 %v3688, 0.0
      %v3725 = vmax.f32 %v3689, 0.0
      %v3726 = vmax.f32 %v3690, 0.0
      %v3727 = vmax.f32 %v3691, 0.0
      %v3728 = vmax.f32 %v3692, 0.0
      %v3729 = vmax.f32 %v3693, 0.0
      %v3730 = vmax.f32 %v3694, 0.0
      %v3731 = vmax.f32 %v3695, 0.0
      %v3732 = vmax.f32 %v3696, 0.0
      %v3733 = vmax.f32 %v3697, 0.0
      %v3734 = vmax.f32 %v3698, 0.0
      %v3735 = vmax.f32 %v3699, 0.0
      %v3736 = vmax.f32 %v3700, 0.0
      %v3737 = vmax.f32 %v3701, 0.0
      %v3738 = vmax.f32 %v3702, 0.0
      %v3739 = vmax.f32 %v3703, 0.0
      %v3740 = vmax.f32 %v3704, 0.0
      %v3741 = vmax.f32 %v3705, 0.0
      %v3742 = vmax.f32 %v3706, 0.0
      %v3743 = vmax.f32 %v3707, 0.0
      %v3744 = vmax.f32 %v3708, 0.0
      %v3745 = vmax.f32 %v3709, 0.0
      %v3746 = vmax.f32 %v3710, 0.0
      %v3747 = vmax.f32 %v3711, 0.0
      %v3748 = vmax.f32 %v3712, 0.0
      %v3749 = vmax.f32 %v3713, 0.0
      %3750 = vst [vmem:[%s221] sm:$0xff] %v3714
      %3751 = vst [vmem:[%s221 + $0x8] sm:$0xff] %v3715
      %3752 = vst [vmem:[%s221 + $0x10] sm:$0xff] %v3716
      %3753 = vst [vmem:[%s221 + $0x18] sm:$0xff] %v3717
      %3754 = vst [vmem:[%s221 + $0x20] sm:$0xff] %v3718
      %3755 = vst [vmem:[%s221 + $0x28] sm:$0xff] %v3719
      %3756 = vst [vmem:[%s221 + $0x30] sm:$0xff] %v3720
      %3757 = vst [vmem:[%s221 + $0x38] sm:$0xff] %v3721
      %3758 = vst [vmem:[%s221 + $0x40] sm:$0xff] %v3722
      %3759 = vst [vmem:[%s221 + $0x48] sm:$0xff] %v3723
      %3760 = vst [vmem:[%s221 + $0x50] sm:$0xff] %v3724
      %3761 = vst [vmem:[%s221 + $0x58] sm:$0xff] %v3725
      %3762 = vst [vmem:[%s221 + $0x60] sm:$0xff] %v3726
      %3763 = vst [vmem:[%s221 + $0x68] sm:$0xff] %v3727
      %3764 = vst [vmem:[%s221 + $0x70] sm:$0xff] %v3728
      %3765 = vst [vmem:[%s221 + $0x78] sm:$0xff] %v3729
      %3766 = vst [vmem:[%s221 + $0x80] sm:$0xff] %v3730
      %3767 = vst [vmem:[%s221 + $0x88] sm:$0xff] %v3731
      %3768 = vst [vmem:[%s221 + $0x90] sm:$0xff] %v3732
      %3769 = vst [vmem:[%s221 + $0x98] sm:$0xff] %v3733
      %3770 = vst [vmem:[%s221 + $0xa0] sm:$0xff] %v3734
      %3771 = vst [vmem:[%s221 + $0xa8] sm:$0xff] %v3735
      %3772 = vst [vmem:[%s221 + $0xb0] sm:$0xff] %v3736
      %3773 = vst [vmem:[%s221 + $0xb8] sm:$0xff] %v3737
      %3774 = vst [vmem:[%s221 + $0xc0] sm:$0xff] %v3738
      %3775 = vst [vmem:[%s221 + $0xc8] sm:$0xff] %v3739
      %3776 = vst [vmem:[%s221 + $0xd0] sm:$0xff] %v3740
      %3777 = vst [vmem:[%s221 + $0xd8] sm:$0xff] %v3741
      %3778 = vst [vmem:[%s221 + $0xe0] sm:$0xff] %v3742
      %3779 = vst [vmem:[%s221 + $0xe8] sm:$0xff] %v3743
      %3780 = vst [vmem:[%s221 + $0xf0] sm:$0xff] %v3744
      %3781 = vst [vmem:[%s221 + $0xf8] sm:$0xff] %v3745
      %3782 = vst [vmem:[%s221 + $0x100] sm:$0xff] %v3746
      %3783 = vst [vmem:[%s221 + $0x108] sm:$0xff] %v3747
      %3784 = vst [vmem:[%s221 + $0x110] sm:$0xff] %v3748
      %3785 = vst [vmem:[%s221 + $0x118] sm:$0xff] %v3749
      %p3786 = scmp.lt.s32.totalorder %s18, 1
      %s3787 = scalar_select %p3786, %s18, 1
      %p3788 = scmp.lt.s32.totalorder %s19, 0
      %s3789 = scalar_select %p3788, %s19, 0
      %s3790 = smul.addr %s3787, 36
      %s3791 = sadd.s32 %s3789, %s3790
      %s3792 = smul.addr %s3791, 8
      %s3793 = scalar_lea.vmem %s3, %s3792
      // Predicated region
      $region33: #{conv_bn_relu.1} parent=31 // pred_check
        %p3794 = pneg %p124
      $region34: #{conv_bn_relu.1} parent=31 // pred_check_branch
        %3796 = sbr.rel (%p3794) target = $region36
      $region35: #{conv_bn_relu.1} parent=31 // pred_region
        _
      $region36: #{conv_bn_relu.1} parent=31 // pred_fallthru
        _
    $region32: #{conv_bn_relu.1} parent=5 // pred_fallthru
      _
    %p3797 = scmp.le.s32.totalorder 2, %s9
    // Predicated region
    $region37: #{conv_bn_relu.1} parent=5 // pred_check
      %p3798 = pneg %p3797
    $region38: #{conv_bn_relu.1} parent=5 // pred_check_branch
      %3800 = sbr.rel (%p3798) target = $region40
    $region39: #{conv_bn_relu.1} parent=5 // pred_region
      %s3801 = ssub.s32 %s9, 2
      // Predicated region
      $region41: #{conv_bn_relu.1} parent=39 // pred_check
        %p3802 = pneg %p130
      $region42: #{conv_bn_relu.1} parent=39 // pred_check_branch
        %3804 = sbr.rel (%p3802) target = $region44
      $region43: #{conv_bn_relu.1} parent=39 // pred_region
        %p3805 = scmp.lt.s32.totalorder %s20, 1
        %s3806 = scalar_select %p3805, %s20, 1
        %p3807 = scmp.lt.s32.totalorder %s21, 0
        %s3808 = scalar_select %p3807, %s21, 0
        %s3809 = smul.addr %s3806, 36
        %s3810 = sadd.s32 %s3808, %s3809
        %s3811 = smul.addr %s3810, 8
        %s3812 = scalar_lea.vmem %s3, %s3811
      $region44: #{conv_bn_relu.1} parent=39 // pred_fallthru
        _
    $region40: #{conv_bn_relu.1} parent=5 // pred_fallthru
      _
  $region6: #{conv_bn_relu.1} parent=0 // loop_footer
    %s13 = sadd.s32 1, %s9
  $region7: #{conv_bn_relu.1} parent=0 // loop_footer_branch
    %8 = sbr.rel target = $region3
  $region8: #{conv_bn_relu.1} parent=0 // loop_exit
    _

</llo_original>
